<compile_context>
chip_gen: v6e
topology: v6e:2x2x1
jax: 0.10.0
libtpu: 0.0.40
codegen_flags: <defaults>
</compile_context>

<pallas_src>
import functools

import jax
import jax.numpy as jnp
from jax.experimental import pallas as pl
from jax.experimental.pallas import tpu as pltpu


_LN_EPS = 1e-5
_ROW_TILE = 512            # rows of the [N, D] activation slab per grid step
_FF_TILE = 512             # d_ff tile (multiple of 256 for v6e/v7x MXUs)
_COMPUTE_DTYPE = jnp.bfloat16


def _vmem_limit_bytes():
    # Generation-aware VMEM budget: ~3/4 of physical (v7x 64 MiB -> 48 MiB,
    # v5e/v6e 128 MiB -> 96 MiB); conservative fallback if the query fails.
    try:
        cap = pltpu.get_tpu_info().vmem_capacity_bytes
    except Exception:
        cap = 64 * 1024 * 1024
    return int(min(cap * 3 // 4, 100 * 1024 * 1024))


_VMEM_LIMIT = _vmem_limit_bytes()


def _row_block(n):
    """Row tile: full N for small slabs, otherwise a 512-row tile."""
    return n if n <= _ROW_TILE else _ROW_TILE


def _mosaic(dimension_semantics):
    return pltpu.CompilerParams(
        dimension_semantics=dimension_semantics,
        vmem_limit_bytes=_VMEM_LIMIT,
    )


# ----------------------------------------------------------------------------
# In-kernel helpers (traced inside the kernel bodies)
# ----------------------------------------------------------------------------

def _layernorm_rows(z, gamma, beta, eps):
    """LayerNorm over the last dim of an f32 [rows, D] value."""
    mu = jnp.mean(z, axis=-1, keepdims=True)
    var = jnp.mean((z - mu) ** 2, axis=-1, keepdims=True)
    zn = (z - mu) * jax.lax.rsqrt(var + eps)
    return zn * gamma.astype(jnp.float32) + beta.astype(jnp.float32)


def _mha_accumulate(z, q, k, v, wo, bias, nhead, dh, scale):
    """z += sum_h softmax(q_h k_h^T * scale + bias) v_h @ Wo[h*dh:(h+1)*dh, :].

    The out-projection is folded into the per-head accumulation so no lane-narrow
    concatenate of head outputs is ever materialized.
    q, k, v : f32 [rows, nhead*dh];  wo : bf16 [nhead*dh, D];  bias : f32 additive.
    """
    for h in range(nhead):
        sl = slice(h * dh, (h + 1) * dh)
        qh = (q[:, sl] * scale).astype(_COMPUTE_DTYPE)
        kh = k[:, sl].astype(_COMPUTE_DTYPE)
        vh = v[:, sl].astype(_COMPUTE_DTYPE)
        s = jax.lax.dot_general(qh, kh, (((1,), (1,)), ((), ())),
                                preferred_element_type=jnp.float32) + bias
        s = s - jnp.max(s, axis=-1, keepdims=True)
        p = jnp.exp(s)
        p = p / jnp.sum(p, axis=-1, keepdims=True)          # exact divide (fp parity)
        oh = jnp.dot(p.astype(_COMPUTE_DTYPE), vh, preferred_element_type=jnp.float32)
        z = z + jnp.dot(oh.astype(_COMPUTE_DTYPE), wo[sl, :],
                        preferred_element_type=jnp.float32)
    return z


# ----------------------------------------------------------------------------
# Pallas kernels
# ----------------------------------------------------------------------------

def _self_attn_block_kernel(x_ref, wqkv_ref, bqkv_ref, wo_ref, bo_ref,
                            g_ref, bt_ref, am_ref, kp_ref, o_ref, *, nhead, eps):
    """One batch per grid step: LayerNorm(x + MHA_self(x) @ Wo + bo)."""
    st, d = x_ref.shape[1], x_ref.shape[2]
    dh = d // nhead
    scale = 1.0 / float(dh) ** 0.5

    x = x_ref[0]                                                       # [St, D] bf16
    qkv = jnp.dot(x, wqkv_ref[...], preferred_element_type=jnp.float32) \
        + bqkv_ref[...].astype(jnp.float32)                            # [St, 3D] f32
    bias = am_ref[0] + kp_ref[0]                                       # [St,St] + [1,St]

    z = x.astype(jnp.float32) + bo_ref[...].astype(jnp.float32)        # residual + b_o
    z = _mha_accumulate(z, qkv[:, :d], qkv[:, d:2 * d], qkv[:, 2 * d:],
                        wo_ref[...], bias, nhead, dh, scale)
    o_ref[0] = _layernorm_rows(z, g_ref[...], bt_ref[...], eps).astype(o_ref.dtype)


def _cross_attn_block_kernel(x_ref, src_ref, wq_ref, bq_ref, wkv_ref, bkv_ref,
                             wo_ref, bo_ref, g_ref, bt_ref, kp_ref, o_ref,
                             *, nhead, eps):
    """One batch per grid step: LayerNorm(x + MHA_cross(x, src) @ Wo + bo)."""
    st, d = x_ref.shape[1], x_ref.shape[2]
    dh = d // nhead
    scale = 1.0 / float(dh) ** 0.5

    x = x_ref[0]                                                       # [St, D]
    s_in = src_ref[0]                                                  # [Ss, D]
    q = jnp.dot(x, wq_ref[...], preferred_element_type=jnp.float32) \
        + bq_ref[...].astype(jnp.float32)                              # [St, D] f32
    kv = jnp.dot(s_in, wkv_ref[...], preferred_element_type=jnp.float32) \
        + bkv_ref[...].astype(jnp.float32)                             # [Ss, 2D] f32
    bias = kp_ref[0]                                                   # [1, Ss]

    z = x.astype(jnp.float32) + bo_ref[...].astype(jnp.float32)
    z = _mha_accumulate(z, q, kv[:, :d], kv[:, d:],
                        wo_ref[...], bias, nhead, dh, scale)
    o_ref[0] = _layernorm_rows(z, g_ref[...], bt_ref[...], eps).astype(o_ref.dtype)


def _ffn_add_ln_kernel(x_ref, w1_ref, b1_ref, w2_ref, b2_ref, g_ref, bt_ref,
                       o_ref, acc_ref, *, eps):
    """LayerNorm(x + W2 @ relu(W1 @ x + b1) + b2), tiled over d_ff (grid axis 1)."""
    j = pl.program_id(1)

    @pl.when(j == 0)
    def _():
        acc_ref[...] = x_ref[...].astype(jnp.float32) + b2_ref[...].astype(jnp.float32)

    h = jnp.dot(x_ref[...], w1_ref[...], preferred_element_type=jnp.float32) \
        + b1_ref[...].astype(jnp.float32)
    h = jnp.maximum(h, 0.0)
    acc_ref[...] += jnp.dot(h.astype(_COMPUTE_DTYPE), w2_ref[...],
                            preferred_element_type=jnp.float32)

    @pl.when(j == pl.num_programs(1) - 1)
    def _():
        o_ref[...] = _layernorm_rows(acc_ref[...], g_ref[...], bt_ref[...],
                                     eps).astype(o_ref.dtype)


def _ln_kernel(x_ref, g_ref, b_ref, o_ref, *, eps):
    z = x_ref[...].astype(jnp.float32)
    o_ref[...] = _layernorm_rows(z, g_ref[...], b_ref[...], eps).astype(o_ref.dtype)


# ----------------------------------------------------------------------------
# pallas_call wrappers
# ----------------------------------------------------------------------------

def self_attn_block(x3, p, gamma, beta, attn_bias, kp_bias, nhead):
    b, st, d = x3.shape
    return pl.pallas_call(
        functools.partial(_self_attn_block_kernel, nhead=nhead, eps=_LN_EPS),
        out_shape=jax.ShapeDtypeStruct((b, st, d), x3.dtype),
        grid=(b,),
        in_specs=[
            pl.BlockSpec((1, st, d), lambda i: (i, 0, 0)),       # x (this batch)
            pl.BlockSpec((d, 3 * d), lambda i: (0, 0)),          # Wqkv (resident)
            pl.BlockSpec((1, 3 * d), lambda i: (0, 0)),          # bqkv
            pl.BlockSpec((d, d), lambda i: (0, 0)),              # Wo
            pl.BlockSpec((1, d), lambda i: (0, 0)),              # bo
            pl.BlockSpec((1, d), lambda i: (0, 0)),              # ln gamma
            pl.BlockSpec((1, d), lambda i: (0, 0)),              # ln beta
            pl.BlockSpec((1, st, st), lambda i: (0, 0, 0)),      # attn-mask bias (shared)
            pl.BlockSpec((1, 1, st), lambda i: (i, 0, 0)),       # key-padding bias
        ],
        out_specs=pl.BlockSpec((1, st, d), lambda i: (i, 0, 0)),
        compiler_params=_mosaic(("parallel",)),
    )(x3, p["wqkv"], p["bqkv"], p["wo"], p["bo"], gamma, beta, attn_bias, kp_bias)


def cross_attn_block(x3, src3, p, gamma, beta, kp_bias, nhead):
    b, st, d = x3.shape
    ss = src3.shape[1]
    return pl.pallas_call(
        functools.partial(_cross_attn_block_kernel, nhead=nhead, eps=_LN_EPS),
        out_shape=jax.ShapeDtypeStruct((b, st, d), x3.dtype),
        grid=(b,),
        in_specs=[
            pl.BlockSpec((1, st, d), lambda i: (i, 0, 0)),       # tgt (this batch)
            pl.BlockSpec((1, ss, d), lambda i: (i, 0, 0)),       # src (this batch)
            pl.BlockSpec((d, d), lambda i: (0, 0)),              # Wq
            pl.BlockSpec((1, d), lambda i: (0, 0)),              # bq
            pl.BlockSpec((d, 2 * d), lambda i: (0, 0)),          # Wkv
            pl.BlockSpec((1, 2 * d), lambda i: (0, 0)),          # bkv
            pl.BlockSpec((d, d), lambda i: (0, 0)),              # Wo
            pl.BlockSpec((1, d), lambda i: (0, 0)),              # bo
            pl.BlockSpec((1, d), lambda i: (0, 0)),              # ln gamma
            pl.BlockSpec((1, d), lambda i: (0, 0)),              # ln beta
            pl.BlockSpec((1, 1, ss), lambda i: (i, 0, 0)),       # src key-padding bias
        ],
        out_specs=pl.BlockSpec((1, st, d), lambda i: (i, 0, 0)),
        compiler_params=_mosaic(("parallel",)),
    )(x3, src3, p["wq"], p["bq"], p["wkv"], p["bkv"], p["wo"], p["bo"],
      gamma, beta, kp_bias)


def ffn_add_ln(x2d, w1, b1, w2, b2, gamma, beta, eps=_LN_EPS):
    n, d = x2d.shape
    dff = w1.shape[1]
    rt = _row_block(n)
    ff_t = dff if dff <= _FF_TILE else _FF_TILE
    assert dff % ff_t == 0, "d_ff must be a multiple of the d_ff tile"
    return pl.pallas_call(
        functools.partial(_ffn_add_ln_kernel, eps=eps),
        out_shape=jax.ShapeDtypeStruct((n, d), x2d.dtype),
        grid=(pl.cdiv(n, rt), dff // ff_t),
        in_specs=[
            pl.BlockSpec((rt, d), lambda i, j: (i, 0)),          # x rows (reused over j)
            pl.BlockSpec((d, ff_t), lambda i, j: (0, j)),        # W1 column block
            pl.BlockSpec((1, ff_t), lambda i, j: (0, j)),        # b1 block
            pl.BlockSpec((ff_t, d), lambda i, j: (j, 0)),        # W2 row block
            pl.BlockSpec((1, d), lambda i, j: (0, 0)),           # b2
            pl.BlockSpec((1, d), lambda i, j: (0, 0)),           # ln gamma
            pl.BlockSpec((1, d), lambda i, j: (0, 0)),           # ln beta
        ],
        out_specs=pl.BlockSpec((rt, d), lambda i, j: (i, 0)),
        scratch_shapes=[pltpu.VMEM((rt, d), jnp.float32)],
        compiler_params=_mosaic(("parallel", "arbitrary")),
    )(x2d, w1, b1, w2, b2, gamma, beta)


def layernorm(x2d, gamma, beta, eps=_LN_EPS):
    n, d = x2d.shape
    rt = _row_block(n)
    return pl.pallas_call(
        functools.partial(_ln_kernel, eps=eps),
        out_shape=jax.ShapeDtypeStruct((n, d), jnp.float32),
        grid=(pl.cdiv(n, rt),),
        in_specs=[
            pl.BlockSpec((rt, d), lambda i: (i, 0)),
            pl.BlockSpec((1, d), lambda i: (0, 0)),
            pl.BlockSpec((1, d), lambda i: (0, 0)),
        ],
        out_specs=pl.BlockSpec((rt, d), lambda i: (i, 0)),
        compiler_params=_mosaic(("parallel",)),
    )(x2d, gamma, beta)


# ----------------------------------------------------------------------------
# Model glue (plain JAX: only tiny mask-bias construction and plumbing)
# ----------------------------------------------------------------------------

def _attn_bias(attn_mask, s):
    """[1, S, S] f32 additive bias from a [S, S] bool mask (True == disallowed)."""
    if attn_mask is None:
        return jnp.zeros((1, s, s), jnp.float32)
    return jnp.where(attn_mask, jnp.float32(-1e9), jnp.float32(0.0)).reshape(1, s, s)


def _kp_bias(kpm, b, s):
    """[B, 1, S] f32 additive bias from a [B, S] bool key-padding mask."""
    if kpm is None:
        return jnp.zeros((b, 1, s), jnp.float32)
    return jnp.where(kpm, jnp.float32(-1e9), jnp.float32(0.0)).reshape(b, 1, s)


def decoder_layer(p, src3, tgt3, attn_bias, tgt_kp_bias, src_kp_bias, nhead):
    tgt3 = self_attn_block(tgt3, p["self_attn"], p["ln1_g"], p["ln1_b"],
                           attn_bias, tgt_kp_bias, nhead)
    tgt3 = cross_attn_block(tgt3, src3, p["cross_attn"], p["ln2_g"], p["ln2_b"],
                            src_kp_bias, nhead)
    b, st, d = tgt3.shape
    tgt2d = ffn_add_ln(tgt3.reshape(b * st, d), p["w1"], p["b1"], p["w2"], p["b2"],
                       p["ln3_g"], p["ln3_b"])
    return tgt2d.reshape(b, st, d)


def transformer_decoder(params, src, tgt, tgt_mask_attn, src_kpm, tgt_kpm, nhead):
    b, st, d = tgt.shape
    ss = src.shape[1]

    src3 = src.astype(_COMPUTE_DTYPE)
    tgt3 = tgt.astype(_COMPUTE_DTYPE)

    # Tiny additive biases built once for the whole stack; the big [B,Sq,Sk] mask is
    # never materialized — it is formed in-kernel from these.
    attn_bias = _attn_bias(tgt_mask_attn, st)      # [1, St, St]
    tgt_kp_bias = _kp_bias(tgt_kpm, b, st)         # [B, 1, St]
    src_kp_bias = _kp_bias(src_kpm, b, ss)         # [B, 1, Ss]

    for layer_p in params["layers"]:
        tgt3 = decoder_layer(layer_p, src3, tgt3, attn_bias, tgt_kp_bias,
                             src_kp_bias, nhead)
    y = layernorm(tgt3.reshape(b * st, d), params["norm_g"], params["norm_b"])
    return y.reshape(b, st, d)


# ----------------------------------------------------------------------------
# Deterministic parameter initialization (bf16 storage)
# ----------------------------------------------------------------------------

def _init_self_attn(key, d):
    k1, k2 = jax.random.split(key)
    return {
        "wqkv": (0.02 * jax.random.normal(k1, (d, 3 * d))).astype(_COMPUTE_DTYPE),
        "bqkv": jnp.zeros((1, 3 * d), _COMPUTE_DTYPE),
        "wo": (0.02 * jax.random.normal(k2, (d, d))).astype(_COMPUTE_DTYPE),
        "bo": jnp.zeros((1, d), _COMPUTE_DTYPE),
    }


def _init_cross_attn(key, d):
    k1, k2, k3 = jax.random.split(key, 3)
    return {
        "wq": (0.02 * jax.random.normal(k1, (d, d))).astype(_COMPUTE_DTYPE),
        "bq": jnp.zeros((1, d), _COMPUTE_DTYPE),
        "wkv": (0.02 * jax.random.normal(k2, (d, 2 * d))).astype(_COMPUTE_DTYPE),
        "bkv": jnp.zeros((1, 2 * d), _COMPUTE_DTYPE),
        "wo": (0.02 * jax.random.normal(k3, (d, d))).astype(_COMPUTE_DTYPE),
        "bo": jnp.zeros((1, d), _COMPUTE_DTYPE),
    }


def init_params(key, d_model, d_ff, num_layers):
    layers = []
    for _ in range(num_layers):
        key, k_sa, k_ca, k_w1, k_w2 = jax.random.split(key, 5)
        layers.append({
            "self_attn": _init_self_attn(k_sa, d_model),
            "cross_attn": _init_cross_attn(k_ca, d_model),
            "w1": (0.02 * jax.random.normal(k_w1, (d_model, d_ff))).astype(_COMPUTE_DTYPE),
            "b1": jnp.zeros((1, d_ff), _COMPUTE_DTYPE),
            "w2": (0.02 * jax.random.normal(k_w2, (d_ff, d_model))).astype(_COMPUTE_DTYPE),
            "b2": jnp.zeros((1, d_model), _COMPUTE_DTYPE),
            "ln1_g": jnp.ones((1, d_model), _COMPUTE_DTYPE),
            "ln1_b": jnp.zeros((1, d_model), _COMPUTE_DTYPE),
            "ln2_g": jnp.ones((1, d_model), _COMPUTE_DTYPE),
            "ln2_b": jnp.zeros((1, d_model), _COMPUTE_DTYPE),
            "ln3_g": jnp.ones((1, d_model), _COMPUTE_DTYPE),
            "ln3_b": jnp.zeros((1, d_model), _COMPUTE_DTYPE),
        })
    return {
        "layers": layers,
        "norm_g": jnp.ones((1, d_model), _COMPUTE_DTYPE),
        "norm_b": jnp.zeros((1, d_model), _COMPUTE_DTYPE),
    }


# ----------------------------------------------------------------------------
# Main
# ----------------------------------------------------------------------------

if __name__ == "__main__":
    B, S_SRC, S_TGT = 2, 8, 8
    D_MODEL, D_FF, NHEAD, N_LAYERS = 32, 64, 4, 2

    root = jax.random.PRNGKey(0)
    k_param, k_src, k_tgt = jax.random.split(root, 3)

    params = init_params(k_param, D_MODEL, D_FF, N_LAYERS)

    src = jax.random.normal(k_src, (B, S_SRC, D_MODEL), jnp.float32)
    tgt = jax.random.normal(k_tgt, (B, S_TGT, D_MODEL), jnp.float32)

    # causal mask: True above the diagonal == cannot attend to future tokens
    tgt_mask_attn = jnp.triu(jnp.ones((S_TGT, S_TGT), dtype=bool), k=1)
    # key padding masks: True == padding token (last two src / last tgt of batch 1)
    src_key_padding_mask = jnp.zeros((B, S_SRC), dtype=bool).at[1, -2:].set(True)
    tgt_key_padding_mask = jnp.zeros((B, S_TGT), dtype=bool).at[1, -1:].set(True)

    fwd = jax.jit(functools.partial(transformer_decoder, nhead=NHEAD))
    y = fwd(params, src, tgt, tgt_mask_attn, src_key_padding_mask, tgt_key_padding_mask)
    y = jax.block_until_ready(y)

    assert y.shape == (B, S_TGT, D_MODEL), y.shape
    assert bool(jnp.all(jnp.isfinite(y)))
    print("KERNEL_OK")
</pallas_src>

<mosaic_0001>
module attributes {stable_mosaic.version = 11 : i64} {
  func.func @_self_attn_block_kernel(%arg0: i32, %arg1: memref<1x8x32xbf16, #tpu.memory_space<vmem>>, %arg2: memref<32x96xbf16, #tpu.memory_space<vmem>>, %arg3: memref<1x96xbf16, #tpu.memory_space<vmem>>, %arg4: memref<32x32xbf16, #tpu.memory_space<vmem>>, %arg5: memref<1x32xbf16, #tpu.memory_space<vmem>>, %arg6: memref<1x32xbf16, #tpu.memory_space<vmem>>, %arg7: memref<1x32xbf16, #tpu.memory_space<vmem>>, %arg8: memref<1x8x8xf32, #tpu.memory_space<vmem>>, %arg9: memref<1x1x8xf32, #tpu.memory_space<vmem>>, %arg10: memref<1x8x32xbf16, #tpu.memory_space<vmem>>) attributes {dimension_semantics = [#tpu.dimension_semantics<parallel>], iteration_bounds = array<i64: 2>, scalar_prefetch = 0 : i64, scratch_operands = 0 : i64, tpu.core_type = #tpu.core_type<tc>, window_params = [{transform_indices = @transform_0, window_bounds = array<i64: 1, 8, 32>}, {pipeline_mode = #tpu.pipeline_mode<synchronous>, transform_indices = @transform_1, window_bounds = array<i64: 32, 96>}, {pipeline_mode = #tpu.pipeline_mode<synchronous>, transform_indices = @transform_2, window_bounds = array<i64: 1, 96>}, {pipeline_mode = #tpu.pipeline_mode<synchronous>, transform_indices = @transform_3, window_bounds = array<i64: 32, 32>}, {pipeline_mode = #tpu.pipeline_mode<synchronous>, transform_indices = @transform_4, window_bounds = array<i64: 1, 32>}, {pipeline_mode = #tpu.pipeline_mode<synchronous>, transform_indices = @transform_5, window_bounds = array<i64: 1, 32>}, {pipeline_mode = #tpu.pipeline_mode<synchronous>, transform_indices = @transform_6, window_bounds = array<i64: 1, 32>}, {pipeline_mode = #tpu.pipeline_mode<synchronous>, transform_indices = @transform_7, window_bounds = array<i64: 1, 8, 8>}, {transform_indices = @transform_8, window_bounds = array<i64: 1, 1, 8>}, {transform_indices = @transform_9, window_bounds = array<i64: 1, 8, 32>}]} {
    %c0 = arith.constant 0 : index
    %c0_0 = arith.constant 0 : index
    %c0_1 = arith.constant 0 : index
    %0 = vector.load %arg1[%c0, %c0_0, %c0_1] : memref<1x8x32xbf16, #tpu.memory_space<vmem>>, vector<1x8x32xbf16>
    %1 = vector.shape_cast %0 : vector<1x8x32xbf16> to vector<8x32xbf16>
    %c0_2 = arith.constant 0 : index
    %c0_3 = arith.constant 0 : index
    %2 = vector.load %arg2[%c0_2, %c0_3] : memref<32x96xbf16, #tpu.memory_space<vmem>>, vector<32x96xbf16>
    %cst = arith.constant dense<0.000000e+00> : vector<8x96xf32>
    %3 = tpu.matmul %1, %2, %cst {dimension_numbers = #tpu.dot_dimension_numbers<[1], [0], [0], [1], [0, 0, 1, 1], [], []>} : vector<8x32xbf16>, vector<32x96xbf16>, vector<8x96xf32> -> vector<8x96xf32>
    %c0_4 = arith.constant 0 : index
    %c0_5 = arith.constant 0 : index
    %4 = vector.load %arg3[%c0_4, %c0_5] : memref<1x96xbf16, #tpu.memory_space<vmem>>, vector<1x96xbf16>
    %5 = arith.extf %4 : vector<1x96xbf16> to vector<1x96xf32>
    %6 = vector.broadcast %5 : vector<1x96xf32> to vector<8x96xf32>
    %7 = arith.addf %3, %6 : vector<8x96xf32>
    %c0_6 = arith.constant 0 : index
    %c0_7 = arith.constant 0 : index
    %c0_8 = arith.constant 0 : index
    %8 = vector.load %arg8[%c0_6, %c0_7, %c0_8] : memref<1x8x8xf32, #tpu.memory_space<vmem>>, vector<1x8x8xf32>
    %9 = vector.shape_cast %8 : vector<1x8x8xf32> to vector<8x8xf32>
    %c0_9 = arith.constant 0 : index
    %c0_10 = arith.constant 0 : index
    %c0_11 = arith.constant 0 : index
    %10 = vector.load %arg9[%c0_9, %c0_10, %c0_11] : memref<1x1x8xf32, #tpu.memory_space<vmem>>, vector<1x1x8xf32>
    %11 = vector.shape_cast %10 : vector<1x1x8xf32> to vector<1x8xf32>
    %12 = vector.broadcast %11 : vector<1x8xf32> to vector<8x8xf32>
    %13 = arith.addf %9, %12 : vector<8x8xf32>
    %14 = arith.extf %1 : vector<8x32xbf16> to vector<8x32xf32>
    %c0_12 = arith.constant 0 : index
    %c0_13 = arith.constant 0 : index
    %15 = vector.load %arg5[%c0_12, %c0_13] : memref<1x32xbf16, #tpu.memory_space<vmem>>, vector<1x32xbf16>
    %16 = arith.extf %15 : vector<1x32xbf16> to vector<1x32xf32>
    %17 = vector.broadcast %16 : vector<1x32xf32> to vector<8x32xf32>
    %18 = arith.addf %14, %17 : vector<8x32xf32>
    %19 = vector.extract_strided_slice %7 {offsets = [0, 0], sizes = [8, 32], strides = [1, 1]} : vector<8x96xf32> to vector<8x32xf32>
    %20 = vector.extract_strided_slice %7 {offsets = [0, 32], sizes = [8, 32], strides = [1, 1]} : vector<8x96xf32> to vector<8x32xf32>
    %21 = vector.extract_strided_slice %7 {offsets = [0, 64], sizes = [8, 32], strides = [1, 1]} : vector<8x96xf32> to vector<8x32xf32>
    %c0_14 = arith.constant 0 : index
    %c0_15 = arith.constant 0 : index
    %22 = vector.load %arg4[%c0_14, %c0_15] : memref<32x32xbf16, #tpu.memory_space<vmem>>, vector<32x32xbf16>
    %23 = vector.extract_strided_slice %19 {offsets = [0, 0], sizes = [8, 8], strides = [1, 1]} : vector<8x32xf32> to vector<8x8xf32>
    %cst_16 = arith.constant 0.353553385 : f32
    %24 = vector.broadcast %cst_16 : f32 to vector<8x8xf32>
    %25 = arith.mulf %23, %24 : vector<8x8xf32>
    %26 = arith.truncf %25 : vector<8x8xf32> to vector<8x8xbf16>
    %27 = vector.extract_strided_slice %20 {offsets = [0, 0], sizes = [8, 8], strides = [1, 1]} : vector<8x32xf32> to vector<8x8xf32>
    %28 = arith.truncf %27 : vector<8x8xf32> to vector<8x8xbf16>
    %29 = vector.extract_strided_slice %21 {offsets = [0, 0], sizes = [8, 8], strides = [1, 1]} : vector<8x32xf32> to vector<8x8xf32>
    %30 = arith.truncf %29 : vector<8x8xf32> to vector<8x8xbf16>
    %cst_17 = arith.constant dense<0.000000e+00> : vector<8x8xf32>
    %31 = tpu.matmul %26, %28, %cst_17 {dimension_numbers = #tpu.dot_dimension_numbers<[1], [1], [0], [0], [0, 0, 1, 0], [], []>} : vector<8x8xbf16>, vector<8x8xbf16>, vector<8x8xf32> -> vector<8x8xf32>
    %32 = arith.addf %31, %13 : vector<8x8xf32>
    %cst_18 = arith.constant dense<0xFF800000> : vector<8xf32>
    %33 = vector.multi_reduction <maximumf>, %32, %cst_18 [1] : vector<8x8xf32> to vector<8xf32>
    %34 = vector.shape_cast %33 : vector<8xf32> to vector<8x1xf32>
    %35 = vector.broadcast %34 : vector<8x1xf32> to vector<8x8xf32>
    %36 = arith.subf %32, %35 : vector<8x8xf32>
    %37 = math.exp %36 : vector<8x8xf32>
    %cst_19 = arith.constant dense<0.000000e+00> : vector<8xf32>
    %38 = vector.multi_reduction <add>, %37, %cst_19 [1] : vector<8x8xf32> to vector<8xf32>
    %39 = vector.shape_cast %38 : vector<8xf32> to vector<8x1xf32>
    %40 = vector.broadcast %39 : vector<8x1xf32> to vector<8x8xf32>
    %41 = arith.divf %37, %40 : vector<8x8xf32>
    %42 = arith.truncf %41 : vector<8x8xf32> to vector<8x8xbf16>
    %cst_20 = arith.constant dense<0.000000e+00> : vector<8x8xf32>
    %43 = tpu.matmul %42, %30, %cst_20 {dimension_numbers = #tpu.dot_dimension_numbers<[1], [0], [0], [1], [0, 0, 1, 1], [], []>} : vector<8x8xbf16>, vector<8x8xbf16>, vector<8x8xf32> -> vector<8x8xf32>
    %44 = arith.truncf %43 : vector<8x8xf32> to vector<8x8xbf16>
    %45 = vector.extract_strided_slice %22 {offsets = [0, 0], sizes = [8, 32], strides = [1, 1]} : vector<32x32xbf16> to vector<8x32xbf16>
    %cst_21 = arith.constant dense<0.000000e+00> : vector<8x32xf32>
    %46 = tpu.matmul %44, %45, %cst_21 {dimension_numbers = #tpu.dot_dimension_numbers<[1], [0], [0], [1], [0, 0, 1, 1], [], []>} : vector<8x8xbf16>, vector<8x32xbf16>, vector<8x32xf32> -> vector<8x32xf32>
    %47 = arith.addf %18, %46 : vector<8x32xf32>
    %48 = vector.extract_strided_slice %19 {offsets = [0, 8], sizes = [8, 8], strides = [1, 1]} : vector<8x32xf32> to vector<8x8xf32>
    %cst_22 = arith.constant 0.353553385 : f32
    %49 = vector.broadcast %cst_22 : f32 to vector<8x8xf32>
    %50 = arith.mulf %48, %49 : vector<8x8xf32>
    %51 = arith.truncf %50 : vector<8x8xf32> to vector<8x8xbf16>
    %52 = vector.extract_strided_slice %20 {offsets = [0, 8], sizes = [8, 8], strides = [1, 1]} : vector<8x32xf32> to vector<8x8xf32>
    %53 = arith.truncf %52 : vector<8x8xf32> to vector<8x8xbf16>
    %54 = vector.extract_strided_slice %21 {offsets = [0, 8], sizes = [8, 8], strides = [1, 1]} : vector<8x32xf32> to vector<8x8xf32>
    %55 = arith.truncf %54 : vector<8x8xf32> to vector<8x8xbf16>
    %cst_23 = arith.constant dense<0.000000e+00> : vector<8x8xf32>
    %56 = tpu.matmul %51, %53, %cst_23 {dimension_numbers = #tpu.dot_dimension_numbers<[1], [1], [0], [0], [0, 0, 1, 0], [], []>} : vector<8x8xbf16>, vector<8x8xbf16>, vector<8x8xf32> -> vector<8x8xf32>
    %57 = arith.addf %56, %13 : vector<8x8xf32>
    %cst_24 = arith.constant dense<0xFF800000> : vector<8xf32>
    %58 = vector.multi_reduction <maximumf>, %57, %cst_24 [1] : vector<8x8xf32> to vector<8xf32>
    %59 = vector.shape_cast %58 : vector<8xf32> to vector<8x1xf32>
    %60 = vector.broadcast %59 : vector<8x1xf32> to vector<8x8xf32>
    %61 = arith.subf %57, %60 : vector<8x8xf32>
    %62 = math.exp %61 : vector<8x8xf32>
    %cst_25 = arith.constant dense<0.000000e+00> : vector<8xf32>
    %63 = vector.multi_reduction <add>, %62, %cst_25 [1] : vector<8x8xf32> to vector<8xf32>
    %64 = vector.shape_cast %63 : vector<8xf32> to vector<8x1xf32>
    %65 = vector.broadcast %64 : vector<8x1xf32> to vector<8x8xf32>
    %66 = arith.divf %62, %65 : vector<8x8xf32>
    %67 = arith.truncf %66 : vector<8x8xf32> to vector<8x8xbf16>
    %cst_26 = arith.constant dense<0.000000e+00> : vector<8x8xf32>
    %68 = tpu.matmul %67, %55, %cst_26 {dimension_numbers = #tpu.dot_dimension_numbers<[1], [0], [0], [1], [0, 0, 1, 1], [], []>} : vector<8x8xbf16>, vector<8x8xbf16>, vector<8x8xf32> -> vector<8x8xf32>
    %69 = arith.truncf %68 : vector<8x8xf32> to vector<8x8xbf16>
    %70 = vector.extract_strided_slice %22 {offsets = [8, 0], sizes = [8, 32], strides = [1, 1]} : vector<32x32xbf16> to vector<8x32xbf16>
    %cst_27 = arith.constant dense<0.000000e+00> : vector<8x32xf32>
    %71 = tpu.matmul %69, %70, %cst_27 {dimension_numbers = #tpu.dot_dimension_numbers<[1], [0], [0], [1], [0, 0, 1, 1], [], []>} : vector<8x8xbf16>, vector<8x32xbf16>, vector<8x32xf32> -> vector<8x32xf32>
    %72 = arith.addf %47, %71 : vector<8x32xf32>
    %73 = vector.extract_strided_slice %19 {offsets = [0, 16], sizes = [8, 8], strides = [1, 1]} : vector<8x32xf32> to vector<8x8xf32>
    %cst_28 = arith.constant 0.353553385 : f32
    %74 = vector.broadcast %cst_28 : f32 to vector<8x8xf32>
    %75 = arith.mulf %73, %74 : vector<8x8xf32>
    %76 = arith.truncf %75 : vector<8x8xf32> to vector<8x8xbf16>
    %77 = vector.extract_strided_slice %20 {offsets = [0, 16], sizes = [8, 8], strides = [1, 1]} : vector<8x32xf32> to vector<8x8xf32>
    %78 = arith.truncf %77 : vector<8x8xf32> to vector<8x8xbf16>
    %79 = vector.extract_strided_slice %21 {offsets = [0, 16], sizes = [8, 8], strides = [1, 1]} : vector<8x32xf32> to vector<8x8xf32>
    %80 = arith.truncf %79 : vector<8x8xf32> to vector<8x8xbf16>
    %cst_29 = arith.constant dense<0.000000e+00> : vector<8x8xf32>
    %81 = tpu.matmul %76, %78, %cst_29 {dimension_numbers = #tpu.dot_dimension_numbers<[1], [1], [0], [0], [0, 0, 1, 0], [], []>} : vector<8x8xbf16>, vector<8x8xbf16>, vector<8x8xf32> -> vector<8x8xf32>
    %82 = arith.addf %81, %13 : vector<8x8xf32>
    %cst_30 = arith.constant dense<0xFF800000> : vector<8xf32>
    %83 = vector.multi_reduction <maximumf>, %82, %cst_30 [1] : vector<8x8xf32> to vector<8xf32>
    %84 = vector.shape_cast %83 : vector<8xf32> to vector<8x1xf32>
    %85 = vector.broadcast %84 : vector<8x1xf32> to vector<8x8xf32>
    %86 = arith.subf %82, %85 : vector<8x8xf32>
    %87 = math.exp %86 : vector<8x8xf32>
    %cst_31 = arith.constant dense<0.000000e+00> : vector<8xf32>
    %88 = vector.multi_reduction <add>, %87, %cst_31 [1] : vector<8x8xf32> to vector<8xf32>
    %89 = vector.shape_cast %88 : vector<8xf32> to vector<8x1xf32>
    %90 = vector.broadcast %89 : vector<8x1xf32> to vector<8x8xf32>
    %91 = arith.divf %87, %90 : vector<8x8xf32>
    %92 = arith.truncf %91 : vector<8x8xf32> to vector<8x8xbf16>
    %cst_32 = arith.constant dense<0.000000e+00> : vector<8x8xf32>
    %93 = tpu.matmul %92, %80, %cst_32 {dimension_numbers = #tpu.dot_dimension_numbers<[1], [0], [0], [1], [0, 0, 1, 1], [], []>} : vector<8x8xbf16>, vector<8x8xbf16>, vector<8x8xf32> -> vector<8x8xf32>
    %94 = arith.truncf %93 : vector<8x8xf32> to vector<8x8xbf16>
    %95 = vector.extract_strided_slice %22 {offsets = [16, 0], sizes = [8, 32], strides = [1, 1]} : vector<32x32xbf16> to vector<8x32xbf16>
    %cst_33 = arith.constant dense<0.000000e+00> : vector<8x32xf32>
    %96 = tpu.matmul %94, %95, %cst_33 {dimension_numbers = #tpu.dot_dimension_numbers<[1], [0], [0], [1], [0, 0, 1, 1], [], []>} : vector<8x8xbf16>, vector<8x32xbf16>, vector<8x32xf32> -> vector<8x32xf32>
    %97 = arith.addf %72, %96 : vector<8x32xf32>
    %98 = vector.extract_strided_slice %19 {offsets = [0, 24], sizes = [8, 8], strides = [1, 1]} : vector<8x32xf32> to vector<8x8xf32>
    %cst_34 = arith.constant 0.353553385 : f32
    %99 = vector.broadcast %cst_34 : f32 to vector<8x8xf32>
    %100 = arith.mulf %98, %99 : vector<8x8xf32>
    %101 = arith.truncf %100 : vector<8x8xf32> to vector<8x8xbf16>
    %102 = vector.extract_strided_slice %20 {offsets = [0, 24], sizes = [8, 8], strides = [1, 1]} : vector<8x32xf32> to vector<8x8xf32>
    %103 = arith.truncf %102 : vector<8x8xf32> to vector<8x8xbf16>
    %104 = vector.extract_strided_slice %21 {offsets = [0, 24], sizes = [8, 8], strides = [1, 1]} : vector<8x32xf32> to vector<8x8xf32>
    %105 = arith.truncf %104 : vector<8x8xf32> to vector<8x8xbf16>
    %cst_35 = arith.constant dense<0.000000e+00> : vector<8x8xf32>
    %106 = tpu.matmul %101, %103, %cst_35 {dimension_numbers = #tpu.dot_dimension_numbers<[1], [1], [0], [0], [0, 0, 1, 0], [], []>} : vector<8x8xbf16>, vector<8x8xbf16>, vector<8x8xf32> -> vector<8x8xf32>
    %107 = arith.addf %106, %13 : vector<8x8xf32>
    %cst_36 = arith.constant dense<0xFF800000> : vector<8xf32>
    %108 = vector.multi_reduction <maximumf>, %107, %cst_36 [1] : vector<8x8xf32> to vector<8xf32>
    %109 = vector.shape_cast %108 : vector<8xf32> to vector<8x1xf32>
    %110 = vector.broadcast %109 : vector<8x1xf32> to vector<8x8xf32>
    %111 = arith.subf %107, %110 : vector<8x8xf32>
    %112 = math.exp %111 : vector<8x8xf32>
    %cst_37 = arith.constant dense<0.000000e+00> : vector<8xf32>
    %113 = vector.multi_reduction <add>, %112, %cst_37 [1] : vector<8x8xf32> to vector<8xf32>
    %114 = vector.shape_cast %113 : vector<8xf32> to vector<8x1xf32>
    %115 = vector.broadcast %114 : vector<8x1xf32> to vector<8x8xf32>
    %116 = arith.divf %112, %115 : vector<8x8xf32>
    %117 = arith.truncf %116 : vector<8x8xf32> to vector<8x8xbf16>
    %cst_38 = arith.constant dense<0.000000e+00> : vector<8x8xf32>
    %118 = tpu.matmul %117, %105, %cst_38 {dimension_numbers = #tpu.dot_dimension_numbers<[1], [0], [0], [1], [0, 0, 1, 1], [], []>} : vector<8x8xbf16>, vector<8x8xbf16>, vector<8x8xf32> -> vector<8x8xf32>
    %119 = arith.truncf %118 : vector<8x8xf32> to vector<8x8xbf16>
    %120 = vector.extract_strided_slice %22 {offsets = [24, 0], sizes = [8, 32], strides = [1, 1]} : vector<32x32xbf16> to vector<8x32xbf16>
    %cst_39 = arith.constant dense<0.000000e+00> : vector<8x32xf32>
    %121 = tpu.matmul %119, %120, %cst_39 {dimension_numbers = #tpu.dot_dimension_numbers<[1], [0], [0], [1], [0, 0, 1, 1], [], []>} : vector<8x8xbf16>, vector<8x32xbf16>, vector<8x32xf32> -> vector<8x32xf32>
    %122 = arith.addf %97, %121 : vector<8x32xf32>
    %c0_40 = arith.constant 0 : index
    %c0_41 = arith.constant 0 : index
    %123 = vector.load %arg6[%c0_40, %c0_41] : memref<1x32xbf16, #tpu.memory_space<vmem>>, vector<1x32xbf16>
    %c0_42 = arith.constant 0 : index
    %c0_43 = arith.constant 0 : index
    %124 = vector.load %arg7[%c0_42, %c0_43] : memref<1x32xbf16, #tpu.memory_space<vmem>>, vector<1x32xbf16>
    %cst_44 = arith.constant dense<0.000000e+00> : vector<8xf32>
    %125 = vector.multi_reduction <add>, %122, %cst_44 [1] : vector<8x32xf32> to vector<8xf32>
    %126 = vector.shape_cast %125 : vector<8xf32> to vector<8x1xf32>
    %cst_45 = arith.constant 3.200000e+01 : f32
    %127 = vector.broadcast %cst_45 : f32 to vector<8x1xf32>
    %128 = arith.divf %126, %127 : vector<8x1xf32>
    %129 = vector.broadcast %128 : vector<8x1xf32> to vector<8x32xf32>
    %130 = arith.subf %122, %129 : vector<8x32xf32>
    %131 = arith.mulf %130, %130 : vector<8x32xf32>
    %cst_46 = arith.constant dense<0.000000e+00> : vector<8xf32>
    %132 = vector.multi_reduction <add>, %131, %cst_46 [1] : vector<8x32xf32> to vector<8xf32>
    %133 = vector.shape_cast %132 : vector<8xf32> to vector<8x1xf32>
    %cst_47 = arith.constant 3.200000e+01 : f32
    %134 = vector.broadcast %cst_47 : f32 to vector<8x1xf32>
    %135 = arith.divf %133, %134 : vector<8x1xf32>
    %136 = vector.broadcast %128 : vector<8x1xf32> to vector<8x32xf32>
    %137 = arith.subf %122, %136 : vector<8x32xf32>
    %cst_48 = arith.constant 9.99999974E-6 : f32
    %138 = vector.broadcast %cst_48 : f32 to vector<8x1xf32>
    %139 = arith.addf %135, %138 : vector<8x1xf32>
    %140 = math.rsqrt %139 : vector<8x1xf32>
    %141 = vector.broadcast %140 : vector<8x1xf32> to vector<8x32xf32>
    %142 = arith.mulf %137, %141 : vector<8x32xf32>
    %143 = arith.extf %123 : vector<1x32xbf16> to vector<1x32xf32>
    %144 = vector.broadcast %143 : vector<1x32xf32> to vector<8x32xf32>
    %145 = arith.mulf %142, %144 : vector<8x32xf32>
    %146 = arith.extf %124 : vector<1x32xbf16> to vector<1x32xf32>
    %147 = vector.broadcast %146 : vector<1x32xf32> to vector<8x32xf32>
    %148 = arith.addf %145, %147 : vector<8x32xf32>
    %149 = arith.truncf %148 : vector<8x32xf32> to vector<8x32xbf16>
    %c0_49 = arith.constant 0 : index
    %c0_50 = arith.constant 0 : index
    %c0_51 = arith.constant 0 : index
    %150 = vector.load %arg10[%c0_49, %c0_50, %c0_51] : memref<1x8x32xbf16, #tpu.memory_space<vmem>>, vector<1x8x32xbf16>
    %151 = vector.shape_cast %150 : vector<1x8x32xbf16> to vector<8x32xbf16>
    %152 = vector.shape_cast %149 : vector<8x32xbf16> to vector<1x8x32xbf16>
    tpu.vector_store %arg10[%c0_49, %c0_50, %c0_51], %152 {strides = array<i32>} : memref<1x8x32xbf16, #tpu.memory_space<vmem>>, vector<1x8x32xbf16>,
    return
  }
  func.func @transform_0(%arg0: i32) -> (i32, i32, i32) {
    %c0_i32 = arith.constant 0 : i32
    %c0_i32_0 = arith.constant 0 : i32
    %c0_i32_1 = arith.constant 0 : i32
    return %arg0, %c0_i32, %c0_i32_0 : i32, i32, i32
  }
  func.func @transform_1(%arg0: i32) -> (i32, i32) {
    %c0_i32 = arith.constant 0 : i32
    %c0_i32_0 = arith.constant 0 : i32
    %c0_i32_1 = arith.constant 0 : i32
    return %c0_i32, %c0_i32_0 : i32, i32
  }
  func.func @transform_2(%arg0: i32) -> (i32, i32) {
    %c0_i32 = arith.constant 0 : i32
    %c0_i32_0 = arith.constant 0 : i32
    %c0_i32_1 = arith.constant 0 : i32
    return %c0_i32, %c0_i32_0 : i32, i32
  }
  func.func @transform_3(%arg0: i32) -> (i32, i32) {
    %c0_i32 = arith.constant 0 : i32
    %c0_i32_0 = arith.constant 0 : i32
    %c0_i32_1 = arith.constant 0 : i32
    return %c0_i32, %c0_i32_0 : i32, i32
  }
  func.func @transform_4(%arg0: i32) -> (i32, i32) {
    %c0_i32 = arith.constant 0 : i32
    %c0_i32_0 = arith.constant 0 : i32
    %c0_i32_1 = arith.constant 0 : i32
    return %c0_i32, %c0_i32_0 : i32, i32
  }
  func.func @transform_5(%arg0: i32) -> (i32, i32) {
    %c0_i32 = arith.constant 0 : i32
    %c0_i32_0 = arith.constant 0 : i32
    %c0_i32_1 = arith.constant 0 : i32
    return %c0_i32, %c0_i32_0 : i32, i32
  }
  func.func @transform_6(%arg0: i32) -> (i32, i32) {
    %c0_i32 = arith.constant 0 : i32
    %c0_i32_0 = arith.constant 0 : i32
    %c0_i32_1 = arith.constant 0 : i32
    return %c0_i32, %c0_i32_0 : i32, i32
  }
  func.func @transform_7(%arg0: i32) -> (i32, i32, i32) {
    %c0_i32 = arith.constant 0 : i32
    %c0_i32_0 = arith.constant 0 : i32
    %c0_i32_1 = arith.constant 0 : i32
    %c0_i32_2 = arith.constant 0 : i32
    return %c0_i32, %c0_i32_0, %c0_i32_1 : i32, i32, i32
  }
  func.func @transform_8(%arg0: i32) -> (i32, i32, i32) {
    %c0_i32 = arith.constant 0 : i32
    %c0_i32_0 = arith.constant 0 : i32
    %c0_i32_1 = arith.constant 0 : i32
    return %arg0, %c0_i32, %c0_i32_0 : i32, i32, i32
  }
  func.func @transform_9(%arg0: i32) -> (i32, i32, i32) {
    %c0_i32 = arith.constant 0 : i32
    %c0_i32_0 = arith.constant 0 : i32
    %c0_i32_1 = arith.constant 0 : i32
    return %arg0, %c0_i32, %c0_i32_0 : i32, i32, i32
  }
}

module attributes {stable_mosaic.version = 11 : i64} {
  func.func @_cross_attn_block_kernel(%arg0: i32, %arg1: memref<1x8x32xbf16, #tpu.memory_space<vmem>>, %arg2: memref<1x8x32xbf16, #tpu.memory_space<vmem>>, %arg3: memref<32x32xbf16, #tpu.memory_space<vmem>>, %arg4: memref<1x32xbf16, #tpu.memory_space<vmem>>, %arg5: memref<32x64xbf16, #tpu.memory_space<vmem>>, %arg6: memref<1x64xbf16, #tpu.memory_space<vmem>>, %arg7: memref<32x32xbf16, #tpu.memory_space<vmem>>, %arg8: memref<1x32xbf16, #tpu.memory_space<vmem>>, %arg9: memref<1x32xbf16, #tpu.memory_space<vmem>>, %arg10: memref<1x32xbf16, #tpu.memory_space<vmem>>, %arg11: memref<1x1x8xf32, #tpu.memory_space<vmem>>, %arg12: memref<1x8x32xbf16, #tpu.memory_space<vmem>>) attributes {dimension_semantics = [#tpu.dimension_semantics<parallel>], iteration_bounds = array<i64: 2>, scalar_prefetch = 0 : i64, scratch_operands = 0 : i64, tpu.core_type = #tpu.core_type<tc>, window_params = [{transform_indices = @transform_0, window_bounds = array<i64: 1, 8, 32>}, {transform_indices = @transform_1, window_bounds = array<i64: 1, 8, 32>}, {pipeline_mode = #tpu.pipeline_mode<synchronous>, transform_indices = @transform_2, window_bounds = array<i64: 32, 32>}, {pipeline_mode = #tpu.pipeline_mode<synchronous>, transform_indices = @transform_3, window_bounds = array<i64: 1, 32>}, {pipeline_mode = #tpu.pipeline_mode<synchronous>, transform_indices = @transform_4, window_bounds = array<i64: 32, 64>}, {pipeline_mode = #tpu.pipeline_mode<synchronous>, transform_indices = @transform_5, window_bounds = array<i64: 1, 64>}, {pipeline_mode = #tpu.pipeline_mode<synchronous>, transform_indices = @transform_6, window_bounds = array<i64: 32, 32>}, {pipeline_mode = #tpu.pipeline_mode<synchronous>, transform_indices = @transform_7, window_bounds = array<i64: 1, 32>}, {pipeline_mode = #tpu.pipeline_mode<synchronous>, transform_indices = @transform_8, window_bounds = array<i64: 1, 32>}, {pipeline_mode = #tpu.pipeline_mode<synchronous>, transform_indices = @transform_9, window_bounds = array<i64: 1, 32>}, {transform_indices = @transform_10, window_bounds = array<i64: 1, 1, 8>}, {transform_indices = @transform_11, window_bounds = array<i64: 1, 8, 32>}]} {
    %c0 = arith.constant 0 : index
    %c0_0 = arith.constant 0 : index
    %c0_1 = arith.constant 0 : index
    %0 = vector.load %arg1[%c0, %c0_0, %c0_1] : memref<1x8x32xbf16, #tpu.memory_space<vmem>>, vector<1x8x32xbf16>
    %1 = vector.shape_cast %0 : vector<1x8x32xbf16> to vector<8x32xbf16>
    %c0_2 = arith.constant 0 : index
    %c0_3 = arith.constant 0 : index
    %c0_4 = arith.constant 0 : index
    %2 = vector.load %arg2[%c0_2, %c0_3, %c0_4] : memref<1x8x32xbf16, #tpu.memory_space<vmem>>, vector<1x8x32xbf16>
    %3 = vector.shape_cast %2 : vector<1x8x32xbf16> to vector<8x32xbf16>
    %c0_5 = arith.constant 0 : index
    %c0_6 = arith.constant 0 : index
    %4 = vector.load %arg3[%c0_5, %c0_6] : memref<32x32xbf16, #tpu.memory_space<vmem>>, vector<32x32xbf16>
    %cst = arith.constant dense<0.000000e+00> : vector<8x32xf32>
    %5 = tpu.matmul %1, %4, %cst {dimension_numbers = #tpu.dot_dimension_numbers<[1], [0], [0], [1], [0, 0, 1, 1], [], []>} : vector<8x32xbf16>, vector<32x32xbf16>, vector<8x32xf32> -> vector<8x32xf32>
    %c0_7 = arith.constant 0 : index
    %c0_8 = arith.constant 0 : index
    %6 = vector.load %arg4[%c0_7, %c0_8] : memref<1x32xbf16, #tpu.memory_space<vmem>>, vector<1x32xbf16>
    %7 = arith.extf %6 : vector<1x32xbf16> to vector<1x32xf32>
    %8 = vector.broadcast %7 : vector<1x32xf32> to vector<8x32xf32>
    %9 = arith.addf %5, %8 : vector<8x32xf32>
    %c0_9 = arith.constant 0 : index
    %c0_10 = arith.constant 0 : index
    %10 = vector.load %arg5[%c0_9, %c0_10] : memref<32x64xbf16, #tpu.memory_space<vmem>>, vector<32x64xbf16>
    %cst_11 = arith.constant dense<0.000000e+00> : vector<8x64xf32>
    %11 = tpu.matmul %3, %10, %cst_11 {dimension_numbers = #tpu.dot_dimension_numbers<[1], [0], [0], [1], [0, 0, 1, 1], [], []>} : vector<8x32xbf16>, vector<32x64xbf16>, vector<8x64xf32> -> vector<8x64xf32>
    %c0_12 = arith.constant 0 : index
    %c0_13 = arith.constant 0 : index
    %12 = vector.load %arg6[%c0_12, %c0_13] : memref<1x64xbf16, #tpu.memory_space<vmem>>, vector<1x64xbf16>
    %13 = arith.extf %12 : vector<1x64xbf16> to vector<1x64xf32>
    %14 = vector.broadcast %13 : vector<1x64xf32> to vector<8x64xf32>
    %15 = arith.addf %11, %14 : vector<8x64xf32>
    %c0_14 = arith.constant 0 : index
    %c0_15 = arith.constant 0 : index
    %c0_16 = arith.constant 0 : index
    %16 = vector.load %arg11[%c0_14, %c0_15, %c0_16] : memref<1x1x8xf32, #tpu.memory_space<vmem>>, vector<1x1x8xf32>
    %17 = vector.shape_cast %16 : vector<1x1x8xf32> to vector<1x8xf32>
    %18 = arith.extf %1 : vector<8x32xbf16> to vector<8x32xf32>
    %c0_17 = arith.constant 0 : index
    %c0_18 = arith.constant 0 : index
    %19 = vector.load %arg8[%c0_17, %c0_18] : memref<1x32xbf16, #tpu.memory_space<vmem>>, vector<1x32xbf16>
    %20 = arith.extf %19 : vector<1x32xbf16> to vector<1x32xf32>
    %21 = vector.broadcast %20 : vector<1x32xf32> to vector<8x32xf32>
    %22 = arith.addf %18, %21 : vector<8x32xf32>
    %23 = vector.extract_strided_slice %15 {offsets = [0, 0], sizes = [8, 32], strides = [1, 1]} : vector<8x64xf32> to vector<8x32xf32>
    %24 = vector.extract_strided_slice %15 {offsets = [0, 32], sizes = [8, 32], strides = [1, 1]} : vector<8x64xf32> to vector<8x32xf32>
    %c0_19 = arith.constant 0 : index
    %c0_20 = arith.constant 0 : index
    %25 = vector.load %arg7[%c0_19, %c0_20] : memref<32x32xbf16, #tpu.memory_space<vmem>>, vector<32x32xbf16>
    %26 = vector.extract_strided_slice %9 {offsets = [0, 0], sizes = [8, 8], strides = [1, 1]} : vector<8x32xf32> to vector<8x8xf32>
    %cst_21 = arith.constant 0.353553385 : f32
    %27 = vector.broadcast %cst_21 : f32 to vector<8x8xf32>
    %28 = arith.mulf %26, %27 : vector<8x8xf32>
    %29 = arith.truncf %28 : vector<8x8xf32> to vector<8x8xbf16>
    %30 = vector.extract_strided_slice %23 {offsets = [0, 0], sizes = [8, 8], strides = [1, 1]} : vector<8x32xf32> to vector<8x8xf32>
    %31 = arith.truncf %30 : vector<8x8xf32> to vector<8x8xbf16>
    %32 = vector.extract_strided_slice %24 {offsets = [0, 0], sizes = [8, 8], strides = [1, 1]} : vector<8x32xf32> to vector<8x8xf32>
    %33 = arith.truncf %32 : vector<8x8xf32> to vector<8x8xbf16>
    %cst_22 = arith.constant dense<0.000000e+00> : vector<8x8xf32>
    %34 = tpu.matmul %29, %31, %cst_22 {dimension_numbers = #tpu.dot_dimension_numbers<[1], [1], [0], [0], [0, 0, 1, 0], [], []>} : vector<8x8xbf16>, vector<8x8xbf16>, vector<8x8xf32> -> vector<8x8xf32>
    %35 = vector.broadcast %17 : vector<1x8xf32> to vector<8x8xf32>
    %36 = arith.addf %34, %35 : vector<8x8xf32>
    %cst_23 = arith.constant dense<0xFF800000> : vector<8xf32>
    %37 = vector.multi_reduction <maximumf>, %36, %cst_23 [1] : vector<8x8xf32> to vector<8xf32>
    %38 = vector.shape_cast %37 : vector<8xf32> to vector<8x1xf32>
    %39 = vector.broadcast %38 : vector<8x1xf32> to vector<8x8xf32>
    %40 = arith.subf %36, %39 : vector<8x8xf32>
    %41 = math.exp %40 : vector<8x8xf32>
    %cst_24 = arith.constant dense<0.000000e+00> : vector<8xf32>
    %42 = vector.multi_reduction <add>, %41, %cst_24 [1] : vector<8x8xf32> to vector<8xf32>
    %43 = vector.shape_cast %42 : vector<8xf32> to vector<8x1xf32>
    %44 = vector.broadcast %43 : vector<8x1xf32> to vector<8x8xf32>
    %45 = arith.divf %41, %44 : vector<8x8xf32>
    %46 = arith.truncf %45 : vector<8x8xf32> to vector<8x8xbf16>
    %cst_25 = arith.constant dense<0.000000e+00> : vector<8x8xf32>
    %47 = tpu.matmul %46, %33, %cst_25 {dimension_numbers = #tpu.dot_dimension_numbers<[1], [0], [0], [1], [0, 0, 1, 1], [], []>} : vector<8x8xbf16>, vector<8x8xbf16>, vector<8x8xf32> -> vector<8x8xf32>
    %48 = arith.truncf %47 : vector<8x8xf32> to vector<8x8xbf16>
    %49 = vector.extract_strided_slice %25 {offsets = [0, 0], sizes = [8, 32], strides = [1, 1]} : vector<32x32xbf16> to vector<8x32xbf16>
    %cst_26 = arith.constant dense<0.000000e+00> : vector<8x32xf32>
    %50 = tpu.matmul %48, %49, %cst_26 {dimension_numbers = #tpu.dot_dimension_numbers<[1], [0], [0], [1], [0, 0, 1, 1], [], []>} : vector<8x8xbf16>, vector<8x32xbf16>, vector<8x32xf32> -> vector<8x32xf32>
    %51 = arith.addf %22, %50 : vector<8x32xf32>
    %52 = vector.extract_strided_slice %9 {offsets = [0, 8], sizes = [8, 8], strides = [1, 1]} : vector<8x32xf32> to vector<8x8xf32>
    %cst_27 = arith.constant 0.353553385 : f32
    %53 = vector.broadcast %cst_27 : f32 to vector<8x8xf32>
    %54 = arith.mulf %52, %53 : vector<8x8xf32>
    %55 = arith.truncf %54 : vector<8x8xf32> to vector<8x8xbf16>
    %56 = vector.extract_strided_slice %23 {offsets = [0, 8], sizes = [8, 8], strides = [1, 1]} : vector<8x32xf32> to vector<8x8xf32>
    %57 = arith.truncf %56 : vector<8x8xf32> to vector<8x8xbf16>
    %58 = vector.extract_strided_slice %24 {offsets = [0, 8], sizes = [8, 8], strides = [1, 1]} : vector<8x32xf32> to vector<8x8xf32>
    %59 = arith.truncf %58 : vector<8x8xf32> to vector<8x8xbf16>
    %cst_28 = arith.constant dense<0.000000e+00> : vector<8x8xf32>
    %60 = tpu.matmul %55, %57, %cst_28 {dimension_numbers = #tpu.dot_dimension_numbers<[1], [1], [0], [0], [0, 0, 1, 0], [], []>} : vector<8x8xbf16>, vector<8x8xbf16>, vector<8x8xf32> -> vector<8x8xf32>
    %61 = vector.broadcast %17 : vector<1x8xf32> to vector<8x8xf32>
    %62 = arith.addf %60, %61 : vector<8x8xf32>
    %cst_29 = arith.constant dense<0xFF800000> : vector<8xf32>
    %63 = vector.multi_reduction <maximumf>, %62, %cst_29 [1] : vector<8x8xf32> to vector<8xf32>
    %64 = vector.shape_cast %63 : vector<8xf32> to vector<8x1xf32>
    %65 = vector.broadcast %64 : vector<8x1xf32> to vector<8x8xf32>
    %66 = arith.subf %62, %65 : vector<8x8xf32>
    %67 = math.exp %66 : vector<8x8xf32>
    %cst_30 = arith.constant dense<0.000000e+00> : vector<8xf32>
    %68 = vector.multi_reduction <add>, %67, %cst_30 [1] : vector<8x8xf32> to vector<8xf32>
    %69 = vector.shape_cast %68 : vector<8xf32> to vector<8x1xf32>
    %70 = vector.broadcast %69 : vector<8x1xf32> to vector<8x8xf32>
    %71 = arith.divf %67, %70 : vector<8x8xf32>
    %72 = arith.truncf %71 : vector<8x8xf32> to vector<8x8xbf16>
    %cst_31 = arith.constant dense<0.000000e+00> : vector<8x8xf32>
    %73 = tpu.matmul %72, %59, %cst_31 {dimension_numbers = #tpu.dot_dimension_numbers<[1], [0], [0], [1], [0, 0, 1, 1], [], []>} : vector<8x8xbf16>, vector<8x8xbf16>, vector<8x8xf32> -> vector<8x8xf32>
    %74 = arith.truncf %73 : vector<8x8xf32> to vector<8x8xbf16>
    %75 = vector.extract_strided_slice %25 {offsets = [8, 0], sizes = [8, 32], strides = [1, 1]} : vector<32x32xbf16> to vector<8x32xbf16>
    %cst_32 = arith.constant dense<0.000000e+00> : vector<8x32xf32>
    %76 = tpu.matmul %74, %75, %cst_32 {dimension_numbers = #tpu.dot_dimension_numbers<[1], [0], [0], [1], [0, 0, 1, 1], [], []>} : vector<8x8xbf16>, vector<8x32xbf16>, vector<8x32xf32> -> vector<8x32xf32>
    %77 = arith.addf %51, %76 : vector<8x32xf32>
    %78 = vector.extract_strided_slice %9 {offsets = [0, 16], sizes = [8, 8], strides = [1, 1]} : vector<8x32xf32> to vector<8x8xf32>
    %cst_33 = arith.constant 0.353553385 : f32
    %79 = vector.broadcast %cst_33 : f32 to vector<8x8xf32>
    %80 = arith.mulf %78, %79 : vector<8x8xf32>
    %81 = arith.truncf %80 : vector<8x8xf32> to vector<8x8xbf16>
    %82 = vector.extract_strided_slice %23 {offsets = [0, 16], sizes = [8, 8], strides = [1, 1]} : vector<8x32xf32> to vector<8x8xf32>
    %83 = arith.truncf %82 : vector<8x8xf32> to vector<8x8xbf16>
    %84 = vector.extract_strided_slice %24 {offsets = [0, 16], sizes = [8, 8], strides = [1, 1]} : vector<8x32xf32> to vector<8x8xf32>
    %85 = arith.truncf %84 : vector<8x8xf32> to vector<8x8xbf16>
    %cst_34 = arith.constant dense<0.000000e+00> : vector<8x8xf32>
    %86 = tpu.matmul %81, %83, %cst_34 {dimension_numbers = #tpu.dot_dimension_numbers<[1], [1], [0], [0], [0, 0, 1, 0], [], []>} : vector<8x8xbf16>, vector<8x8xbf16>, vector<8x8xf32> -> vector<8x8xf32>
    %87 = vector.broadcast %17 : vector<1x8xf32> to vector<8x8xf32>
    %88 = arith.addf %86, %87 : vector<8x8xf32>
    %cst_35 = arith.constant dense<0xFF800000> : vector<8xf32>
    %89 = vector.multi_reduction <maximumf>, %88, %cst_35 [1] : vector<8x8xf32> to vector<8xf32>
    %90 = vector.shape_cast %89 : vector<8xf32> to vector<8x1xf32>
    %91 = vector.broadcast %90 : vector<8x1xf32> to vector<8x8xf32>
    %92 = arith.subf %88, %91 : vector<8x8xf32>
    %93 = math.exp %92 : vector<8x8xf32>
    %cst_36 = arith.constant dense<0.000000e+00> : vector<8xf32>
    %94 = vector.multi_reduction <add>, %93, %cst_36 [1] : vector<8x8xf32> to vector<8xf32>
    %95 = vector.shape_cast %94 : vector<8xf32> to vector<8x1xf32>
    %96 = vector.broadcast %95 : vector<8x1xf32> to vector<8x8xf32>
    %97 = arith.divf %93, %96 : vector<8x8xf32>
    %98 = arith.truncf %97 : vector<8x8xf32> to vector<8x8xbf16>
    %cst_37 = arith.constant dense<0.000000e+00> : vector<8x8xf32>
    %99 = tpu.matmul %98, %85, %cst_37 {dimension_numbers = #tpu.dot_dimension_numbers<[1], [0], [0], [1], [0, 0, 1, 1], [], []>} : vector<8x8xbf16>, vector<8x8xbf16>, vector<8x8xf32> -> vector<8x8xf32>
    %100 = arith.truncf %99 : vector<8x8xf32> to vector<8x8xbf16>
    %101 = vector.extract_strided_slice %25 {offsets = [16, 0], sizes = [8, 32], strides = [1, 1]} : vector<32x32xbf16> to vector<8x32xbf16>
    %cst_38 = arith.constant dense<0.000000e+00> : vector<8x32xf32>
    %102 = tpu.matmul %100, %101, %cst_38 {dimension_numbers = #tpu.dot_dimension_numbers<[1], [0], [0], [1], [0, 0, 1, 1], [], []>} : vector<8x8xbf16>, vector<8x32xbf16>, vector<8x32xf32> -> vector<8x32xf32>
    %103 = arith.addf %77, %102 : vector<8x32xf32>
    %104 = vector.extract_strided_slice %9 {offsets = [0, 24], sizes = [8, 8], strides = [1, 1]} : vector<8x32xf32> to vector<8x8xf32>
    %cst_39 = arith.constant 0.353553385 : f32
    %105 = vector.broadcast %cst_39 : f32 to vector<8x8xf32>
    %106 = arith.mulf %104, %105 : vector<8x8xf32>
    %107 = arith.truncf %106 : vector<8x8xf32> to vector<8x8xbf16>
    %108 = vector.extract_strided_slice %23 {offsets = [0, 24], sizes = [8, 8], strides = [1, 1]} : vector<8x32xf32> to vector<8x8xf32>
    %109 = arith.truncf %108 : vector<8x8xf32> to vector<8x8xbf16>
    %110 = vector.extract_strided_slice %24 {offsets = [0, 24], sizes = [8, 8], strides = [1, 1]} : vector<8x32xf32> to vector<8x8xf32>
    %111 = arith.truncf %110 : vector<8x8xf32> to vector<8x8xbf16>
    %cst_40 = arith.constant dense<0.000000e+00> : vector<8x8xf32>
    %112 = tpu.matmul %107, %109, %cst_40 {dimension_numbers = #tpu.dot_dimension_numbers<[1], [1], [0], [0], [0, 0, 1, 0], [], []>} : vector<8x8xbf16>, vector<8x8xbf16>, vector<8x8xf32> -> vector<8x8xf32>
    %113 = vector.broadcast %17 : vector<1x8xf32> to vector<8x8xf32>
    %114 = arith.addf %112, %113 : vector<8x8xf32>
    %cst_41 = arith.constant dense<0xFF800000> : vector<8xf32>
    %115 = vector.multi_reduction <maximumf>, %114, %cst_41 [1] : vector<8x8xf32> to vector<8xf32>
    %116 = vector.shape_cast %115 : vector<8xf32> to vector<8x1xf32>
    %117 = vector.broadcast %116 : vector<8x1xf32> to vector<8x8xf32>
    %118 = arith.subf %114, %117 : vector<8x8xf32>
    %119 = math.exp %118 : vector<8x8xf32>
    %cst_42 = arith.constant dense<0.000000e+00> : vector<8xf32>
    %120 = vector.multi_reduction <add>, %119, %cst_42 [1] : vector<8x8xf32> to vector<8xf32>
    %121 = vector.shape_cast %120 : vector<8xf32> to vector<8x1xf32>
    %122 = vector.broadcast %121 : vector<8x1xf32> to vector<8x8xf32>
    %123 = arith.divf %119, %122 : vector<8x8xf32>
    %124 = arith.truncf %123 : vector<8x8xf32> to vector<8x8xbf16>
    %cst_43 = arith.constant dense<0.000000e+00> : vector<8x8xf32>
    %125 = tpu.matmul %124, %111, %cst_43 {dimension_numbers = #tpu.dot_dimension_numbers<[1], [0], [0], [1], [0, 0, 1, 1], [], []>} : vector<8x8xbf16>, vector<8x8xbf16>, vector<8x8xf32> -> vector<8x8xf32>
    %126 = arith.truncf %125 : vector<8x8xf32> to vector<8x8xbf16>
    %127 = vector.extract_strided_slice %25 {offsets = [24, 0], sizes = [8, 32], strides = [1, 1]} : vector<32x32xbf16> to vector<8x32xbf16>
    %cst_44 = arith.constant dense<0.000000e+00> : vector<8x32xf32>
    %128 = tpu.matmul %126, %127, %cst_44 {dimension_numbers = #tpu.dot_dimension_numbers<[1], [0], [0], [1], [0, 0, 1, 1], [], []>} : vector<8x8xbf16>, vector<8x32xbf16>, vector<8x32xf32> -> vector<8x32xf32>
    %129 = arith.addf %103, %128 : vector<8x32xf32>
    %c0_45 = arith.constant 0 : index
    %c0_46 = arith.constant 0 : index
    %130 = vector.load %arg9[%c0_45, %c0_46] : memref<1x32xbf16, #tpu.memory_space<vmem>>, vector<1x32xbf16>
    %c0_47 = arith.constant 0 : index
    %c0_48 = arith.constant 0 : index
    %131 = vector.load %arg10[%c0_47, %c0_48] : memref<1x32xbf16, #tpu.memory_space<vmem>>, vector<1x32xbf16>
    %cst_49 = arith.constant dense<0.000000e+00> : vector<8xf32>
    %132 = vector.multi_reduction <add>, %129, %cst_49 [1] : vector<8x32xf32> to vector<8xf32>
    %133 = vector.shape_cast %132 : vector<8xf32> to vector<8x1xf32>
    %cst_50 = arith.constant 3.200000e+01 : f32
    %134 = vector.broadcast %cst_50 : f32 to vector<8x1xf32>
    %135 = arith.divf %133, %134 : vector<8x1xf32>
    %136 = vector.broadcast %135 : vector<8x1xf32> to vector<8x32xf32>
    %137 = arith.subf %129, %136 : vector<8x32xf32>
    %138 = arith.mulf %137, %137 : vector<8x32xf32>
    %cst_51 = arith.constant dense<0.000000e+00> : vector<8xf32>
    %139 = vector.multi_reduction <add>, %138, %cst_51 [1] : vector<8x32xf32> to vector<8xf32>
    %140 = vector.shape_cast %139 : vector<8xf32> to vector<8x1xf32>
    %cst_52 = arith.constant 3.200000e+01 : f32
    %141 = vector.broadcast %cst_52 : f32 to vector<8x1xf32>
    %142 = arith.divf %140, %141 : vector<8x1xf32>
    %143 = vector.broadcast %135 : vector<8x1xf32> to vector<8x32xf32>
    %144 = arith.subf %129, %143 : vector<8x32xf32>
    %cst_53 = arith.constant 9.99999974E-6 : f32
    %145 = vector.broadcast %cst_53 : f32 to vector<8x1xf32>
    %146 = arith.addf %142, %145 : vector<8x1xf32>
    %147 = math.rsqrt %146 : vector<8x1xf32>
    %148 = vector.broadcast %147 : vector<8x1xf32> to vector<8x32xf32>
    %149 = arith.mulf %144, %148 : vector<8x32xf32>
    %150 = arith.extf %130 : vector<1x32xbf16> to vector<1x32xf32>
    %151 = vector.broadcast %150 : vector<1x32xf32> to vector<8x32xf32>
    %152 = arith.mulf %149, %151 : vector<8x32xf32>
    %153 = arith.extf %131 : vector<1x32xbf16> to vector<1x32xf32>
    %154 = vector.broadcast %153 : vector<1x32xf32> to vector<8x32xf32>
    %155 = arith.addf %152, %154 : vector<8x32xf32>
    %156 = arith.truncf %155 : vector<8x32xf32> to vector<8x32xbf16>
    %c0_54 = arith.constant 0 : index
    %c0_55 = arith.constant 0 : index
    %c0_56 = arith.constant 0 : index
    %157 = vector.load %arg12[%c0_54, %c0_55, %c0_56] : memref<1x8x32xbf16, #tpu.memory_space<vmem>>, vector<1x8x32xbf16>
    %158 = vector.shape_cast %157 : vector<1x8x32xbf16> to vector<8x32xbf16>
    %159 = vector.shape_cast %156 : vector<8x32xbf16> to vector<1x8x32xbf16>
    tpu.vector_store %arg12[%c0_54, %c0_55, %c0_56], %159 {strides = array<i32>} : memref<1x8x32xbf16, #tpu.memory_space<vmem>>, vector<1x8x32xbf16>,
    return
  }
  func.func @transform_0(%arg0: i32) -> (i32, i32, i32) {
    %c0_i32 = arith.constant 0 : i32
    %c0_i32_0 = arith.constant 0 : i32
    %c0_i32_1 = arith.constant 0 : i32
    return %arg0, %c0_i32, %c0_i32_0 : i32, i32, i32
  }
  func.func @transform_1(%arg0: i32) -> (i32, i32, i32) {
    %c0_i32 = arith.constant 0 : i32
    %c0_i32_0 = arith.constant 0 : i32
    %c0_i32_1 = arith.constant 0 : i32
    return %arg0, %c0_i32, %c0_i32_0 : i32, i32, i32
  }
  func.func @transform_2(%arg0: i32) -> (i32, i32) {
    %c0_i32 = arith.constant 0 : i32
    %c0_i32_0 = arith.constant 0 : i32
    %c0_i32_1 = arith.constant 0 : i32
    return %c0_i32, %c0_i32_0 : i32, i32
  }
  func.func @transform_3(%arg0: i32) -> (i32, i32) {
    %c0_i32 = arith.constant 0 : i32
    %c0_i32_0 = arith.constant 0 : i32
    %c0_i32_1 = arith.constant 0 : i32
    return %c0_i32, %c0_i32_0 : i32, i32
  }
  func.func @transform_4(%arg0: i32) -> (i32, i32) {
    %c0_i32 = arith.constant 0 : i32
    %c0_i32_0 = arith.constant 0 : i32
    %c0_i32_1 = arith.constant 0 : i32
    return %c0_i32, %c0_i32_0 : i32, i32
  }
  func.func @transform_5(%arg0: i32) -> (i32, i32) {
    %c0_i32 = arith.constant 0 : i32
    %c0_i32_0 = arith.constant 0 : i32
    %c0_i32_1 = arith.constant 0 : i32
    return %c0_i32, %c0_i32_0 : i32, i32
  }
  func.func @transform_6(%arg0: i32) -> (i32, i32) {
    %c0_i32 = arith.constant 0 : i32
    %c0_i32_0 = arith.constant 0 : i32
    %c0_i32_1 = arith.constant 0 : i32
    return %c0_i32, %c0_i32_0 : i32, i32
  }
  func.func @transform_7(%arg0: i32) -> (i32, i32) {
    %c0_i32 = arith.constant 0 : i32
    %c0_i32_0 = arith.constant 0 : i32
    %c0_i32_1 = arith.constant 0 : i32
    return %c0_i32, %c0_i32_0 : i32, i32
  }
  func.func @transform_8(%arg0: i32) -> (i32, i32) {
    %c0_i32 = arith.constant 0 : i32
    %c0_i32_0 = arith.constant 0 : i32
    %c0_i32_1 = arith.constant 0 : i32
    return %c0_i32, %c0_i32_0 : i32, i32
  }
  func.func @transform_9(%arg0: i32) -> (i32, i32) {
    %c0_i32 = arith.constant 0 : i32
    %c0_i32_0 = arith.constant 0 : i32
    %c0_i32_1 = arith.constant 0 : i32
    return %c0_i32, %c0_i32_0 : i32, i32
  }
  func.func @transform_10(%arg0: i32) -> (i32, i32, i32) {
    %c0_i32 = arith.constant 0 : i32
    %c0_i32_0 = arith.constant 0 : i32
    %c0_i32_1 = arith.constant 0 : i32
    return %arg0, %c0_i32, %c0_i32_0 : i32, i32, i32
  }
  func.func @transform_11(%arg0: i32) -> (i32, i32, i32) {
    %c0_i32 = arith.constant 0 : i32
    %c0_i32_0 = arith.constant 0 : i32
    %c0_i32_1 = arith.constant 0 : i32
    return %arg0, %c0_i32, %c0_i32_0 : i32, i32, i32
  }
}

module attributes {stable_mosaic.version = 11 : i64} {
  func.func @_ffn_add_ln_kernel(%arg0: i32, %arg1: i32, %arg2: memref<16x32xbf16, #tpu.memory_space<vmem>>, %arg3: memref<32x64xbf16, #tpu.memory_space<vmem>>, %arg4: memref<1x64xbf16, #tpu.memory_space<vmem>>, %arg5: memref<64x32xbf16, #tpu.memory_space<vmem>>, %arg6: memref<1x32xbf16, #tpu.memory_space<vmem>>, %arg7: memref<1x32xbf16, #tpu.memory_space<vmem>>, %arg8: memref<1x32xbf16, #tpu.memory_space<vmem>>, %arg9: memref<16x32xbf16, #tpu.memory_space<vmem>>, %arg10: memref<16x32xf32, #tpu.memory_space<vmem>>) attributes {dimension_semantics = [#tpu.dimension_semantics<parallel>, #tpu.dimension_semantics<arbitrary>], iteration_bounds = array<i64: 1, 1>, scalar_prefetch = 0 : i64, scratch_operands = 1 : i64, tpu.core_type = #tpu.core_type<tc>, window_params = [{transform_indices = @transform_0, window_bounds = array<i64: 16, 32>}, {transform_indices = @transform_1, window_bounds = array<i64: 32, 64>}, {transform_indices = @transform_2, window_bounds = array<i64: 1, 64>}, {transform_indices = @transform_3, window_bounds = array<i64: 64, 32>}, {pipeline_mode = #tpu.pipeline_mode<synchronous>, transform_indices = @transform_4, window_bounds = array<i64: 1, 32>}, {pipeline_mode = #tpu.pipeline_mode<synchronous>, transform_indices = @transform_5, window_bounds = array<i64: 1, 32>}, {pipeline_mode = #tpu.pipeline_mode<synchronous>, transform_indices = @transform_6, window_bounds = array<i64: 1, 32>}, {transform_indices = @transform_7, window_bounds = array<i64: 16, 32>}]} {
    %c0_i32 = arith.constant 0 : i32
    %0 = arith.cmpi eq, %arg1, %c0_i32 : i32
    %1 = arith.extui %0 : i1 to i32
    %c0_i32_0 = arith.constant 0 : i32
    %2 = arith.cmpi ne, %1, %c0_i32_0 : i32
    scf.if %2 {
      %c0_16 = arith.constant 0 : index
      %c0_17 = arith.constant 0 : index
      %21 = vector.load %arg2[%c0_16, %c0_17] : memref<16x32xbf16, #tpu.memory_space<vmem>>, vector<16x32xbf16>
      %22 = arith.extf %21 : vector<16x32xbf16> to vector<16x32xf32>
      %c0_18 = arith.constant 0 : index
      %c0_19 = arith.constant 0 : index
      %23 = vector.load %arg6[%c0_18, %c0_19] : memref<1x32xbf16, #tpu.memory_space<vmem>>, vector<1x32xbf16>
      %24 = arith.extf %23 : vector<1x32xbf16> to vector<1x32xf32>
      %25 = vector.broadcast %24 : vector<1x32xf32> to vector<16x32xf32>
      %26 = arith.addf %22, %25 : vector<16x32xf32>
      %c0_20 = arith.constant 0 : index
      %c0_21 = arith.constant 0 : index
      %27 = vector.load %arg10[%c0_20, %c0_21] : memref<16x32xf32, #tpu.memory_space<vmem>>, vector<16x32xf32>
      tpu.vector_store %arg10[%c0_20, %c0_21], %26 {strides = array<i32>} : memref<16x32xf32, #tpu.memory_space<vmem>>, vector<16x32xf32>,
    } else {
    }
    %c0 = arith.constant 0 : index
    %c0_1 = arith.constant 0 : index
    %3 = vector.load %arg2[%c0, %c0_1] : memref<16x32xbf16, #tpu.memory_space<vmem>>, vector<16x32xbf16>
    %c0_2 = arith.constant 0 : index
    %c0_3 = arith.constant 0 : index
    %4 = vector.load %arg3[%c0_2, %c0_3] : memref<32x64xbf16, #tpu.memory_space<vmem>>, vector<32x64xbf16>
    %cst = arith.constant dense<0.000000e+00> : vector<16x64xf32>
    %5 = tpu.matmul %3, %4, %cst {dimension_numbers = #tpu.dot_dimension_numbers<[1], [0], [0], [1], [0, 0, 1, 1], [], []>} : vector<16x32xbf16>, vector<32x64xbf16>, vector<16x64xf32> -> vector<16x64xf32>
    %c0_4 = arith.constant 0 : index
    %c0_5 = arith.constant 0 : index
    %6 = vector.load %arg4[%c0_4, %c0_5] : memref<1x64xbf16, #tpu.memory_space<vmem>>, vector<1x64xbf16>
    %7 = arith.extf %6 : vector<1x64xbf16> to vector<1x64xf32>
    %8 = vector.broadcast %7 : vector<1x64xf32> to vector<16x64xf32>
    %9 = arith.addf %5, %8 : vector<16x64xf32>
    %cst_6 = arith.constant 0.000000e+00 : f32
    %10 = vector.broadcast %cst_6 : f32 to vector<16x64xf32>
    %11 = arith.maximumf %9, %10 : vector<16x64xf32>
    %c0_7 = arith.constant 0 : index
    %c0_8 = arith.constant 0 : index
    %12 = vector.load %arg10[%c0_7, %c0_8] : memref<16x32xf32, #tpu.memory_space<vmem>>, vector<16x32xf32>
    %13 = arith.truncf %11 : vector<16x64xf32> to vector<16x64xbf16>
    %c0_9 = arith.constant 0 : index
    %c0_10 = arith.constant 0 : index
    %14 = vector.load %arg5[%c0_9, %c0_10] : memref<64x32xbf16, #tpu.memory_space<vmem>>, vector<64x32xbf16>
    %cst_11 = arith.constant dense<0.000000e+00> : vector<16x32xf32>
    %15 = tpu.matmul %13, %14, %cst_11 {dimension_numbers = #tpu.dot_dimension_numbers<[1], [0], [0], [1], [0, 0, 1, 1], [], []>} : vector<16x64xbf16>, vector<64x32xbf16>, vector<16x32xf32> -> vector<16x32xf32>
    %16 = arith.addf %12, %15 : vector<16x32xf32>
    %c0_12 = arith.constant 0 : index
    %c0_13 = arith.constant 0 : index
    %17 = vector.load %arg10[%c0_12, %c0_13] : memref<16x32xf32, #tpu.memory_space<vmem>>, vector<16x32xf32>
    tpu.vector_store %arg10[%c0_12, %c0_13], %16 {strides = array<i32>} : memref<16x32xf32, #tpu.memory_space<vmem>>, vector<16x32xf32>,
    %c0_i32_14 = arith.constant 0 : i32
    %18 = arith.cmpi eq, %arg1, %c0_i32_14 : i32
    %19 = arith.extui %18 : i1 to i32
    %c0_i32_15 = arith.constant 0 : i32
    %20 = arith.cmpi ne, %19, %c0_i32_15 : i32
    scf.if %20 {
      %c0_16 = arith.constant 0 : index
      %c0_17 = arith.constant 0 : index
      %21 = vector.load %arg10[%c0_16, %c0_17] : memref<16x32xf32, #tpu.memory_space<vmem>>, vector<16x32xf32>
      %c0_18 = arith.constant 0 : index
      %c0_19 = arith.constant 0 : index
      %22 = vector.load %arg7[%c0_18, %c0_19] : memref<1x32xbf16, #tpu.memory_space<vmem>>, vector<1x32xbf16>
      %c0_20 = arith.constant 0 : index
      %c0_21 = arith.constant 0 : index
      %23 = vector.load %arg8[%c0_20, %c0_21] : memref<1x32xbf16, #tpu.memory_space<vmem>>, vector<1x32xbf16>
      %cst_22 = arith.constant dense<0.000000e+00> : vector<16xf32>
      %24 = vector.multi_reduction <add>, %21, %cst_22 [1] : vector<16x32xf32> to vector<16xf32>
      %25 = vector.shape_cast %24 : vector<16xf32> to vector<16x1xf32>
      %cst_23 = arith.constant 3.200000e+01 : f32
      %26 = vector.broadcast %cst_23 : f32 to vector<16x1xf32>
      %27 = arith.divf %25, %26 : vector<16x1xf32>
      %28 = vector.broadcast %27 : vector<16x1xf32> to vector<16x32xf32>
      %29 = arith.subf %21, %28 : vector<16x32xf32>
      %30 = arith.mulf %29, %29 : vector<16x32xf32>
      %cst_24 = arith.constant dense<0.000000e+00> : vector<16xf32>
      %31 = vector.multi_reduction <add>, %30, %cst_24 [1] : vector<16x32xf32> to vector<16xf32>
      %32 = vector.shape_cast %31 : vector<16xf32> to vector<16x1xf32>
      %cst_25 = arith.constant 3.200000e+01 : f32
      %33 = vector.broadcast %cst_25 : f32 to vector<16x1xf32>
      %34 = arith.divf %32, %33 : vector<16x1xf32>
      %35 = vector.broadcast %27 : vector<16x1xf32> to vector<16x32xf32>
      %36 = arith.subf %21, %35 : vector<16x32xf32>
      %cst_26 = arith.constant 9.99999974E-6 : f32
      %37 = vector.broadcast %cst_26 : f32 to vector<16x1xf32>
      %38 = arith.addf %34, %37 : vector<16x1xf32>
      %39 = math.rsqrt %38 : vector<16x1xf32>
      %40 = vector.broadcast %39 : vector<16x1xf32> to vector<16x32xf32>
      %41 = arith.mulf %36, %40 : vector<16x32xf32>
      %42 = arith.extf %22 : vector<1x32xbf16> to vector<1x32xf32>
      %43 = vector.broadcast %42 : vector<1x32xf32> to vector<16x32xf32>
      %44 = arith.mulf %41, %43 : vector<16x32xf32>
      %45 = arith.extf %23 : vector<1x32xbf16> to vector<1x32xf32>
      %46 = vector.broadcast %45 : vector<1x32xf32> to vector<16x32xf32>
      %47 = arith.addf %44, %46 : vector<16x32xf32>
      %48 = arith.truncf %47 : vector<16x32xf32> to vector<16x32xbf16>
      %c0_27 = arith.constant 0 : index
      %c0_28 = arith.constant 0 : index
      %49 = vector.load %arg9[%c0_27, %c0_28] : memref<16x32xbf16, #tpu.memory_space<vmem>>, vector<16x32xbf16>
      tpu.vector_store %arg9[%c0_27, %c0_28], %48 {strides = array<i32>} : memref<16x32xbf16, #tpu.memory_space<vmem>>, vector<16x32xbf16>,
    } else {
    }
    return
  }
  func.func @transform_0(%arg0: i32, %arg1: i32) -> (i32, i32) {
    %c0_i32 = arith.constant 0 : i32
    %c0_i32_0 = arith.constant 0 : i32
    return %arg0, %c0_i32 : i32, i32
  }
  func.func @transform_1(%arg0: i32, %arg1: i32) -> (i32, i32) {
    %c0_i32 = arith.constant 0 : i32
    %c0_i32_0 = arith.constant 0 : i32
    return %c0_i32, %arg1 : i32, i32
  }
  func.func @transform_2(%arg0: i32, %arg1: i32) -> (i32, i32) {
    %c0_i32 = arith.constant 0 : i32
    %c0_i32_0 = arith.constant 0 : i32
    return %c0_i32, %arg1 : i32, i32
  }
  func.func @transform_3(%arg0: i32, %arg1: i32) -> (i32, i32) {
    %c0_i32 = arith.constant 0 : i32
    %c0_i32_0 = arith.constant 0 : i32
    return %arg1, %c0_i32 : i32, i32
  }
  func.func @transform_4(%arg0: i32, %arg1: i32) -> (i32, i32) {
    %c0_i32 = arith.constant 0 : i32
    %c0_i32_0 = arith.constant 0 : i32
    %c0_i32_1 = arith.constant 0 : i32
    return %c0_i32, %c0_i32_0 : i32, i32
  }
  func.func @transform_5(%arg0: i32, %arg1: i32) -> (i32, i32) {
    %c0_i32 = arith.constant 0 : i32
    %c0_i32_0 = arith.constant 0 : i32
    %c0_i32_1 = arith.constant 0 : i32
    return %c0_i32, %c0_i32_0 : i32, i32
  }
  func.func @transform_6(%arg0: i32, %arg1: i32) -> (i32, i32) {
    %c0_i32 = arith.constant 0 : i32
    %c0_i32_0 = arith.constant 0 : i32
    %c0_i32_1 = arith.constant 0 : i32
    return %c0_i32, %c0_i32_0 : i32, i32
  }
  func.func @transform_7(%arg0: i32, %arg1: i32) -> (i32, i32) {
    %c0_i32 = arith.constant 0 : i32
    %c0_i32_0 = arith.constant 0 : i32
    return %arg0, %c0_i32 : i32, i32
  }
}

module attributes {stable_mosaic.version = 11 : i64} {
  func.func @_ln_kernel(%arg0: i32, %arg1: memref<16x32xbf16, #tpu.memory_space<vmem>>, %arg2: memref<1x32xbf16, #tpu.memory_space<vmem>>, %arg3: memref<1x32xbf16, #tpu.memory_space<vmem>>, %arg4: memref<16x32xf32, #tpu.memory_space<vmem>>) attributes {dimension_semantics = [#tpu.dimension_semantics<parallel>], iteration_bounds = array<i64: 1>, scalar_prefetch = 0 : i64, scratch_operands = 0 : i64, tpu.core_type = #tpu.core_type<tc>, window_params = [{transform_indices = @transform_0, window_bounds = array<i64: 16, 32>}, {pipeline_mode = #tpu.pipeline_mode<synchronous>, transform_indices = @transform_1, window_bounds = array<i64: 1, 32>}, {pipeline_mode = #tpu.pipeline_mode<synchronous>, transform_indices = @transform_2, window_bounds = array<i64: 1, 32>}, {transform_indices = @transform_3, window_bounds = array<i64: 16, 32>}]} {
    %c0 = arith.constant 0 : index
    %c0_0 = arith.constant 0 : index
    %0 = vector.load %arg1[%c0, %c0_0] : memref<16x32xbf16, #tpu.memory_space<vmem>>, vector<16x32xbf16>
    %1 = arith.extf %0 : vector<16x32xbf16> to vector<16x32xf32>
    %c0_1 = arith.constant 0 : index
    %c0_2 = arith.constant 0 : index
    %2 = vector.load %arg2[%c0_1, %c0_2] : memref<1x32xbf16, #tpu.memory_space<vmem>>, vector<1x32xbf16>
    %c0_3 = arith.constant 0 : index
    %c0_4 = arith.constant 0 : index
    %3 = vector.load %arg3[%c0_3, %c0_4] : memref<1x32xbf16, #tpu.memory_space<vmem>>, vector<1x32xbf16>
    %cst = arith.constant dense<0.000000e+00> : vector<16xf32>
    %4 = vector.multi_reduction <add>, %1, %cst [1] : vector<16x32xf32> to vector<16xf32>
    %5 = vector.shape_cast %4 : vector<16xf32> to vector<16x1xf32>
    %cst_5 = arith.constant 3.200000e+01 : f32
    %6 = vector.broadcast %cst_5 : f32 to vector<16x1xf32>
    %7 = arith.divf %5, %6 : vector<16x1xf32>
    %8 = vector.broadcast %7 : vector<16x1xf32> to vector<16x32xf32>
    %9 = arith.subf %1, %8 : vector<16x32xf32>
    %10 = arith.mulf %9, %9 : vector<16x32xf32>
    %cst_6 = arith.constant dense<0.000000e+00> : vector<16xf32>
    %11 = vector.multi_reduction <add>, %10, %cst_6 [1] : vector<16x32xf32> to vector<16xf32>
    %12 = vector.shape_cast %11 : vector<16xf32> to vector<16x1xf32>
    %cst_7 = arith.constant 3.200000e+01 : f32
    %13 = vector.broadcast %cst_7 : f32 to vector<16x1xf32>
    %14 = arith.divf %12, %13 : vector<16x1xf32>
    %15 = vector.broadcast %7 : vector<16x1xf32> to vector<16x32xf32>
    %16 = arith.subf %1, %15 : vector<16x32xf32>
    %cst_8 = arith.constant 9.99999974E-6 : f32
    %17 = vector.broadcast %cst_8 : f32 to vector<16x1xf32>
    %18 = arith.addf %14, %17 : vector<16x1xf32>
    %19 = math.rsqrt %18 : vector<16x1xf32>
    %20 = vector.broadcast %19 : vector<16x1xf32> to vector<16x32xf32>
    %21 = arith.mulf %16, %20 : vector<16x32xf32>
    %22 = arith.extf %2 : vector<1x32xbf16> to vector<1x32xf32>
    %23 = vector.broadcast %22 : vector<1x32xf32> to vector<16x32xf32>
    %24 = arith.mulf %21, %23 : vector<16x32xf32>
    %25 = arith.extf %3 : vector<1x32xbf16> to vector<1x32xf32>
    %26 = vector.broadcast %25 : vector<1x32xf32> to vector<16x32xf32>
    %27 = arith.addf %24, %26 : vector<16x32xf32>
    %c0_9 = arith.constant 0 : index
    %c0_10 = arith.constant 0 : index
    %28 = vector.load %arg4[%c0_9, %c0_10] : memref<16x32xf32, #tpu.memory_space<vmem>>, vector<16x32xf32>
    tpu.vector_store %arg4[%c0_9, %c0_10], %27 {strides = array<i32>} : memref<16x32xf32, #tpu.memory_space<vmem>>, vector<16x32xf32>,
    return
  }
  func.func @transform_0(%arg0: i32) -> (i32, i32) {
    %c0_i32 = arith.constant 0 : i32
    %c0_i32_0 = arith.constant 0 : i32
    return %arg0, %c0_i32 : i32, i32
  }
  func.func @transform_1(%arg0: i32) -> (i32, i32) {
    %c0_i32 = arith.constant 0 : i32
    %c0_i32_0 = arith.constant 0 : i32
    %c0_i32_1 = arith.constant 0 : i32
    return %c0_i32, %c0_i32_0 : i32, i32
  }
  func.func @transform_2(%arg0: i32) -> (i32, i32) {
    %c0_i32 = arith.constant 0 : i32
    %c0_i32_0 = arith.constant 0 : i32
    %c0_i32_1 = arith.constant 0 : i32
    return %c0_i32, %c0_i32_0 : i32, i32
  }
  func.func @transform_3(%arg0: i32) -> (i32, i32) {
    %c0_i32 = arith.constant 0 : i32
    %c0_i32_0 = arith.constant 0 : i32
    return %arg0, %c0_i32 : i32, i32
  }
}

</mosaic_0001>

<llo_original>
// kernel: transformer_decoder.13
$region0: #{transformer_decoder.13}
  #allocation0 [shape = 'u32[]', space=smem, size = 0x4, offset = 0x4, fixed_abs, tag = 'smem constant byte address 0x4 - core index']
  #allocation1 [shape = 'u32[144,128]{1,0:T(1,128)}', space=vmem, size = 0x12000, scoped, tag = 'internal scratch']
  %s0 = inlined_call_operand.vmem [shape: bf16[16,32], index: 0, kind: input, shape index: {}]
  %s1 = inlined_call_operand.vmem [shape: bf16[1,32], index: 1, kind: input, shape index: {}]
  %s2 = inlined_call_operand.vmem [shape: bf16[1,32], index: 2, kind: input, shape index: {}]
  %s3 = inlined_call_operand.hbm [shape: f32[16,32], index: 3, kind: output, shape index: {}]
  %s4 = sld [smem:[#allocation0]]
  $region22: #{transformer_decoder.13} parent=0
    _
  %s6 = ssub.s32 1, %s4
  %s7 = scalar_select 0, %s6, %s4
  $region1: #{transformer_decoder.13} parent=0
    #allocation2 [shape = 'u8[8192]{0}', space=vmem, size = 0x2000, scoped, tag = 'output window, operand 0, single buffered']
    #allocation3 [shape = 's32[1]{0}', space=sflag, size = 0x4, scoped, tag = 'scoped memory for transformer_decoder.13']
    %8 = vsyncpa [#allocation3], 0
    // Predicated region
    $region2: #{transformer_decoder.13} parent=1 // pred_check
      _
    $region3: #{transformer_decoder.13} parent=1 // pred_check_branch
      %10 = sbr.rel (0) target = $region5
    $region4: #{transformer_decoder.13} parent=1 // pred_region
      _
    $region5: #{transformer_decoder.13} parent=1 // pred_fallthru
      _
    // Predicated region
    $region6: #{transformer_decoder.13} parent=1 // pred_check
      _
    $region7: #{transformer_decoder.13} parent=1 // pred_check_branch
      %12 = sbr.rel (0) target = $region9
    $region8: #{transformer_decoder.13} parent=1 // pred_region
      _
    $region9: #{transformer_decoder.13} parent=1 // pred_fallthru
      _
    // Predicated region
    $region10: #{transformer_decoder.13} parent=1 // pred_check
      _
    $region11: #{transformer_decoder.13} parent=1 // pred_check_branch
      %14 = sbr.rel (0) target = $region13
    $region12: #{transformer_decoder.13} parent=1 // pred_region
      _
    $region13: #{transformer_decoder.13} parent=1 // pred_fallthru
      _
    %v15 = vld [vmem:[%s0] sm:$0xf]
    %v16 = vld [vmem:[%s0 + $0x4] sm:$0xf]
    %v17 = vunpack.c.l.bf16 %v15
    %v18 = vunpack.c.l.bf16 %v16
    %v19 = vld [vmem:[%s1] sm:$0x1]
    %v20 = vld [vmem:[%s2] sm:$0x1]
    %vm21 = vcmask 261120
    %v22 = vsel %vm21, %v17, 0.0
    %23 = vadd.xlane.f32.xlu0 %v22
    %v24 = vpop.xlane.xlu0 %23
    %v25 = vsel %vm21, %v18, 0.0
    %26 = vadd.xlane.f32.xlu0 %v25
    %v27 = vpop.xlane.xlu0 %26
    %v28 = vrcp.pop 32.0
    %v29 = vmul.f32 %v24, %v28
    %v30 = vmul.f32 %v27, %v28
    %v31 = vsub.f32 %v17, %v29
    %v32 = vsub.f32 %v18, %v30
    %v33 = vmul.f32 %v31, %v31
    %v34 = vmul.f32 %v32, %v32
    %v35 = vsel %vm21, %v33, 0.0
    %36 = vadd.xlane.f32.xlu0 %v35
    %v37 = vpop.xlane.xlu0 %36
    %v38 = vsel %vm21, %v34, 0.0
    %39 = vadd.xlane.f32.xlu0 %v38
    %v40 = vpop.xlane.xlu0 %39
    %v41 = vmul.f32 %v37, %v28
    %v42 = vmul.f32 %v40, %v28
    %v43 = vadd.f32 %v41, 1e-05
    %v44 = vadd.f32 %v42, 1e-05
    %v45 = vrsqrt.pop %v43
    %v46 = vrsqrt.pop %v44
    %v47 = vmul.f32 %v31, %v45
    %v48 = vmul.f32 %v32, %v46
    %v49 = vunpack.c.l.bf16 %v19
    %v50 = vlaneseq
    %v51 = vshrl.u32 %v50, 7
    %v52 = vsub.s32 0, %v51
    %v53 = vrot.slane %v49, %v52
    %v54 = vmul.f32 %v47, %v53
    %v55 = vmul.f32 %v48, %v53
    %v56 = vunpack.c.l.bf16 %v20
    %v57 = vlaneseq
    %v58 = vshrl.u32 %v57, 7
    %v59 = vsub.s32 0, %v58
    %v60 = vrot.slane %v56, %v59
    %v61 = vadd.f32 %v54, %v60
    %v62 = vadd.f32 %v55, %v60
    %63 = vst.msk [vmem:[#allocation2] sm:$0xff] %vm21, %v61
    %64 = vst.msk [vmem:[#allocation2 + $0x8] sm:$0xff] %vm21, %v62
    // Predicated region
    $region14: #{transformer_decoder.13} parent=1 // pred_check
      _
    $region15: #{transformer_decoder.13} parent=1 // pred_check_branch
      %66 = sbr.rel (0) target = $region17
    $region16: #{transformer_decoder.13} parent=1 // pred_region
      %s68 = ssub.s32 256, 256
      %69 = vsyncadd [#allocation3], %s68
      %s70 = sshll.u32 [#allocation2], 4
      %s71 = int_to_ptr.vmem [resolvable:$true] %s70
      %76 = dma.vmem_to_hbm [thread:$0]  %s71, 256, %s3, [#allocation3], 128, 128, 8
    $region17: #{transformer_decoder.13} parent=1 // pred_fallthru
      _
    // Predicated region
    $region18: #{transformer_decoder.13} parent=1 // pred_check
      _
    $region19: #{transformer_decoder.13} parent=1 // pred_check_branch
      %78 = sbr.rel (0) target = $region21
    $region20: #{transformer_decoder.13} parent=1 // pred_region
      %79 = dma.done [#allocation3], 256
    $region21: #{transformer_decoder.13} parent=1 // pred_fallthru
      _
    %80 = vsyncpa [#allocation3], 1

// kernel: transformer_decoder.9
$region0: #{transformer_decoder.9}
  #allocation0 [shape = 'u32[]', space=smem, size = 0x4, offset = 0x4, fixed_abs, tag = 'smem constant byte address 0x4 - core index']
  #allocation1 [shape = 'u32[144,128]{1,0:T(1,128)}', space=vmem, size = 0x12000, scoped, tag = 'internal scratch']
  #allocation2 [shape = 'f32[16,32]{1,0:T(8,128)}', space=vmem, size = 0x2000, scoped, tag = 'scratch operand']
  %s0 = inlined_call_operand.vmem [shape: bf16[16,32], index: 0, kind: input, shape index: {}]
  %s1 = inlined_call_operand.vmem [shape: bf16[32,64], index: 1, kind: input, shape index: {}]
  %s2 = inlined_call_operand.vmem [shape: bf16[1,64], index: 2, kind: input, shape index: {}]
  %s3 = inlined_call_operand.vmem [shape: bf16[64,32], index: 3, kind: input, shape index: {}]
  %s4 = inlined_call_operand.vmem [shape: bf16[1,32], index: 4, kind: input, shape index: {}]
  %s5 = inlined_call_operand.vmem [shape: bf16[1,32], index: 5, kind: input, shape index: {}]
  %s6 = inlined_call_operand.vmem [shape: bf16[1,32], index: 6, kind: input, shape index: {}]
  %s7 = inlined_call_operand.vmem [shape: bf16[16,32], index: 7, kind: output, shape index: {}]
  %s8 = sld [smem:[#allocation0]]
  $region46: #{transformer_decoder.9} parent=0
    _
  %s10 = ssub.s32 1, %s8
  %s11 = scalar_select 0, %s10, %s8
  // Predicated region
  $region2: #{transformer_decoder.9} parent=0 // pred_check
    _
  $region3: #{transformer_decoder.9} parent=0 // pred_check_branch
    %13 = sbr.rel (0) target = $region5
  $region4: #{transformer_decoder.9} parent=0 // pred_region
    _
  $region5: #{transformer_decoder.9} parent=0 // pred_fallthru
    _
  // Predicated region
  $region6: #{transformer_decoder.9} parent=0 // pred_check
    _
  $region7: #{transformer_decoder.9} parent=0 // pred_check_branch
    %15 = sbr.rel (0) target = $region9
  $region8: #{transformer_decoder.9} parent=0 // pred_region
    _
  $region9: #{transformer_decoder.9} parent=0 // pred_fallthru
    _
  // Predicated region
  $region10: #{transformer_decoder.9} parent=0 // pred_check
    _
  $region11: #{transformer_decoder.9} parent=0 // pred_check_branch
    %17 = sbr.rel (0) target = $region13
  $region12: #{transformer_decoder.9} parent=0 // pred_region
    _
  $region13: #{transformer_decoder.9} parent=0 // pred_fallthru
    _
  // Predicated region
  $region14: #{transformer_decoder.9} parent=0 // pred_check
    _
  $region15: #{transformer_decoder.9} parent=0 // pred_check_branch
    %19 = sbr.rel (0) target = $region17
  $region16: #{transformer_decoder.9} parent=0 // pred_region
    _
  $region17: #{transformer_decoder.9} parent=0 // pred_fallthru
    _
  // Predicated region
  $region18: #{transformer_decoder.9} parent=0 // pred_check
    _
  $region19: #{transformer_decoder.9} parent=0 // pred_check_branch
    %21 = sbr.rel (0) target = $region21
  $region20: #{transformer_decoder.9} parent=0 // pred_region
    _
  $region21: #{transformer_decoder.9} parent=0 // pred_fallthru
    _
  // Predicated region
  $region22: #{transformer_decoder.9} parent=0 // pred_check
    _
  $region23: #{transformer_decoder.9} parent=0 // pred_check_branch
    %23 = sbr.rel (0) target = $region25
  $region24: #{transformer_decoder.9} parent=0 // pred_region
    _
  $region25: #{transformer_decoder.9} parent=0 // pred_fallthru
    _
  // Predicated region
  $region26: #{transformer_decoder.9} parent=0 // pred_check
    _
  $region27: #{transformer_decoder.9} parent=0 // pred_check_branch
    %25 = sbr.rel (0) target = $region29
  $region28: #{transformer_decoder.9} parent=0 // pred_region
    _
  $region29: #{transformer_decoder.9} parent=0 // pred_fallthru
    _
  %p27 = scmp.eq.s32.totalorder 0, 0
  // Predicated region
  $region30: #{transformer_decoder.9} parent=0 // pred_check
    %p28 = pneg %p27
  $region31: #{transformer_decoder.9} parent=0 // pred_check_branch
    %30 = sbr.rel (%p28) target = $region33
  $region32: #{transformer_decoder.9} parent=0 // pred_region
    %v31 = vld [vmem:[%s0] sm:$0xf]
    %v32 = vld [vmem:[%s0 + $0x4] sm:$0xf]
    %v33 = vunpack.c.l.bf16 %v31
    %v34 = vunpack.c.l.bf16 %v32
    %v35 = vld [vmem:[%s4] sm:$0x1]
    %v36 = vunpack.c.l.bf16 %v35
    %v37 = vlaneseq
    %v38 = vshrl.u32 %v37, 7
    %v39 = vsub.s32 0, %v38
    %v40 = vrot.slane %v36, %v39
    %v41 = vadd.f32 %v33, %v40
    %v42 = vadd.f32 %v34, %v40
    %vm43 = vcmask 261120
    %44 = vst.msk [vmem:[#allocation2] sm:$0xff] %vm43, %v41
    %45 = vst.msk [vmem:[#allocation2 + $0x8] sm:$0xff] %vm43, %v42
  $region33: #{transformer_decoder.9} parent=0 // pred_fallthru
    _
  %v46 = vld [vmem:[%s0] sm:$0xf]
  %v47 = vld [vmem:[%s0 + $0x4] sm:$0xf]
  %v48 = vld [vmem:[%s1] sm:$0xf]
  %v49 = vld [vmem:[%s1 + $0x4] sm:$0xf]
  %v50 = vld [vmem:[%s1 + $0x8] sm:$0xf]
  %v51 = vld [vmem:[%s1 + $0xc] sm:$0xf]
  %v52 = vld [vmem:[%s2] sm:$0x1]
  %v53 = vunpack.c.l.bf16 %v52
  %v54 = vlaneseq
  %v55 = vshrl.u32 %v54, 7
  %v56 = vsub.s32 0, %v55
  %v57 = vrot.slane %v53, %v56
  %v60 = vunpack.c.l.b16 %v46
  %v61 = vunpack.c.l.b16 %v47
  %v62 = vpack.c.b16 %v61, %v60
  %v67 = vunpack.c.l.b16 %v48
  %v68 = vunpack.c.l.b16 %v49
  %v69 = vunpack.c.l.b16 %v50
  %v70 = vunpack.c.l.b16 %v51
  %v71 = vpack.c.b16 %v68, %v67
  %v72 = vpack.c.b16 %v70, %v69
  %vm75 = vcmask 261120
  %v77 = vsel %vm75, %v62, 0
  %79 = vmatprep.subr.bf16.mxu0 0
  %80 = vmatpush1.bf16.msra.mxu0 0
  %81 = vmatprep.subr.bf16.mxu0 0
  %82 = vmatpush1.bf16.msra.mxu0 0
  %83 = vmatprep.subr.bf16.mxu0 0
  %84 = vmatpush1.bf16.msra.mxu0 0
  %85 = vmatprep.subr.bf16.mxu0 0
  %86 = vmatpush1.bf16.msra.mxu0 0
  %87 = vmatprep.subr.bf16.mxu0 0
  %88 = vmatpush1.bf16.msra.mxu0 0
  %89 = vmatprep.subr.bf16.mxu0 0
  %90 = vmatpush1.bf16.msra.mxu0 0
  %91 = vmatprep.subr.bf16.mxu0 0
  %92 = vmatpush1.bf16.msra.mxu0 %v72
  %93 = vmatprep.subr.bf16.mxu0 0
  %94 = vmatpush1.bf16.msra.mxu0 %v71
  %95 = vmatprep.subr.bf16.mxu0 0
  %96 = vmatpush2.bf16.msra.mxu0 0
  %97 = vmatprep.subr.bf16.mxu0 0
  %98 = vmatpush2.bf16.msra.mxu0 0
  %99 = vmatprep.subr.bf16.mxu0 0
  %100 = vmatpush2.bf16.msra.mxu0 0
  %101 = vmatprep.subr.bf16.mxu0 0
  %102 = vmatpush2.bf16.msra.mxu0 0
  %103 = vmatprep.subr.bf16.mxu0 0
  %104 = vmatpush2.bf16.msra.mxu0 0
  %105 = vmatprep.subr.bf16.mxu0 0
  %106 = vmatpush2.bf16.msra.mxu0 0
  %107 = vmatprep.subr.bf16.mxu0 0
  %108 = vmatpush2.bf16.msra.mxu0 0
  %109 = vmatprep.subr.bf16.mxu0 0
  %110 = vmatpush2.bf16.msra.mxu0 0
  %111 = vmatprep.mubr.bf16.mxu0 0
  %112 = vmatmul.mubr.bf16.gmra.mxu0 %v77
  %v113 = vpop.f32.mrf.mxu0
  %v114 = vadd.f32 %v57, %v113
  %v115 = vpop.f32.mrf.mxu0
  %v116 = vpop.f32.mrf.mxu0
  %v117 = vadd.f32 %v57, %v116
  %v118 = vpop.f32.mrf.mxu0
  %119 = vdwg.mxu0
  %v120 = vmax.f32 %v114, 0.0
  %v121 = vmax.f32 %v117, 0.0
  %v122 = vld [vmem:[#allocation2] sm:$0xff]
  %v123 = vld [vmem:[#allocation2 + $0x8] sm:$0xff]
  %v124 = vpack.c.bf16 %v121, %v120
  %v125 = vld [vmem:[%s3] sm:$0xf]
  %v126 = vld [vmem:[%s3 + $0x4] sm:$0xf]
  %v127 = vld [vmem:[%s3 + $0x8] sm:$0xf]
  %v128 = vld [vmem:[%s3 + $0xc] sm:$0xf]
  %v129 = vld [vmem:[%s3 + $0x10] sm:$0xf]
  %v130 = vld [vmem:[%s3 + $0x14] sm:$0xf]
  %v131 = vld [vmem:[%s3 + $0x18] sm:$0xf]
  %v132 = vld [vmem:[%s3 + $0x1c] sm:$0xf]
  %v141 = vunpack.c.l.b16 %v125
  %v142 = vunpack.c.l.b16 %v126
  %v143 = vunpack.c.l.b16 %v127
  %v144 = vunpack.c.l.b16 %v128
  %v145 = vunpack.c.l.b16 %v129
  %v146 = vunpack.c.l.b16 %v130
  %v147 = vunpack.c.l.b16 %v131
  %v148 = vunpack.c.l.b16 %v132
  %v149 = vpack.c.b16 %v142, %v141
  %v150 = vpack.c.b16 %v144, %v143
  %v151 = vpack.c.b16 %v146, %v145
  %v152 = vpack.c.b16 %v148, %v147
  %vm157 = vcmask 523264
  %v159 = vsel %vm157, %v124, 0
  %161 = vmatprep.subr.bf16.mxu0 0
  %162 = vmatpush1.bf16.msra.mxu0 0
  %163 = vmatprep.subr.bf16.mxu0 0
  %164 = vmatpush1.bf16.msra.mxu0 0
  %165 = vmatprep.subr.bf16.mxu0 0
  %166 = vmatpush1.bf16.msra.mxu0 0
  %167 = vmatprep.subr.bf16.mxu0 0
  %168 = vmatpush1.bf16.msra.mxu0 0
  %169 = vmatprep.subr.bf16.mxu0 0
  %170 = vmatpush1.bf16.msra.mxu0 %v152
  %171 = vmatprep.subr.bf16.mxu0 0
  %172 = vmatpush1.bf16.msra.mxu0 %v151
  %173 = vmatprep.subr.bf16.mxu0 0
  %174 = vmatpush1.bf16.msra.mxu0 %v150
  %175 = vmatprep.subr.bf16.mxu0 0
  %176 = vmatpush1.bf16.msra.mxu0 %v149
  %177 = vmatprep.subr.bf16.mxu0 0
  %178 = vmatpush2.bf16.msra.mxu0 0
  %179 = vmatprep.subr.bf16.mxu0 0
  %180 = vmatpush2.bf16.msra.mxu0 0
  %181 = vmatprep.subr.bf16.mxu0 0
  %182 = vmatpush2.bf16.msra.mxu0 0
  %183 = vmatprep.subr.bf16.mxu0 0
  %184 = vmatpush2.bf16.msra.mxu0 0
  %185 = vmatprep.subr.bf16.mxu0 0
  %186 = vmatpush2.bf16.msra.mxu0 0
  %187 = vmatprep.subr.bf16.mxu0 0
  %188 = vmatpush2.bf16.msra.mxu0 0
  %189 = vmatprep.subr.bf16.mxu0 0
  %190 = vmatpush2.bf16.msra.mxu0 0
  %191 = vmatprep.subr.bf16.mxu0 0
  %192 = vmatpush2.bf16.msra.mxu0 0
  %193 = vmatprep.mubr.bf16.mxu0 0
  %194 = vmatmul.mubr.bf16.gmra.mxu0 %v159
  %v195 = vpop.f32.mrf.mxu0
  %v196 = vadd.f32 0.0, %v195
  %v197 = vpop.f32.mrf.mxu0
  %v198 = vpop.f32.mrf.mxu0
  %v199 = vadd.f32 0.0, %v198
  %v200 = vpop.f32.mrf.mxu0
  %201 = vdwg.mxu0
  %v202 = vadd.f32 %v122, %v196
  %v203 = vadd.f32 %v123, %v199
  %204 = vst.msk [vmem:[#allocation2] sm:$0xff] %vm75, %v202
  %205 = vst.msk [vmem:[#allocation2 + $0x8] sm:$0xff] %vm75, %v203
  // Predicated region
  $region34: #{transformer_decoder.9} parent=0 // pred_check
    %p206 = pneg %p27
  $region35: #{transformer_decoder.9} parent=0 // pred_check_branch
    %208 = sbr.rel (%p206) target = $region37
  $region36: #{transformer_decoder.9} parent=0 // pred_region
    %v209 = vld [vmem:[#allocation2] sm:$0xff]
    %v210 = vld [vmem:[#allocation2 + $0x8] sm:$0xff]
    %v211 = vld [vmem:[%s5] sm:$0x1]
    %v212 = vld [vmem:[%s6] sm:$0x1]
    %v213 = vsel %vm75, %v209, 0.0
    %214 = vadd.xlane.f32.xlu0 %v213
    %v215 = vpop.xlane.xlu0 %214
    %v216 = vsel %vm75, %v210, 0.0
    %217 = vadd.xlane.f32.xlu0 %v216
    %v218 = vpop.xlane.xlu0 %217
    %v219 = vrcp.pop 32.0
    %v220 = vmul.f32 %v215, %v219
    %v221 = vmul.f32 %v218, %v219
    %v222 = vsub.f32 %v209, %v220
    %v223 = vsub.f32 %v210, %v221
    %v224 = vmul.f32 %v222, %v222
    %v225 = vmul.f32 %v223, %v223
    %v226 = vsel %vm75, %v224, 0.0
    %227 = vadd.xlane.f32.xlu0 %v226
    %v228 = vpop.xlane.xlu0 %227
    %v229 = vsel %vm75, %v225, 0.0
    %230 = vadd.xlane.f32.xlu0 %v229
    %v231 = vpop.xlane.xlu0 %230
    %v232 = vmul.f32 %v228, %v219
    %v233 = vmul.f32 %v231, %v219
    %v234 = vadd.f32 %v232, 1e-05
    %v235 = vadd.f32 %v233, 1e-05
    %v236 = vrsqrt.pop %v234
    %v237 = vrsqrt.pop %v235
    %v238 = vmul.f32 %v222, %v236
    %v239 = vmul.f32 %v223, %v237
    %v240 = vunpack.c.l.bf16 %v211
    %v241 = vlaneseq
    %v242 = vshrl.u32 %v241, 7
    %v243 = vsub.s32 0, %v242
    %v244 = vrot.slane %v240, %v243
    %v245 = vmul.f32 %v238, %v244
    %v246 = vmul.f32 %v239, %v244
    %v247 = vunpack.c.l.bf16 %v212
    %v248 = vlaneseq
    %v249 = vshrl.u32 %v248, 7
    %v250 = vsub.s32 0, %v249
    %v251 = vrot.slane %v247, %v250
    %v252 = vadd.f32 %v245, %v251
    %v253 = vadd.f32 %v246, %v251
    %v254 = vpack.c.bf16 %v253, %v252
    %v256 = vunpack.c.l.b16 %v254
    %v257 = vunpack.c.h.b16 %v254
    %v258 = vpack.c.b16 %v256, %v256
    %v259 = vpack.c.b16 %v257, %v257
    %vm262 = vcmask 257024
    %263 = vst.msk [vmem:[%s7] sm:$0xf] %vm262, %v258
    %264 = vst.msk [vmem:[%s7 + $0x4] sm:$0xf] %vm262, %v259
  $region37: #{transformer_decoder.9} parent=0 // pred_fallthru
    _
  // Predicated region
  $region38: #{transformer_decoder.9} parent=0 // pred_check
    _
  $region39: #{transformer_decoder.9} parent=0 // pred_check_branch
    %266 = sbr.rel (0) target = $region41
  $region40: #{transformer_decoder.9} parent=0 // pred_region
    _
  $region41: #{transformer_decoder.9} parent=0 // pred_fallthru
    _
  // Predicated region
  $region42: #{transformer_decoder.9} parent=0 // pred_check
    _
  $region43: #{transformer_decoder.9} parent=0 // pred_check_branch
    %268 = sbr.rel (0) target = $region45
  $region44: #{transformer_decoder.9} parent=0 // pred_region
    _
  $region45: #{transformer_decoder.9} parent=0 // pred_fallthru
    _

// kernel: transformer_decoder.7
$region0: #{transformer_decoder.7}
  #allocation0 [shape = 'u32[]', space=smem, size = 0x4, offset = 0x4, fixed_abs, tag = 'smem constant byte address 0x4 - core index']
  #allocation1 [shape = 'u32[144,128]{1,0:T(1,128)}', space=vmem, size = 0x12000, scoped, tag = 'internal scratch']
  %s0 = inlined_call_operand.vmem [shape: bf16[2,8,32], index: 0, kind: input, shape index: {}]
  %s1 = inlined_call_operand.vmem [shape: bf16[32,96], index: 1, kind: input, shape index: {}]
  %s2 = inlined_call_operand.vmem [shape: bf16[1,96], index: 2, kind: input, shape index: {}]
  %s3 = inlined_call_operand.vmem [shape: bf16[32,32], index: 3, kind: input, shape index: {}]
  %s4 = inlined_call_operand.vmem [shape: bf16[1,32], index: 4, kind: input, shape index: {}]
  %s5 = inlined_call_operand.vmem [shape: bf16[1,32], index: 5, kind: input, shape index: {}]
  %s6 = inlined_call_operand.vmem [shape: bf16[1,32], index: 6, kind: input, shape index: {}]
  %s7 = inlined_call_operand.vmem [shape: f32[1,8,8], index: 7, kind: input, shape index: {}]
  %s8 = inlined_call_operand.vmem [shape: f32[2,1,8], index: 8, kind: input, shape index: {}]
  %s9 = inlined_call_operand.vmem [shape: bf16[2,8,32], index: 9, kind: output, shape index: {}]
  %s10 = sld [smem:[#allocation0]]
  $region69: #{transformer_decoder.7} parent=0
    _
  %s12 = ssub.s32 1, %s10
  %s13 = scalar_select 0, %s12, %s10
  loop: start=0, step=1, limit=4
  $region2: #{transformer_decoder.7} parent=0 // loop_pre_header
    _
  $region3: #{transformer_decoder.7} parent=0 // loop_header
    %s15 = sphi 0, %s19
    %p16 = scmp.ge.s32.totalorder %s15, 4
    %s25 = sphi 0, %s27
    %s28 = sphi 0, %s25
    %s29 = sphi 0, %s28
    %s45 = sphi 0, %s29
    %s49 = sphi 0, %s49
    %s51 = sphi 0, %s49
    %s52 = sphi 0, %s51
    %s66 = sphi 0, %s52
    %s70 = sphi 0, %s70
    %s72 = sphi 0, %s70
    %s73 = sphi 0, %s72
    %s87 = sphi 0, %s73
    %s91 = sphi 0, %s91
    %s93 = sphi 0, %s91
    %s94 = sphi 0, %s93
    %s108 = sphi 0, %s94
    %s112 = sphi 0, %s112
    %s114 = sphi 0, %s112
    %s115 = sphi 0, %s114
    %s129 = sphi 0, %s115
    %s133 = sphi 0, %s133
    %s135 = sphi 0, %s133
    %s136 = sphi 0, %s135
    %s150 = sphi 0, %s136
    %s154 = sphi 0, %s154
    %s156 = sphi 0, %s154
    %s157 = sphi 0, %s156
    %s171 = sphi 0, %s157
    %s175 = sphi 0, %s175
    %s177 = sphi 0, %s175
    %s178 = sphi 0, %s177
    %s192 = sphi 0, %s178
    %s198 = sphi 0, %s200
    %s201 = sphi 0, %s198
    %s202 = sphi 0, %s201
    %s218 = sphi 0, %s202
    %s224 = sphi 0, %s226
    %s227 = sphi 0, %s224
    %s228 = sphi 0, %s227
    %s244 = sphi 0, %s228
  $region4: #{transformer_decoder.7} parent=0 // loop_header_branch
    %18 = sbr.rel (%p16) target = $region8
  $region5: #{transformer_decoder.7} parent=0 // loop_body
    %s20 = ssub.s32 %s15, 1
    %s21 = ssub.s32 %s15, 2
    %s22 = sadd.s32 %s15, 1
    %s23 = ssub.s32 %s15, %s22
    %p24 = scmp.eq.s32.totalorder %s23, 0
    %s26 = sadd.s32 %s25, 1
    %s27 = scalar_select %p24, %s25, %s26
    %p30 = pneg %p24
    %p31 = scmp.eq.s32.totalorder %s15, 1
    %p32 = por %p30, %p31
    %p33 = scmp.ne.s32.totalorder %s25, %s28
    %p34 = scmp.eq.s32.totalorder %s15, 0
    %p35 = por %p33, %p34
    %p36 = scmp.ne.s32.totalorder %s25, %s28
    %p37 = scmp.eq.s32.totalorder %s20, 1
    %p38 = por %p36, %p37
    %p39 = scmp.ne.s32.totalorder %s28, %s29
    %p40 = scmp.eq.s32.totalorder %s20, 0
    %p41 = por %p39, %p40
    %p42 = scmp.ne.s32.totalorder %s28, %s29
    %p43 = scmp.eq.s32.totalorder %s21, 1
    %p44 = por %p42, %p43
    %p46 = scmp.ne.s32.totalorder %s29, %s45
    %p47 = scmp.eq.s32.totalorder %s21, 0
    %p48 = por %p46, %p47
    %s50 = sadd.s32 %s49, 1
    %p53 = scmp.eq.s32.totalorder %s15, 1
    %p54 = scmp.ne.s32.totalorder %s49, %s51
    %p55 = scmp.eq.s32.totalorder %s15, 0
    %p56 = por %p54, %p55
    %p57 = scmp.ne.s32.totalorder %s49, %s51
    %p58 = scmp.eq.s32.totalorder %s20, 1
    %p59 = por %p57, %p58
    %p60 = scmp.ne.s32.totalorder %s51, %s52
    %p61 = scmp.eq.s32.totalorder %s20, 0
    %p62 = por %p60, %p61
    %p63 = scmp.ne.s32.totalorder %s51, %s52
    %p64 = scmp.eq.s32.totalorder %s21, 1
    %p65 = por %p63, %p64
    %p67 = scmp.ne.s32.totalorder %s52, %s66
    %p68 = scmp.eq.s32.totalorder %s21, 0
    %p69 = por %p67, %p68
    %s71 = sadd.s32 %s70, 1
    %p74 = scmp.eq.s32.totalorder %s15, 1
    %p75 = scmp.ne.s32.totalorder %s70, %s72
    %p76 = scmp.eq.s32.totalorder %s15, 0
    %p77 = por %p75, %p76
    %p78 = scmp.ne.s32.totalorder %s70, %s72
    %p79 = scmp.eq.s32.totalorder %s20, 1
    %p80 = por %p78, %p79
    %p81 = scmp.ne.s32.totalorder %s72, %s73
    %p82 = scmp.eq.s32.totalorder %s20, 0
    %p83 = por %p81, %p82
    %p84 = scmp.ne.s32.totalorder %s72, %s73
    %p85 = scmp.eq.s32.totalorder %s21, 1
    %p86 = por %p84, %p85
    %p88 = scmp.ne.s32.totalorder %s73, %s87
    %p89 = scmp.eq.s32.totalorder %s21, 0
    %p90 = por %p88, %p89
    %s92 = sadd.s32 %s91, 1
    %p95 = scmp.eq.s32.totalorder %s15, 1
    %p96 = scmp.ne.s32.totalorder %s91, %s93
    %p97 = scmp.eq.s32.totalorder %s15, 0
    %p98 = por %p96, %p97
    %p99 = scmp.ne.s32.totalorder %s91, %s93
    %p100 = scmp.eq.s32.totalorder %s20, 1
    %p101 = por %p99, %p100
    %p102 = scmp.ne.s32.totalorder %s93, %s94
    %p103 = scmp.eq.s32.totalorder %s20, 0
    %p104 = por %p102, %p103
    %p105 = scmp.ne.s32.totalorder %s93, %s94
    %p106 = scmp.eq.s32.totalorder %s21, 1
    %p107 = por %p105, %p106
    %p109 = scmp.ne.s32.totalorder %s94, %s108
    %p110 = scmp.eq.s32.totalorder %s21, 0
    %p111 = por %p109, %p110
    %s113 = sadd.s32 %s112, 1
    %p116 = scmp.eq.s32.totalorder %s15, 1
    %p117 = scmp.ne.s32.totalorder %s112, %s114
    %p118 = scmp.eq.s32.totalorder %s15, 0
    %p119 = por %p117, %p118
    %p120 = scmp.ne.s32.totalorder %s112, %s114
    %p121 = scmp.eq.s32.totalorder %s20, 1
    %p122 = por %p120, %p121
    %p123 = scmp.ne.s32.totalorder %s114, %s115
    %p124 = scmp.eq.s32.totalorder %s20, 0
    %p125 = por %p123, %p124
    %p126 = scmp.ne.s32.totalorder %s114, %s115
    %p127 = scmp.eq.s32.totalorder %s21, 1
    %p128 = por %p126, %p127
    %p130 = scmp.ne.s32.totalorder %s115, %s129
    %p131 = scmp.eq.s32.totalorder %s21, 0
    %p132 = por %p130, %p131
    %s134 = sadd.s32 %s133, 1
    %p137 = scmp.eq.s32.totalorder %s15, 1
    %p138 = scmp.ne.s32.totalorder %s133, %s135
    %p139 = scmp.eq.s32.totalorder %s15, 0
    %p140 = por %p138, %p139
    %p141 = scmp.ne.s32.totalorder %s133, %s135
    %p142 = scmp.eq.s32.totalorder %s20, 1
    %p143 = por %p141, %p142
    %p144 = scmp.ne.s32.totalorder %s135, %s136
    %p145 = scmp.eq.s32.totalorder %s20, 0
    %p146 = por %p144, %p145
    %p147 = scmp.ne.s32.totalorder %s135, %s136
    %p148 = scmp.eq.s32.totalorder %s21, 1
    %p149 = por %p147, %p148
    %p151 = scmp.ne.s32.totalorder %s136, %s150
    %p152 = scmp.eq.s32.totalorder %s21, 0
    %p153 = por %p151, %p152
    %s155 = sadd.s32 %s154, 1
    %p158 = scmp.eq.s32.totalorder %s15, 1
    %p159 = scmp.ne.s32.totalorder %s154, %s156
    %p160 = scmp.eq.s32.totalorder %s15, 0
    %p161 = por %p159, %p160
    %p162 = scmp.ne.s32.totalorder %s154, %s156
    %p163 = scmp.eq.s32.totalorder %s20, 1
    %p164 = por %p162, %p163
    %p165 = scmp.ne.s32.totalorder %s156, %s157
    %p166 = scmp.eq.s32.totalorder %s20, 0
    %p167 = por %p165, %p166
    %p168 = scmp.ne.s32.totalorder %s156, %s157
    %p169 = scmp.eq.s32.totalorder %s21, 1
    %p170 = por %p168, %p169
    %p172 = scmp.ne.s32.totalorder %s157, %s171
    %p173 = scmp.eq.s32.totalorder %s21, 0
    %p174 = por %p172, %p173
    %s176 = sadd.s32 %s175, 1
    %p179 = scmp.eq.s32.totalorder %s15, 1
    %p180 = scmp.ne.s32.totalorder %s175, %s177
    %p181 = scmp.eq.s32.totalorder %s15, 0
    %p182 = por %p180, %p181
    %p183 = scmp.ne.s32.totalorder %s175, %s177
    %p184 = scmp.eq.s32.totalorder %s20, 1
    %p185 = por %p183, %p184
    %p186 = scmp.ne.s32.totalorder %s177, %s178
    %p187 = scmp.eq.s32.totalorder %s20, 0
    %p188 = por %p186, %p187
    %p189 = scmp.ne.s32.totalorder %s177, %s178
    %p190 = scmp.eq.s32.totalorder %s21, 1
    %p191 = por %p189, %p190
    %p193 = scmp.ne.s32.totalorder %s178, %s192
    %p194 = scmp.eq.s32.totalorder %s21, 0
    %p195 = por %p193, %p194
    %s196 = ssub.s32 %s15, %s22
    %p197 = scmp.eq.s32.totalorder %s196, 0
    %s199 = sadd.s32 %s198, 1
    %s200 = scalar_select %p197, %s198, %s199
    %p203 = pneg %p197
    %p204 = scmp.eq.s32.totalorder %s15, 1
    %p205 = por %p203, %p204
    %p206 = scmp.ne.s32.totalorder %s198, %s201
    %p207 = scmp.eq.s32.totalorder %s15, 0
    %p208 = por %p206, %p207
    %p209 = scmp.ne.s32.totalorder %s198, %s201
    %p210 = scmp.eq.s32.totalorder %s20, 1
    %p211 = por %p209, %p210
    %p212 = scmp.ne.s32.totalorder %s201, %s202
    %p213 = scmp.eq.s32.totalorder %s20, 0
    %p214 = por %p212, %p213
    %p215 = scmp.ne.s32.totalorder %s201, %s202
    %p216 = scmp.eq.s32.totalorder %s21, 1
    %p217 = por %p215, %p216
    %p219 = scmp.ne.s32.totalorder %s202, %s218
    %p220 = scmp.eq.s32.totalorder %s21, 0
    %p221 = por %p219, %p220
    %s222 = ssub.s32 %s15, %s22
    %p223 = scmp.eq.s32.totalorder %s222, 0
    %s225 = sadd.s32 %s224, 1
    %s226 = scalar_select %p223, %s224, %s225
    %p229 = pneg %p223
    %p230 = scmp.eq.s32.totalorder %s15, 1
    %p231 = por %p229, %p230
    %p232 = scmp.ne.s32.totalorder %s224, %s227
    %p233 = scmp.eq.s32.totalorder %s15, 0
    %p234 = por %p232, %p233
    %p235 = scmp.ne.s32.totalorder %s224, %s227
    %p236 = scmp.eq.s32.totalorder %s20, 1
    %p237 = por %p235, %p236
    %p238 = scmp.ne.s32.totalorder %s227, %s228
    %p239 = scmp.eq.s32.totalorder %s20, 0
    %p240 = por %p238, %p239
    %p241 = scmp.ne.s32.totalorder %s227, %s228
    %p242 = scmp.eq.s32.totalorder %s21, 1
    %p243 = por %p241, %p242
    %p245 = scmp.ne.s32.totalorder %s228, %s244
    %p246 = scmp.eq.s32.totalorder %s21, 0
    %p247 = por %p245, %p246
    %p248 = scmp.le.s32.totalorder 1, %s15
    %p249 = scmp.lt.s32.totalorder %s15, 3
    %p250 = pnand %p248, %p249
    %p251 = pneg %p250
    // Predicated region
    $region9: #{transformer_decoder.7} parent=5 // pred_check
      _
    $region10: #{transformer_decoder.7} parent=5 // pred_check_branch
      %253 = sbr.rel (%p250) target = $region12
    $region11: #{transformer_decoder.7} parent=5 // pred_region
      %s254 = ssub.s32 %s15, 1
      // Predicated region
      $region13: #{transformer_decoder.7} parent=11 // pred_check
        %p255 = pneg %p62
      $region14: #{transformer_decoder.7} parent=11 // pred_check_branch
        %257 = sbr.rel (%p255) target = $region16
      $region15: #{transformer_decoder.7} parent=11 // pred_region
        _
      $region16: #{transformer_decoder.7} parent=11 // pred_fallthru
        _
      // Predicated region
      $region17: #{transformer_decoder.7} parent=11 // pred_check
        %p258 = pneg %p83
      $region18: #{transformer_decoder.7} parent=11 // pred_check_branch
        %260 = sbr.rel (%p258) target = $region20
      $region19: #{transformer_decoder.7} parent=11 // pred_region
        _
      $region20: #{transformer_decoder.7} parent=11 // pred_fallthru
        _
      // Predicated region
      $region21: #{transformer_decoder.7} parent=11 // pred_check
        %p261 = pneg %p104
      $region22: #{transformer_decoder.7} parent=11 // pred_check_branch
        %263 = sbr.rel (%p261) target = $region24
      $region23: #{transformer_decoder.7} parent=11 // pred_region
        _
      $region24: #{transformer_decoder.7} parent=11 // pred_fallthru
        _
      // Predicated region
      $region25: #{transformer_decoder.7} parent=11 // pred_check
        %p264 = pneg %p125
      $region26: #{transformer_decoder.7} parent=11 // pred_check_branch
        %266 = sbr.rel (%p264) target = $region28
      $region27: #{transformer_decoder.7} parent=11 // pred_region
        _
      $region28: #{transformer_decoder.7} parent=11 // pred_fallthru
        _
      // Predicated region
      $region29: #{transformer_decoder.7} parent=11 // pred_check
        %p267 = pneg %p146
      $region30: #{transformer_decoder.7} parent=11 // pred_check_branch
        %269 = sbr.rel (%p267) target = $region32
      $region31: #{transformer_decoder.7} parent=11 // pred_region
        _
      $region32: #{transformer_decoder.7} parent=11 // pred_fallthru
        _
      // Predicated region
      $region33: #{transformer_decoder.7} parent=11 // pred_check
        %p270 = pneg %p167
      $region34: #{transformer_decoder.7} parent=11 // pred_check_branch
        %272 = sbr.rel (%p270) target = $region36
      $region35: #{transformer_decoder.7} parent=11 // pred_region
        _
      $region36: #{transformer_decoder.7} parent=11 // pred_fallthru
        _
      // Predicated region
      $region37: #{transformer_decoder.7} parent=11 // pred_check
        %p273 = pneg %p188
      $region38: #{transformer_decoder.7} parent=11 // pred_check_branch
        %275 = sbr.rel (%p273) target = $region40
      $region39: #{transformer_decoder.7} parent=11 // pred_region
        _
      $region40: #{transformer_decoder.7} parent=11 // pred_fallthru
        _
    $region12: #{transformer_decoder.7} parent=5 // pred_fallthru
      _
    %p276 = scmp.lt.s32.totalorder %s15, 2
    // Predicated region
    $region41: #{transformer_decoder.7} parent=5 // pred_check
      %p277 = pneg %p276
    $region42: #{transformer_decoder.7} parent=5 // pred_check_branch
      %279 = sbr.rel (%p277) target = $region44
    $region43: #{transformer_decoder.7} parent=5 // pred_region
      // Predicated region
      $region45: #{transformer_decoder.7} parent=43 // pred_check
        %p280 = pneg %p35
      $region46: #{transformer_decoder.7} parent=43 // pred_check_branch
        %282 = sbr.rel (%p280) target = $region48
      $region47: #{transformer_decoder.7} parent=43 // pred_region
        %p283 = scmp.lt.s32.totalorder %s15, 1
        %s284 = scalar_select %p283, %s15, 1
        %s285 = smul.addr %s284, 4
        %s286 = scalar_lea.vmem %s0, %s285
      $region48: #{transformer_decoder.7} parent=43 // pred_fallthru
        _
      // Predicated region
      $region49: #{transformer_decoder.7} parent=43 // pred_check
        %p287 = pneg %p208
      $region50: #{transformer_decoder.7} parent=43 // pred_check_branch
        %289 = sbr.rel (%p287) target = $region52
      $region51: #{transformer_decoder.7} parent=43 // pred_region
        %p290 = scmp.lt.s32.totalorder %s15, 1
        %s291 = scalar_select %p290, %s15, 1
        %s292 = scalar_lea.vmem %s8, %s291
      $region52: #{transformer_decoder.7} parent=43 // pred_fallthru
        _
    $region44: #{transformer_decoder.7} parent=5 // pred_fallthru
      _
    %p293 = scmp.le.s32.totalorder 1, %s15
    %p294 = scmp.lt.s32.totalorder %s15, 3
    %p295 = pnand %p293, %p294
    %p296 = pneg %p295
    // Predicated region
    $region53: #{transformer_decoder.7} parent=5 // pred_check
      _
    $region54: #{transformer_decoder.7} parent=5 // pred_check_branch
      %298 = sbr.rel (%p295) target = $region56
    $region55: #{transformer_decoder.7} parent=5 // pred_region
      %s299 = ssub.s32 %s15, 1
      %p300 = scmp.lt.s32.totalorder %s20, 1
      %s301 = scalar_select %p300, %s20, 1
      %s302 = smul.addr %s301, 4
      %s303 = scalar_lea.vmem %s0, %s302
      %p304 = pneg %p41
      %p305 = pneg %p38
      %p306 = pneg %p62
      %p307 = pneg %p59
      %p308 = pneg %p83
      %p309 = pneg %p80
      %p310 = pneg %p104
      %p311 = pneg %p101
      %p312 = pneg %p125
      %p313 = pneg %p122
      %p314 = pneg %p146
      %p315 = pneg %p143
      %p316 = pneg %p167
      %p317 = pneg %p164
      %p318 = pneg %p188
      %p319 = pneg %p185
      %p320 = scmp.lt.s32.totalorder %s20, 1
      %s321 = scalar_select %p320, %s20, 1
      %s322 = scalar_lea.vmem %s8, %s321
      %p323 = pneg %p214
      %p324 = pneg %p211
      %p325 = pneg %p240
      %p326 = pneg %p237
      %p327 = scmp.lt.s32.totalorder %s20, 1
      %s328 = scalar_select %p327, %s20, 1
      %s329 = smul.addr %s328, 4
      %s330 = scalar_lea.vmem %s9, %s329
      %p331 = scmp.lt.s32.totalorder %s20, 1
      %s332 = scalar_select %p331, %s20, 1
      %s333 = smul.addr %s332, 4
      %s334 = scalar_lea.vmem %s0, %s333
      %p335 = scmp.lt.s32.totalorder %s20, 1
      %s336 = scalar_select %p335, %s20, 1
      %s337 = scalar_lea.vmem %s8, %s336
      %p338 = scmp.lt.s32.totalorder %s20, 1
      %s339 = scalar_select %p338, %s20, 1
      %s340 = smul.addr %s339, 4
      %s341 = scalar_lea.vmem %s9, %s340
      %v343 = vld [vmem:[%s334] sm:$0xf]
      %v344 = vld [vmem:[%s1] sm:$0xf]
      %v345 = vld [vmem:[%s1 + $0x4] sm:$0xf]
      %v346 = vld [vmem:[%s1 + $0x8] sm:$0xf]
      %v347 = vld [vmem:[%s1 + $0xc] sm:$0xf]
      %v348 = vld [vmem:[%s2] sm:$0x1]
      %v349 = vunpack.c.l.bf16 %v348
      %v350 = vlaneseq
      %v351 = vshrl.u32 %v350, 7
      %v352 = vsub.s32 0, %v351
      %v353 = vrot.slane %v349, %v352
      %v358 = vunpack.c.l.b16 %v344
      %v359 = vunpack.c.l.b16 %v345
      %v360 = vunpack.c.l.b16 %v346
      %v361 = vunpack.c.l.b16 %v347
      %v362 = vpack.c.b16 %v359, %v358
      %v363 = vpack.c.b16 %v361, %v360
      %vm366 = vcmask 261120
      %v368 = vsel %vm366, %v343, 0
      %370 = vmatprep.subr.bf16.mxu0 0
      %371 = vmatpush1.bf16.msra.mxu0 0
      %372 = vmatprep.subr.bf16.mxu0 0
      %373 = vmatpush1.bf16.msra.mxu0 0
      %374 = vmatprep.subr.bf16.mxu0 0
      %375 = vmatpush1.bf16.msra.mxu0 0
      %376 = vmatprep.subr.bf16.mxu0 0
      %377 = vmatpush1.bf16.msra.mxu0 0
      %378 = vmatprep.subr.bf16.mxu0 0
      %379 = vmatpush1.bf16.msra.mxu0 0
      %380 = vmatprep.subr.bf16.mxu0 0
      %381 = vmatpush1.bf16.msra.mxu0 0
      %382 = vmatprep.subr.bf16.mxu0 0
      %383 = vmatpush1.bf16.msra.mxu0 %v363
      %384 = vmatprep.subr.bf16.mxu0 0
      %385 = vmatpush1.bf16.msra.mxu0 %v362
      %386 = vmatprep.subr.bf16.mxu0 0
      %387 = vmatpush2.bf16.msra.mxu0 0
      %388 = vmatprep.subr.bf16.mxu0 0
      %389 = vmatpush2.bf16.msra.mxu0 0
      %390 = vmatprep.subr.bf16.mxu0 0
      %391 = vmatpush2.bf16.msra.mxu0 0
      %392 = vmatprep.subr.bf16.mxu0 0
      %393 = vmatpush2.bf16.msra.mxu0 0
      %394 = vmatprep.subr.bf16.mxu0 0
      %395 = vmatpush2.bf16.msra.mxu0 0
      %396 = vmatprep.subr.bf16.mxu0 0
      %397 = vmatpush2.bf16.msra.mxu0 0
      %398 = vmatprep.subr.bf16.mxu0 0
      %399 = vmatpush2.bf16.msra.mxu0 0
      %400 = vmatprep.subr.bf16.mxu0 0
      %401 = vmatpush2.bf16.msra.mxu0 0
      %402 = vmatprep.mubr.bf16.mxu0 0
      %403 = vmatmul.mubr.bf16.gmra.mxu0 %v368
      %v404 = vpop.f32.mrf.mxu0
      %v405 = vadd.f32 %v353, %v404
      %v406 = vpop.f32.mrf.mxu0
      %v407 = vpop.f32.mrf.mxu0
      %v408 = vpop.f32.mrf.mxu0
      %409 = vdwg.mxu0
      %v410 = vld [vmem:[%s7] sm:$0xff]
      %v411 = vld [vmem:[%s337] sm:$0x1]
      %v413 = vlaneseq
      %v414 = vshrl.u32 %v413, 7
      %v415 = vsub.s32 0, %v414
      %v416 = vrot.slane %v411, %v415
      %v418 = vadd.f32 %v410, %v416
      %v419 = vunpack.c.l.bf16 %v343
      %v420 = vld [vmem:[%s4] sm:$0x1]
      %v421 = vunpack.c.l.bf16 %v420
      %v422 = vlaneseq
      %v423 = vshrl.u32 %v422, 7
      %v424 = vsub.s32 0, %v423
      %v425 = vrot.slane %v421, %v424
      %v426 = vadd.f32 %v419, %v425
      %v427 = vld [vmem:[%s3] sm:$0xf]
      %v428 = vld [vmem:[%s3 + $0x4] sm:$0xf]
      %v429 = vld [vmem:[%s3 + $0x8] sm:$0xf]
      %v430 = vld [vmem:[%s3 + $0xc] sm:$0xf]
      %v431 = vmul.f32 %v405, 0.35355338
      %v432 = vpack.c.bf16 %v431, %v431
      %v433 = vpack.c.bf16 %v405, %v405
      %435 = vrot.lane.b32.xlu0 %v433, 96
      %v436 = vpop.permute.xlu0 %435
      %vm437 = vcmask 64512
      %v439 = vsel %vm437, %v432, 0
      %v442 = vsel %vm437, %v436, 0
      %444 = vmatprep.subr.bf16.mxu0 0
      %445 = vmatpush1.bf16.xpose.msra.mxu0 0
      %446 = vmatprep.subr.bf16.mxu0 0
      %447 = vmatpush1.bf16.xpose.msra.mxu0 0
      %448 = vmatprep.subr.bf16.mxu0 0
      %449 = vmatpush1.bf16.xpose.msra.mxu0 0
      %450 = vmatprep.subr.bf16.mxu0 0
      %451 = vmatpush1.bf16.xpose.msra.mxu0 0
      %452 = vmatprep.subr.bf16.mxu0 0
      %453 = vmatpush1.bf16.xpose.msra.mxu0 0
      %454 = vmatprep.subr.bf16.mxu0 0
      %455 = vmatpush1.bf16.xpose.msra.mxu0 0
      %456 = vmatprep.subr.bf16.mxu0 0
      %457 = vmatpush1.bf16.xpose.msra.mxu0 0
      %458 = vmatprep.subr.bf16.mxu0 0
      %459 = vmatpush1.bf16.xpose.msra.mxu0 %v442
      %460 = vmatprep.subr.bf16.mxu0 0
      %461 = vmatpush2.bf16.xpose.msra.mxu0 0
      %462 = vmatprep.subr.bf16.mxu0 0
      %463 = vmatpush2.bf16.xpose.msra.mxu0 0
      %464 = vmatprep.subr.bf16.mxu0 0
      %465 = vmatpush2.bf16.xpose.msra.mxu0 0
      %466 = vmatprep.subr.bf16.mxu0 0
      %467 = vmatpush2.bf16.xpose.msra.mxu0 0
      %468 = vmatprep.subr.bf16.mxu0 0
      %469 = vmatpush2.bf16.xpose.msra.mxu0 0
      %470 = vmatprep.subr.bf16.mxu0 0
      %471 = vmatpush2.bf16.xpose.msra.mxu0 0
      %472 = vmatprep.subr.bf16.mxu0 0
      %473 = vmatpush2.bf16.xpose.msra.mxu0 0
      %474 = vmatprep.subr.bf16.mxu0 0
      %475 = vmatpush2.bf16.xpose.msra.mxu0 0
      %476 = vmatprep.mubr.bf16.mxu0 0
      %477 = vmatmul.mubr.bf16.gmra.mxu0 %v439
      %v478 = vpop.f32.mrf.mxu0
      %v479 = vadd.f32 %v418, %v478
      %v480 = vpop.f32.mrf.mxu0
      %v481 = vpop.f32.mrf.mxu0
      %v482 = vpop.f32.mrf.mxu0
      %483 = vdwg.mxu0
      %v484 = vsel %vm437, %v479, -inf
      %485 = vmax.xlane.f32.xlu0 %v484
      %v486 = vpop.xlane.xlu0 %485
      %v487 = vsub.f32 %v479, %v486
      %v488 = vmul.f32 %v487, 1.442695
      %v489 = vpow.pop %v488
      %v490 = vsel %vm437, %v489, 0.0
      %491 = vadd.xlane.f32.xlu0 %v490
      %v492 = vpop.xlane.xlu0 %491
      %v493 = vrcp.pop %v492
      %v494 = vmul.f32 %v489, %v493
      %v495 = vpack.c.bf16 %v494, %v494
      %496 = vrot.lane.b32.xlu0 %v433, 64
      %v497 = vpop.permute.xlu0 %496
      %v499 = vsel %vm437, %v495, 0
      %vm501 = vcmask 1043456
      %v503 = vsel %vm501, %v497, 0
      %505 = vmatprep.subr.bf16.mxu0 0
      %506 = vmatpush1.bf16.msra.mxu0 0
      %507 = vmatprep.subr.bf16.mxu0 0
      %508 = vmatpush1.bf16.msra.mxu0 0
      %509 = vmatprep.subr.bf16.mxu0 0
      %510 = vmatpush1.bf16.msra.mxu0 0
      %511 = vmatprep.subr.bf16.mxu0 0
      %512 = vmatpush1.bf16.msra.mxu0 0
      %513 = vmatprep.subr.bf16.mxu0 0
      %514 = vmatpush1.bf16.msra.mxu0 0
      %515 = vmatprep.subr.bf16.mxu0 0
      %516 = vmatpush1.bf16.msra.mxu0 0
      %517 = vmatprep.subr.bf16.mxu0 0
      %518 = vmatpush1.bf16.msra.mxu0 0
      %519 = vmatprep.subr.bf16.mxu0 0
      %520 = vmatpush1.bf16.msra.mxu0 %v503
      %521 = vmatprep.subr.bf16.mxu0 0
      %522 = vmatpush2.bf16.msra.mxu0 0
      %523 = vmatprep.subr.bf16.mxu0 0
      %524 = vmatpush2.bf16.msra.mxu0 0
      %525 = vmatprep.subr.bf16.mxu0 0
      %526 = vmatpush2.bf16.msra.mxu0 0
      %527 = vmatprep.subr.bf16.mxu0 0
      %528 = vmatpush2.bf16.msra.mxu0 0
      %529 = vmatprep.subr.bf16.mxu0 0
      %530 = vmatpush2.bf16.msra.mxu0 0
      %531 = vmatprep.subr.bf16.mxu0 0
      %532 = vmatpush2.bf16.msra.mxu0 0
      %533 = vmatprep.subr.bf16.mxu0 0
      %534 = vmatpush2.bf16.msra.mxu0 0
      %535 = vmatprep.subr.bf16.mxu0 0
      %536 = vmatpush2.bf16.msra.mxu0 0
      %537 = vmatprep.mubr.bf16.mxu0 0
      %538 = vmatmul.mubr.bf16.gmra.mxu0 %v499
      %v539 = vpop.f32.mrf.mxu0
      %v540 = vadd.f32 0.0, %v539
      %v541 = vpop.f32.mrf.mxu0
      %v542 = vpop.f32.mrf.mxu0
      %v543 = vpop.f32.mrf.mxu0
      %544 = vdwg.mxu0
      %v545 = vpack.c.bf16 %v540, %v540
      %v547 = vsel %vm437, %v545, 0
      %v550 = vsel %vm501, %v427, 0
      %552 = vmatprep.subr.bf16.mxu0 0
      %553 = vmatpush1.bf16.msra.mxu0 0
      %554 = vmatprep.subr.bf16.mxu0 0
      %555 = vmatpush1.bf16.msra.mxu0 0
      %556 = vmatprep.subr.bf16.mxu0 0
      %557 = vmatpush1.bf16.msra.mxu0 0
      %558 = vmatprep.subr.bf16.mxu0 0
      %559 = vmatpush1.bf16.msra.mxu0 0
      %560 = vmatprep.subr.bf16.mxu0 0
      %561 = vmatpush1.bf16.msra.mxu0 0
      %562 = vmatprep.subr.bf16.mxu0 0
      %563 = vmatpush1.bf16.msra.mxu0 0
      %564 = vmatprep.subr.bf16.mxu0 0
      %565 = vmatpush1.bf16.msra.mxu0 0
      %566 = vmatprep.subr.bf16.mxu0 0
      %567 = vmatpush1.bf16.msra.mxu0 %v550
      %568 = vmatprep.subr.bf16.mxu0 0
      %569 = vmatpush2.bf16.msra.mxu0 0
      %570 = vmatprep.subr.bf16.mxu0 0
      %571 = vmatpush2.bf16.msra.mxu0 0
      %572 = vmatprep.subr.bf16.mxu0 0
      %573 = vmatpush2.bf16.msra.mxu0 0
      %574 = vmatprep.subr.bf16.mxu0 0
      %575 = vmatpush2.bf16.msra.mxu0 0
      %576 = vmatprep.subr.bf16.mxu0 0
      %577 = vmatpush2.bf16.msra.mxu0 0
      %578 = vmatprep.subr.bf16.mxu0 0
      %579 = vmatpush2.bf16.msra.mxu0 0
      %580 = vmatprep.subr.bf16.mxu0 0
      %581 = vmatpush2.bf16.msra.mxu0 0
      %582 = vmatprep.subr.bf16.mxu0 0
      %583 = vmatpush2.bf16.msra.mxu0 0
      %584 = vmatprep.mubr.bf16.mxu0 0
      %585 = vmatmul.mubr.bf16.gmra.mxu0 %v547
      %v586 = vpop.f32.mrf.mxu0
      %v587 = vadd.f32 0.0, %v586
      %v588 = vpop.f32.mrf.mxu0
      %v589 = vpop.f32.mrf.mxu0
      %v590 = vpop.f32.mrf.mxu0
      %591 = vdwg.mxu0
      %v592 = vadd.f32 %v426, %v587
      %594 = vrot.lane.b32.xlu0 %v432, 120
      %v595 = vpop.permute.xlu0 %594
      %596 = vrot.lane.b32.xlu0 %v433, 88
      %v597 = vpop.permute.xlu0 %596
      %v599 = vsel %vm437, %v595, 0
      %v602 = vsel %vm437, %v597, 0
      %604 = vmatprep.subr.bf16.mxu0 0
      %605 = vmatpush1.bf16.xpose.msra.mxu0 0
      %606 = vmatprep.subr.bf16.mxu0 0
      %607 = vmatpush1.bf16.xpose.msra.mxu0 0
      %608 = vmatprep.subr.bf16.mxu0 0
      %609 = vmatpush1.bf16.xpose.msra.mxu0 0
      %610 = vmatprep.subr.bf16.mxu0 0
      %611 = vmatpush1.bf16.xpose.msra.mxu0 0
      %612 = vmatprep.subr.bf16.mxu0 0
      %613 = vmatpush1.bf16.xpose.msra.mxu0 0
      %614 = vmatprep.subr.bf16.mxu0 0
      %615 = vmatpush1.bf16.xpose.msra.mxu0 0
      %616 = vmatprep.subr.bf16.mxu0 0
      %617 = vmatpush1.bf16.xpose.msra.mxu0 0
      %618 = vmatprep.subr.bf16.mxu0 0
      %619 = vmatpush1.bf16.xpose.msra.mxu0 %v602
      %620 = vmatprep.subr.bf16.mxu0 0
      %621 = vmatpush2.bf16.xpose.msra.mxu0 0
      %622 = vmatprep.subr.bf16.mxu0 0
      %623 = vmatpush2.bf16.xpose.msra.mxu0 0
      %624 = vmatprep.subr.bf16.mxu0 0
      %625 = vmatpush2.bf16.xpose.msra.mxu0 0
      %626 = vmatprep.subr.bf16.mxu0 0
      %627 = vmatpush2.bf16.xpose.msra.mxu0 0
      %628 = vmatprep.subr.bf16.mxu0 0
      %629 = vmatpush2.bf16.xpose.msra.mxu0 0
      %630 = vmatprep.subr.bf16.mxu0 0
      %631 = vmatpush2.bf16.xpose.msra.mxu0 0
      %632 = vmatprep.subr.bf16.mxu0 0
      %633 = vmatpush2.bf16.xpose.msra.mxu0 0
      %634 = vmatprep.subr.bf16.mxu0 0
      %635 = vmatpush2.bf16.xpose.msra.mxu0 0
      %636 = vmatprep.mubr.bf16.mxu0 0
      %637 = vmatmul.mubr.bf16.gmra.mxu0 %v599
      %v638 = vpop.f32.mrf.mxu0
      %v639 = vadd.f32 %v418, %v638
      %v640 = vpop.f32.mrf.mxu0
      %v641 = vpop.f32.mrf.mxu0
      %v642 = vpop.f32.mrf.mxu0
      %643 = vdwg.mxu0
      %v644 = vsel %vm437, %v639, -inf
      %645 = vmax.xlane.f32.xlu0 %v644
      %v646 = vpop.xlane.xlu0 %645
      %v647 = vsub.f32 %v639, %v646
      %v648 = vmul.f32 %v647, 1.442695
      %v649 = vpow.pop %v648
      %v650 = vsel %vm437, %v649, 0.0
      %651 = vadd.xlane.f32.xlu0 %v650
      %v652 = vpop.xlane.xlu0 %651
      %v653 = vrcp.pop %v652
      %v654 = vmul.f32 %v649, %v653
      %v655 = vpack.c.bf16 %v654, %v654
      %656 = vrot.lane.b32.xlu0 %v433, 56
      %v657 = vpop.permute.xlu0 %656
      %v659 = vsel %vm437, %v655, 0
      %v662 = vsel %vm501, %v657, 0
      %664 = vmatprep.subr.bf16.mxu0 0
      %665 = vmatpush1.bf16.msra.mxu0 0
      %666 = vmatprep.subr.bf16.mxu0 0
      %667 = vmatpush1.bf16.msra.mxu0 0
      %668 = vmatprep.subr.bf16.mxu0 0
      %669 = vmatpush1.bf16.msra.mxu0 0
      %670 = vmatprep.subr.bf16.mxu0 0
      %671 = vmatpush1.bf16.msra.mxu0 0
      %672 = vmatprep.subr.bf16.mxu0 0
      %673 = vmatpush1.bf16.msra.mxu0 0
      %674 = vmatprep.subr.bf16.mxu0 0
      %675 = vmatpush1.bf16.msra.mxu0 0
      %676 = vmatprep.subr.bf16.mxu0 0
      %677 = vmatpush1.bf16.msra.mxu0 0
      %678 = vmatprep.subr.bf16.mxu0 0
      %679 = vmatpush1.bf16.msra.mxu0 %v662
      %680 = vmatprep.subr.bf16.mxu0 0
      %681 = vmatpush2.bf16.msra.mxu0 0
      %682 = vmatprep.subr.bf16.mxu0 0
      %683 = vmatpush2.bf16.msra.mxu0 0
      %684 = vmatprep.subr.bf16.mxu0 0
      %685 = vmatpush2.bf16.msra.mxu0 0
      %686 = vmatprep.subr.bf16.mxu0 0
      %687 = vmatpush2.bf16.msra.mxu0 0
      %688 = vmatprep.subr.bf16.mxu0 0
      %689 = vmatpush2.bf16.msra.mxu0 0
      %690 = vmatprep.subr.bf16.mxu0 0
      %691 = vmatpush2.bf16.msra.mxu0 0
      %692 = vmatprep.subr.bf16.mxu0 0
      %693 = vmatpush2.bf16.msra.mxu0 0
      %694 = vmatprep.subr.bf16.mxu0 0
      %695 = vmatpush2.bf16.msra.mxu0 0
      %696 = vmatprep.mubr.bf16.mxu0 0
      %697 = vmatmul.mubr.bf16.gmra.mxu0 %v659
      %v698 = vpop.f32.mrf.mxu0
      %v699 = vadd.f32 0.0, %v698
      %v700 = vpop.f32.mrf.mxu0
      %v701 = vpop.f32.mrf.mxu0
      %v702 = vpop.f32.mrf.mxu0
      %703 = vdwg.mxu0
      %v704 = vpack.c.bf16 %v699, %v699
      %v706 = vsel %vm437, %v704, 0
      %v709 = vsel %vm501, %v428, 0
      %711 = vmatprep.subr.bf16.mxu0 0
      %712 = vmatpush1.bf16.msra.mxu0 0
      %713 = vmatprep.subr.bf16.mxu0 0
      %714 = vmatpush1.bf16.msra.mxu0 0
      %715 = vmatprep.subr.bf16.mxu0 0
      %716 = vmatpush1.bf16.msra.mxu0 0
      %717 = vmatprep.subr.bf16.mxu0 0
      %718 = vmatpush1.bf16.msra.mxu0 0
      %719 = vmatprep.subr.bf16.mxu0 0
      %720 = vmatpush1.bf16.msra.mxu0 0
      %721 = vmatprep.subr.bf16.mxu0 0
      %722 = vmatpush1.bf16.msra.mxu0 0
      %723 = vmatprep.subr.bf16.mxu0 0
      %724 = vmatpush1.bf16.msra.mxu0 0
      %725 = vmatprep.subr.bf16.mxu0 0
      %726 = vmatpush1.bf16.msra.mxu0 %v709
      %727 = vmatprep.subr.bf16.mxu0 0
      %728 = vmatpush2.bf16.msra.mxu0 0
      %729 = vmatprep.subr.bf16.mxu0 0
      %730 = vmatpush2.bf16.msra.mxu0 0
      %731 = vmatprep.subr.bf16.mxu0 0
      %732 = vmatpush2.bf16.msra.mxu0 0
      %733 = vmatprep.subr.bf16.mxu0 0
      %734 = vmatpush2.bf16.msra.mxu0 0
      %735 = vmatprep.subr.bf16.mxu0 0
      %736 = vmatpush2.bf16.msra.mxu0 0
      %737 = vmatprep.subr.bf16.mxu0 0
      %738 = vmatpush2.bf16.msra.mxu0 0
      %739 = vmatprep.subr.bf16.mxu0 0
      %740 = vmatpush2.bf16.msra.mxu0 0
      %741 = vmatprep.subr.bf16.mxu0 0
      %742 = vmatpush2.bf16.msra.mxu0 0
      %743 = vmatprep.mubr.bf16.mxu0 0
      %744 = vmatmul.mubr.bf16.gmra.mxu0 %v706
      %v745 = vpop.f32.mrf.mxu0
      %v746 = vadd.f32 0.0, %v745
      %v747 = vpop.f32.mrf.mxu0
      %v748 = vpop.f32.mrf.mxu0
      %v749 = vpop.f32.mrf.mxu0
      %750 = vdwg.mxu0
      %v751 = vadd.f32 %v592, %v746
      %752 = vrot.lane.b32.xlu0 %v432, 112
      %v753 = vpop.permute.xlu0 %752
      %754 = vrot.lane.b32.xlu0 %v433, 80
      %v755 = vpop.permute.xlu0 %754
      %v757 = vsel %vm437, %v753, 0
      %v760 = vsel %vm437, %v755, 0
      %762 = vmatprep.subr.bf16.mxu0 0
      %763 = vmatpush1.bf16.xpose.msra.mxu0 0
      %764 = vmatprep.subr.bf16.mxu0 0
      %765 = vmatpush1.bf16.xpose.msra.mxu0 0
      %766 = vmatprep.subr.bf16.mxu0 0
      %767 = vmatpush1.bf16.xpose.msra.mxu0 0
      %768 = vmatprep.subr.bf16.mxu0 0
      %769 = vmatpush1.bf16.xpose.msra.mxu0 0
      %770 = vmatprep.subr.bf16.mxu0 0
      %771 = vmatpush1.bf16.xpose.msra.mxu0 0
      %772 = vmatprep.subr.bf16.mxu0 0
      %773 = vmatpush1.bf16.xpose.msra.mxu0 0
      %774 = vmatprep.subr.bf16.mxu0 0
      %775 = vmatpush1.bf16.xpose.msra.mxu0 0
      %776 = vmatprep.subr.bf16.mxu0 0
      %777 = vmatpush1.bf16.xpose.msra.mxu0 %v760
      %778 = vmatprep.subr.bf16.mxu0 0
      %779 = vmatpush2.bf16.xpose.msra.mxu0 0
      %780 = vmatprep.subr.bf16.mxu0 0
      %781 = vmatpush2.bf16.xpose.msra.mxu0 0
      %782 = vmatprep.subr.bf16.mxu0 0
      %783 = vmatpush2.bf16.xpose.msra.mxu0 0
      %784 = vmatprep.subr.bf16.mxu0 0
      %785 = vmatpush2.bf16.xpose.msra.mxu0 0
      %786 = vmatprep.subr.bf16.mxu0 0
      %787 = vmatpush2.bf16.xpose.msra.mxu0 0
      %788 = vmatprep.subr.bf16.mxu0 0
      %789 = vmatpush2.bf16.xpose.msra.mxu0 0
      %790 = vmatprep.subr.bf16.mxu0 0
      %791 = vmatpush2.bf16.xpose.msra.mxu0 0
      %792 = vmatprep.subr.bf16.mxu0 0
      %793 = vmatpush2.bf16.xpose.msra.mxu0 0
      %794 = vmatprep.mubr.bf16.mxu0 0
      %795 = vmatmul.mubr.bf16.gmra.mxu0 %v757
      %v796 = vpop.f32.mrf.mxu0
      %v797 = vadd.f32 %v418, %v796
      %v798 = vpop.f32.mrf.mxu0
      %v799 = vpop.f32.mrf.mxu0
      %v800 = vpop.f32.mrf.mxu0
      %801 = vdwg.mxu0
      %v802 = vsel %vm437, %v797, -inf
      %803 = vmax.xlane.f32.xlu0 %v802
      %v804 = vpop.xlane.xlu0 %803
      %v805 = vsub.f32 %v797, %v804
      %v806 = vmul.f32 %v805, 1.442695
      %v807 = vpow.pop %v806
      %v808 = vsel %vm437, %v807, 0.0
      %809 = vadd.xlane.f32.xlu0 %v808
      %v810 = vpop.xlane.xlu0 %809
      %v811 = vrcp.pop %v810
      %v812 = vmul.f32 %v807, %v811
      %v813 = vpack.c.bf16 %v812, %v812
      %814 = vrot.lane.b32.xlu0 %v433, 48
      %v815 = vpop.permute.xlu0 %814
      %v817 = vsel %vm437, %v813, 0
      %v820 = vsel %vm501, %v815, 0
      %822 = vmatprep.subr.bf16.mxu0 0
      %823 = vmatpush1.bf16.msra.mxu0 0
      %824 = vmatprep.subr.bf16.mxu0 0
      %825 = vmatpush1.bf16.msra.mxu0 0
      %826 = vmatprep.subr.bf16.mxu0 0
      %827 = vmatpush1.bf16.msra.mxu0 0
      %828 = vmatprep.subr.bf16.mxu0 0
      %829 = vmatpush1.bf16.msra.mxu0 0
      %830 = vmatprep.subr.bf16.mxu0 0
      %831 = vmatpush1.bf16.msra.mxu0 0
      %832 = vmatprep.subr.bf16.mxu0 0
      %833 = vmatpush1.bf16.msra.mxu0 0
      %834 = vmatprep.subr.bf16.mxu0 0
      %835 = vmatpush1.bf16.msra.mxu0 0
      %836 = vmatprep.subr.bf16.mxu0 0
      %837 = vmatpush1.bf16.msra.mxu0 %v820
      %838 = vmatprep.subr.bf16.mxu0 0
      %839 = vmatpush2.bf16.msra.mxu0 0
      %840 = vmatprep.subr.bf16.mxu0 0
      %841 = vmatpush2.bf16.msra.mxu0 0
      %842 = vmatprep.subr.bf16.mxu0 0
      %843 = vmatpush2.bf16.msra.mxu0 0
      %844 = vmatprep.subr.bf16.mxu0 0
      %845 = vmatpush2.bf16.msra.mxu0 0
      %846 = vmatprep.subr.bf16.mxu0 0
      %847 = vmatpush2.bf16.msra.mxu0 0
      %848 = vmatprep.subr.bf16.mxu0 0
      %849 = vmatpush2.bf16.msra.mxu0 0
      %850 = vmatprep.subr.bf16.mxu0 0
      %851 = vmatpush2.bf16.msra.mxu0 0
      %852 = vmatprep.subr.bf16.mxu0 0
      %853 = vmatpush2.bf16.msra.mxu0 0
      %854 = vmatprep.mubr.bf16.mxu0 0
      %855 = vmatmul.mubr.bf16.gmra.mxu0 %v817
      %v856 = vpop.f32.mrf.mxu0
      %v857 = vadd.f32 0.0, %v856
      %v858 = vpop.f32.mrf.mxu0
      %v859 = vpop.f32.mrf.mxu0
      %v860 = vpop.f32.mrf.mxu0
      %861 = vdwg.mxu0
      %v862 = vpack.c.bf16 %v857, %v857
      %v864 = vsel %vm437, %v862, 0
      %v867 = vsel %vm501, %v429, 0
      %869 = vmatprep.subr.bf16.mxu0 0
      %870 = vmatpush1.bf16.msra.mxu0 0
      %871 = vmatprep.subr.bf16.mxu0 0
      %872 = vmatpush1.bf16.msra.mxu0 0
      %873 = vmatprep.subr.bf16.mxu0 0
      %874 = vmatpush1.bf16.msra.mxu0 0
      %875 = vmatprep.subr.bf16.mxu0 0
      %876 = vmatpush1.bf16.msra.mxu0 0
      %877 = vmatprep.subr.bf16.mxu0 0
      %878 = vmatpush1.bf16.msra.mxu0 0
      %879 = vmatprep.subr.bf16.mxu0 0
      %880 = vmatpush1.bf16.msra.mxu0 0
      %881 = vmatprep.subr.bf16.mxu0 0
      %882 = vmatpush1.bf16.msra.mxu0 0
      %883 = vmatprep.subr.bf16.mxu0 0
      %884 = vmatpush1.bf16.msra.mxu0 %v867
      %885 = vmatprep.subr.bf16.mxu0 0
      %886 = vmatpush2.bf16.msra.mxu0 0
      %887 = vmatprep.subr.bf16.mxu0 0
      %888 = vmatpush2.bf16.msra.mxu0 0
      %889 = vmatprep.subr.bf16.mxu0 0
      %890 = vmatpush2.bf16.msra.mxu0 0
      %891 = vmatprep.subr.bf16.mxu0 0
      %892 = vmatpush2.bf16.msra.mxu0 0
      %893 = vmatprep.subr.bf16.mxu0 0
      %894 = vmatpush2.bf16.msra.mxu0 0
      %895 = vmatprep.subr.bf16.mxu0 0
      %896 = vmatpush2.bf16.msra.mxu0 0
      %897 = vmatprep.subr.bf16.mxu0 0
      %898 = vmatpush2.bf16.msra.mxu0 0
      %899 = vmatprep.subr.bf16.mxu0 0
      %900 = vmatpush2.bf16.msra.mxu0 0
      %901 = vmatprep.mubr.bf16.mxu0 0
      %902 = vmatmul.mubr.bf16.gmra.mxu0 %v864
      %v903 = vpop.f32.mrf.mxu0
      %v904 = vadd.f32 0.0, %v903
      %v905 = vpop.f32.mrf.mxu0
      %v906 = vpop.f32.mrf.mxu0
      %v907 = vpop.f32.mrf.mxu0
      %908 = vdwg.mxu0
      %v909 = vadd.f32 %v751, %v904
      %910 = vrot.lane.b32.xlu0 %v432, 104
      %v911 = vpop.permute.xlu0 %910
      %912 = vrot.lane.b32.xlu0 %v433, 72
      %v913 = vpop.permute.xlu0 %912
      %v915 = vsel %vm437, %v911, 0
      %v918 = vsel %vm437, %v913, 0
      %920 = vmatprep.subr.bf16.mxu0 0
      %921 = vmatpush1.bf16.xpose.msra.mxu0 0
      %922 = vmatprep.subr.bf16.mxu0 0
      %923 = vmatpush1.bf16.xpose.msra.mxu0 0
      %924 = vmatprep.subr.bf16.mxu0 0
      %925 = vmatpush1.bf16.xpose.msra.mxu0 0
      %926 = vmatprep.subr.bf16.mxu0 0
      %927 = vmatpush1.bf16.xpose.msra.mxu0 0
      %928 = vmatprep.subr.bf16.mxu0 0
      %929 = vmatpush1.bf16.xpose.msra.mxu0 0
      %930 = vmatprep.subr.bf16.mxu0 0
      %931 = vmatpush1.bf16.xpose.msra.mxu0 0
      %932 = vmatprep.subr.bf16.mxu0 0
      %933 = vmatpush1.bf16.xpose.msra.mxu0 0
      %934 = vmatprep.subr.bf16.mxu0 0
      %935 = vmatpush1.bf16.xpose.msra.mxu0 %v918
      %936 = vmatprep.subr.bf16.mxu0 0
      %937 = vmatpush2.bf16.xpose.msra.mxu0 0
      %938 = vmatprep.subr.bf16.mxu0 0
      %939 = vmatpush2.bf16.xpose.msra.mxu0 0
      %940 = vmatprep.subr.bf16.mxu0 0
      %941 = vmatpush2.bf16.xpose.msra.mxu0 0
      %942 = vmatprep.subr.bf16.mxu0 0
      %943 = vmatpush2.bf16.xpose.msra.mxu0 0
      %944 = vmatprep.subr.bf16.mxu0 0
      %945 = vmatpush2.bf16.xpose.msra.mxu0 0
      %946 = vmatprep.subr.bf16.mxu0 0
      %947 = vmatpush2.bf16.xpose.msra.mxu0 0
      %948 = vmatprep.subr.bf16.mxu0 0
      %949 = vmatpush2.bf16.xpose.msra.mxu0 0
      %950 = vmatprep.subr.bf16.mxu0 0
      %951 = vmatpush2.bf16.xpose.msra.mxu0 0
      %952 = vmatprep.mubr.bf16.mxu0 0
      %953 = vmatmul.mubr.bf16.gmra.mxu0 %v915
      %v954 = vpop.f32.mrf.mxu0
      %v955 = vadd.f32 %v418, %v954
      %v956 = vpop.f32.mrf.mxu0
      %v957 = vpop.f32.mrf.mxu0
      %v958 = vpop.f32.mrf.mxu0
      %959 = vdwg.mxu0
      %v960 = vsel %vm437, %v955, -inf
      %961 = vmax.xlane.f32.xlu0 %v960
      %v962 = vpop.xlane.xlu0 %961
      %v963 = vsub.f32 %v955, %v962
      %v964 = vmul.f32 %v963, 1.442695
      %v965 = vpow.pop %v964
      %v966 = vsel %vm437, %v965, 0.0
      %967 = vadd.xlane.f32.xlu0 %v966
      %v968 = vpop.xlane.xlu0 %967
      %v969 = vrcp.pop %v968
      %v970 = vmul.f32 %v965, %v969
      %v971 = vpack.c.bf16 %v970, %v970
      %972 = vrot.lane.b32.xlu0 %v433, 40
      %v973 = vpop.permute.xlu0 %972
      %v975 = vsel %vm437, %v971, 0
      %v978 = vsel %vm501, %v973, 0
      %980 = vmatprep.subr.bf16.mxu0 0
      %981 = vmatpush1.bf16.msra.mxu0 0
      %982 = vmatprep.subr.bf16.mxu0 0
      %983 = vmatpush1.bf16.msra.mxu0 0
      %984 = vmatprep.subr.bf16.mxu0 0
      %985 = vmatpush1.bf16.msra.mxu0 0
      %986 = vmatprep.subr.bf16.mxu0 0
      %987 = vmatpush1.bf16.msra.mxu0 0
      %988 = vmatprep.subr.bf16.mxu0 0
      %989 = vmatpush1.bf16.msra.mxu0 0
      %990 = vmatprep.subr.bf16.mxu0 0
      %991 = vmatpush1.bf16.msra.mxu0 0
      %992 = vmatprep.subr.bf16.mxu0 0
      %993 = vmatpush1.bf16.msra.mxu0 0
      %994 = vmatprep.subr.bf16.mxu0 0
      %995 = vmatpush1.bf16.msra.mxu0 %v978
      %996 = vmatprep.subr.bf16.mxu0 0
      %997 = vmatpush2.bf16.msra.mxu0 0
      %998 = vmatprep.subr.bf16.mxu0 0
      %999 = vmatpush2.bf16.msra.mxu0 0
      %1000 = vmatprep.subr.bf16.mxu0 0
      %1001 = vmatpush2.bf16.msra.mxu0 0
      %1002 = vmatprep.subr.bf16.mxu0 0
      %1003 = vmatpush2.bf16.msra.mxu0 0
      %1004 = vmatprep.subr.bf16.mxu0 0
      %1005 = vmatpush2.bf16.msra.mxu0 0
      %1006 = vmatprep.subr.bf16.mxu0 0
      %1007 = vmatpush2.bf16.msra.mxu0 0
      %1008 = vmatprep.subr.bf16.mxu0 0
      %1009 = vmatpush2.bf16.msra.mxu0 0
      %1010 = vmatprep.subr.bf16.mxu0 0
      %1011 = vmatpush2.bf16.msra.mxu0 0
      %1012 = vmatprep.mubr.bf16.mxu0 0
      %1013 = vmatmul.mubr.bf16.gmra.mxu0 %v975
      %v1014 = vpop.f32.mrf.mxu0
      %v1015 = vadd.f32 0.0, %v1014
      %v1016 = vpop.f32.mrf.mxu0
      %v1017 = vpop.f32.mrf.mxu0
      %v1018 = vpop.f32.mrf.mxu0
      %1019 = vdwg.mxu0
      %v1020 = vpack.c.bf16 %v1015, %v1015
      %v1022 = vsel %vm437, %v1020, 0
      %v1025 = vsel %vm501, %v430, 0
      %1027 = vmatprep.subr.bf16.mxu0 0
      %1028 = vmatpush1.bf16.msra.mxu0 0
      %1029 = vmatprep.subr.bf16.mxu0 0
      %1030 = vmatpush1.bf16.msra.mxu0 0
      %1031 = vmatprep.subr.bf16.mxu0 0
      %1032 = vmatpush1.bf16.msra.mxu0 0
      %1033 = vmatprep.subr.bf16.mxu0 0
      %1034 = vmatpush1.bf16.msra.mxu0 0
      %1035 = vmatprep.subr.bf16.mxu0 0
      %1036 = vmatpush1.bf16.msra.mxu0 0
      %1037 = vmatprep.subr.bf16.mxu0 0
      %1038 = vmatpush1.bf16.msra.mxu0 0
      %1039 = vmatprep.subr.bf16.mxu0 0
      %1040 = vmatpush1.bf16.msra.mxu0 0
      %1041 = vmatprep.subr.bf16.mxu0 0
      %1042 = vmatpush1.bf16.msra.mxu0 %v1025
      %1043 = vmatprep.subr.bf16.mxu0 0
      %1044 = vmatpush2.bf16.msra.mxu0 0
      %1045 = vmatprep.subr.bf16.mxu0 0
      %1046 = vmatpush2.bf16.msra.mxu0 0
      %1047 = vmatprep.subr.bf16.mxu0 0
      %1048 = vmatpush2.bf16.msra.mxu0 0
      %1049 = vmatprep.subr.bf16.mxu0 0
      %1050 = vmatpush2.bf16.msra.mxu0 0
      %1051 = vmatprep.subr.bf16.mxu0 0
      %1052 = vmatpush2.bf16.msra.mxu0 0
      %1053 = vmatprep.subr.bf16.mxu0 0
      %1054 = vmatpush2.bf16.msra.mxu0 0
      %1055 = vmatprep.subr.bf16.mxu0 0
      %1056 = vmatpush2.bf16.msra.mxu0 0
      %1057 = vmatprep.subr.bf16.mxu0 0
      %1058 = vmatpush2.bf16.msra.mxu0 0
      %1059 = vmatprep.mubr.bf16.mxu0 0
      %1060 = vmatmul.mubr.bf16.gmra.mxu0 %v1022
      %v1061 = vpop.f32.mrf.mxu0
      %v1062 = vadd.f32 0.0, %v1061
      %v1063 = vpop.f32.mrf.mxu0
      %v1064 = vpop.f32.mrf.mxu0
      %v1065 = vpop.f32.mrf.mxu0
      %1066 = vdwg.mxu0
      %v1067 = vadd.f32 %v909, %v1062
      %v1068 = vld [vmem:[%s5] sm:$0x1]
      %v1069 = vld [vmem:[%s6] sm:$0x1]
      %v1070 = vsel %vm366, %v1067, 0.0
      %1071 = vadd.xlane.f32.xlu0 %v1070
      %v1072 = vpop.xlane.xlu0 %1071
      %v1073 = vrcp.pop 32.0
      %v1074 = vmul.f32 %v1072, %v1073
      %v1075 = vsub.f32 %v1067, %v1074
      %v1076 = vmul.f32 %v1075, %v1075
      %v1077 = vsel %vm366, %v1076, 0.0
      %1078 = vadd.xlane.f32.xlu0 %v1077
      %v1079 = vpop.xlane.xlu0 %1078
      %v1080 = vmul.f32 %v1079, %v1073
      %v1081 = vadd.f32 %v1080, 1e-05
      %v1082 = vrsqrt.pop %v1081
      %v1083 = vmul.f32 %v1075, %v1082
      %v1084 = vunpack.c.l.bf16 %v1068
      %v1085 = vlaneseq
      %v1086 = vshrl.u32 %v1085, 7
      %v1087 = vsub.s32 0, %v1086
      %v1088 = vrot.slane %v1084, %v1087
      %v1089 = vmul.f32 %v1083, %v1088
      %v1090 = vunpack.c.l.bf16 %v1069
      %v1091 = vlaneseq
      %v1092 = vshrl.u32 %v1091, 7
      %v1093 = vsub.s32 0, %v1092
      %v1094 = vrot.slane %v1090, %v1093
      %v1095 = vadd.f32 %v1089, %v1094
      %v1096 = vpack.c.bf16 %v1095, %v1095
      %vm1097 = vcmask 257024
      %1098 = vst.msk [vmem:[%s341] sm:$0xf] %vm1097, %v1096
      %p1099 = scmp.lt.s32.totalorder %s20, 1
      %s1100 = scalar_select %p1099, %s20, 1
      %s1101 = smul.addr %s1100, 4
      %s1102 = scalar_lea.vmem %s9, %s1101
      // Predicated region
      $region57: #{transformer_decoder.7} parent=55 // pred_check
        %p1103 = pneg %p237
      $region58: #{transformer_decoder.7} parent=55 // pred_check_branch
        %1105 = sbr.rel (%p1103) target = $region60
      $region59: #{transformer_decoder.7} parent=55 // pred_region
        _
      $region60: #{transformer_decoder.7} parent=55 // pred_fallthru
        _
    $region56: #{transformer_decoder.7} parent=5 // pred_fallthru
      _
    %p1106 = scmp.le.s32.totalorder 2, %s15
    // Predicated region
    $region61: #{transformer_decoder.7} parent=5 // pred_check
      %p1107 = pneg %p1106
    $region62: #{transformer_decoder.7} parent=5 // pred_check_branch
      %1109 = sbr.rel (%p1107) target = $region64
    $region63: #{transformer_decoder.7} parent=5 // pred_region
      %s1110 = ssub.s32 %s15, 2
      // Predicated region
      $region65: #{transformer_decoder.7} parent=63 // pred_check
        %p1111 = pneg %p243
      $region66: #{transformer_decoder.7} parent=63 // pred_check_branch
        %1113 = sbr.rel (%p1111) target = $region68
      $region67: #{transformer_decoder.7} parent=63 // pred_region
        %p1114 = scmp.lt.s32.totalorder %s21, 1
        %s1115 = scalar_select %p1114, %s21, 1
        %s1116 = smul.addr %s1115, 4
        %s1117 = scalar_lea.vmem %s9, %s1116
      $region68: #{transformer_decoder.7} parent=63 // pred_fallthru
        _
    $region64: #{transformer_decoder.7} parent=5 // pred_fallthru
      _
  $region6: #{transformer_decoder.7} parent=0 // loop_footer
    %s19 = sadd.s32 1, %s15
  $region7: #{transformer_decoder.7} parent=0 // loop_footer_branch
    %14 = sbr.rel target = $region3
  $region8: #{transformer_decoder.7} parent=0 // loop_exit
    _

// kernel: transformer_decoder.8
$region0: #{transformer_decoder.8}
  #allocation0 [shape = 'u32[]', space=smem, size = 0x4, offset = 0x4, fixed_abs, tag = 'smem constant byte address 0x4 - core index']
  #allocation1 [shape = 'u32[144,128]{1,0:T(1,128)}', space=vmem, size = 0x12000, scoped, tag = 'internal scratch']
  %s0 = inlined_call_operand.vmem [shape: bf16[2,8,32], index: 0, kind: input, shape index: {}]
  %s1 = inlined_call_operand.vmem [shape: bf16[2,8,32], index: 1, kind: input, shape index: {}]
  %s2 = inlined_call_operand.vmem [shape: bf16[32,32], index: 2, kind: input, shape index: {}]
  %s3 = inlined_call_operand.vmem [shape: bf16[1,32], index: 3, kind: input, shape index: {}]
  %s4 = inlined_call_operand.vmem [shape: bf16[32,64], index: 4, kind: input, shape index: {}]
  %s5 = inlined_call_operand.vmem [shape: bf16[1,64], index: 5, kind: input, shape index: {}]
  %s6 = inlined_call_operand.vmem [shape: bf16[32,32], index: 6, kind: input, shape index: {}]
  %s7 = inlined_call_operand.vmem [shape: bf16[1,32], index: 7, kind: input, shape index: {}]
  %s8 = inlined_call_operand.vmem [shape: bf16[1,32], index: 8, kind: input, shape index: {}]
  %s9 = inlined_call_operand.vmem [shape: bf16[1,32], index: 9, kind: input, shape index: {}]
  %s10 = inlined_call_operand.vmem [shape: f32[2,1,8], index: 10, kind: input, shape index: {}]
  %s11 = inlined_call_operand.vmem [shape: bf16[2,8,32], index: 11, kind: output, shape index: {}]
  %s12 = sld [smem:[#allocation0]]
  $region77: #{transformer_decoder.8} parent=0
    _
  %s14 = ssub.s32 1, %s12
  %s15 = scalar_select 0, %s14, %s12
  loop: start=0, step=1, limit=4
  $region2: #{transformer_decoder.8} parent=0 // loop_pre_header
    _
  $region3: #{transformer_decoder.8} parent=0 // loop_header
    %s17 = sphi 0, %s21
    %p18 = scmp.ge.s32.totalorder %s17, 4
    %s27 = sphi 0, %s29
    %s30 = sphi 0, %s27
    %s31 = sphi 0, %s30
    %s47 = sphi 0, %s31
    %s53 = sphi 0, %s55
    %s56 = sphi 0, %s53
    %s57 = sphi 0, %s56
    %s73 = sphi 0, %s57
    %s77 = sphi 0, %s77
    %s79 = sphi 0, %s77
    %s80 = sphi 0, %s79
    %s94 = sphi 0, %s80
    %s98 = sphi 0, %s98
    %s100 = sphi 0, %s98
    %s101 = sphi 0, %s100
    %s115 = sphi 0, %s101
    %s119 = sphi 0, %s119
    %s121 = sphi 0, %s119
    %s122 = sphi 0, %s121
    %s136 = sphi 0, %s122
    %s140 = sphi 0, %s140
    %s142 = sphi 0, %s140
    %s143 = sphi 0, %s142
    %s157 = sphi 0, %s143
    %s161 = sphi 0, %s161
    %s163 = sphi 0, %s161
    %s164 = sphi 0, %s163
    %s178 = sphi 0, %s164
    %s182 = sphi 0, %s182
    %s184 = sphi 0, %s182
    %s185 = sphi 0, %s184
    %s199 = sphi 0, %s185
    %s203 = sphi 0, %s203
    %s205 = sphi 0, %s203
    %s206 = sphi 0, %s205
    %s220 = sphi 0, %s206
    %s224 = sphi 0, %s224
    %s226 = sphi 0, %s224
    %s227 = sphi 0, %s226
    %s241 = sphi 0, %s227
    %s247 = sphi 0, %s249
    %s250 = sphi 0, %s247
    %s251 = sphi 0, %s250
    %s267 = sphi 0, %s251
    %s273 = sphi 0, %s275
    %s276 = sphi 0, %s273
    %s277 = sphi 0, %s276
    %s293 = sphi 0, %s277
  $region4: #{transformer_decoder.8} parent=0 // loop_header_branch
    %20 = sbr.rel (%p18) target = $region8
  $region5: #{transformer_decoder.8} parent=0 // loop_body
    %s22 = ssub.s32 %s17, 1
    %s23 = ssub.s32 %s17, 2
    %s24 = sadd.s32 %s17, 1
    %s25 = ssub.s32 %s17, %s24
    %p26 = scmp.eq.s32.totalorder %s25, 0
    %s28 = sadd.s32 %s27, 1
    %s29 = scalar_select %p26, %s27, %s28
    %p32 = pneg %p26
    %p33 = scmp.eq.s32.totalorder %s17, 1
    %p34 = por %p32, %p33
    %p35 = scmp.ne.s32.totalorder %s27, %s30
    %p36 = scmp.eq.s32.totalorder %s17, 0
    %p37 = por %p35, %p36
    %p38 = scmp.ne.s32.totalorder %s27, %s30
    %p39 = scmp.eq.s32.totalorder %s22, 1
    %p40 = por %p38, %p39
    %p41 = scmp.ne.s32.totalorder %s30, %s31
    %p42 = scmp.eq.s32.totalorder %s22, 0
    %p43 = por %p41, %p42
    %p44 = scmp.ne.s32.totalorder %s30, %s31
    %p45 = scmp.eq.s32.totalorder %s23, 1
    %p46 = por %p44, %p45
    %p48 = scmp.ne.s32.totalorder %s31, %s47
    %p49 = scmp.eq.s32.totalorder %s23, 0
    %p50 = por %p48, %p49
    %s51 = ssub.s32 %s17, %s24
    %p52 = scmp.eq.s32.totalorder %s51, 0
    %s54 = sadd.s32 %s53, 1
    %s55 = scalar_select %p52, %s53, %s54
    %p58 = pneg %p52
    %p59 = scmp.eq.s32.totalorder %s17, 1
    %p60 = por %p58, %p59
    %p61 = scmp.ne.s32.totalorder %s53, %s56
    %p62 = scmp.eq.s32.totalorder %s17, 0
    %p63 = por %p61, %p62
    %p64 = scmp.ne.s32.totalorder %s53, %s56
    %p65 = scmp.eq.s32.totalorder %s22, 1
    %p66 = por %p64, %p65
    %p67 = scmp.ne.s32.totalorder %s56, %s57
    %p68 = scmp.eq.s32.totalorder %s22, 0
    %p69 = por %p67, %p68
    %p70 = scmp.ne.s32.totalorder %s56, %s57
    %p71 = scmp.eq.s32.totalorder %s23, 1
    %p72 = por %p70, %p71
    %p74 = scmp.ne.s32.totalorder %s57, %s73
    %p75 = scmp.eq.s32.totalorder %s23, 0
    %p76 = por %p74, %p75
    %s78 = sadd.s32 %s77, 1
    %p81 = scmp.eq.s32.totalorder %s17, 1
    %p82 = scmp.ne.s32.totalorder %s77, %s79
    %p83 = scmp.eq.s32.totalorder %s17, 0
    %p84 = por %p82, %p83
    %p85 = scmp.ne.s32.totalorder %s77, %s79
    %p86 = scmp.eq.s32.totalorder %s22, 1
    %p87 = por %p85, %p86
    %p88 = scmp.ne.s32.totalorder %s79, %s80
    %p89 = scmp.eq.s32.totalorder %s22, 0
    %p90 = por %p88, %p89
    %p91 = scmp.ne.s32.totalorder %s79, %s80
    %p92 = scmp.eq.s32.totalorder %s23, 1
    %p93 = por %p91, %p92
    %p95 = scmp.ne.s32.totalorder %s80, %s94
    %p96 = scmp.eq.s32.totalorder %s23, 0
    %p97 = por %p95, %p96
    %s99 = sadd.s32 %s98, 1
    %p102 = scmp.eq.s32.totalorder %s17, 1
    %p103 = scmp.ne.s32.totalorder %s98, %s100
    %p104 = scmp.eq.s32.totalorder %s17, 0
    %p105 = por %p103, %p104
    %p106 = scmp.ne.s32.totalorder %s98, %s100
    %p107 = scmp.eq.s32.totalorder %s22, 1
    %p108 = por %p106, %p107
    %p109 = scmp.ne.s32.totalorder %s100, %s101
    %p110 = scmp.eq.s32.totalorder %s22, 0
    %p111 = por %p109, %p110
    %p112 = scmp.ne.s32.totalorder %s100, %s101
    %p113 = scmp.eq.s32.totalorder %s23, 1
    %p114 = por %p112, %p113
    %p116 = scmp.ne.s32.totalorder %s101, %s115
    %p117 = scmp.eq.s32.totalorder %s23, 0
    %p118 = por %p116, %p117
    %s120 = sadd.s32 %s119, 1
    %p123 = scmp.eq.s32.totalorder %s17, 1
    %p124 = scmp.ne.s32.totalorder %s119, %s121
    %p125 = scmp.eq.s32.totalorder %s17, 0
    %p126 = por %p124, %p125
    %p127 = scmp.ne.s32.totalorder %s119, %s121
    %p128 = scmp.eq.s32.totalorder %s22, 1
    %p129 = por %p127, %p128
    %p130 = scmp.ne.s32.totalorder %s121, %s122
    %p131 = scmp.eq.s32.totalorder %s22, 0
    %p132 = por %p130, %p131
    %p133 = scmp.ne.s32.totalorder %s121, %s122
    %p134 = scmp.eq.s32.totalorder %s23, 1
    %p135 = por %p133, %p134
    %p137 = scmp.ne.s32.totalorder %s122, %s136
    %p138 = scmp.eq.s32.totalorder %s23, 0
    %p139 = por %p137, %p138
    %s141 = sadd.s32 %s140, 1
    %p144 = scmp.eq.s32.totalorder %s17, 1
    %p145 = scmp.ne.s32.totalorder %s140, %s142
    %p146 = scmp.eq.s32.totalorder %s17, 0
    %p147 = por %p145, %p146
    %p148 = scmp.ne.s32.totalorder %s140, %s142
    %p149 = scmp.eq.s32.totalorder %s22, 1
    %p150 = por %p148, %p149
    %p151 = scmp.ne.s32.totalorder %s142, %s143
    %p152 = scmp.eq.s32.totalorder %s22, 0
    %p153 = por %p151, %p152
    %p154 = scmp.ne.s32.totalorder %s142, %s143
    %p155 = scmp.eq.s32.totalorder %s23, 1
    %p156 = por %p154, %p155
    %p158 = scmp.ne.s32.totalorder %s143, %s157
    %p159 = scmp.eq.s32.totalorder %s23, 0
    %p160 = por %p158, %p159
    %s162 = sadd.s32 %s161, 1
    %p165 = scmp.eq.s32.totalorder %s17, 1
    %p166 = scmp.ne.s32.totalorder %s161, %s163
    %p167 = scmp.eq.s32.totalorder %s17, 0
    %p168 = por %p166, %p167
    %p169 = scmp.ne.s32.totalorder %s161, %s163
    %p170 = scmp.eq.s32.totalorder %s22, 1
    %p171 = por %p169, %p170
    %p172 = scmp.ne.s32.totalorder %s163, %s164
    %p173 = scmp.eq.s32.totalorder %s22, 0
    %p174 = por %p172, %p173
    %p175 = scmp.ne.s32.totalorder %s163, %s164
    %p176 = scmp.eq.s32.totalorder %s23, 1
    %p177 = por %p175, %p176
    %p179 = scmp.ne.s32.totalorder %s164, %s178
    %p180 = scmp.eq.s32.totalorder %s23, 0
    %p181 = por %p179, %p180
    %s183 = sadd.s32 %s182, 1
    %p186 = scmp.eq.s32.totalorder %s17, 1
    %p187 = scmp.ne.s32.totalorder %s182, %s184
    %p188 = scmp.eq.s32.totalorder %s17, 0
    %p189 = por %p187, %p188
    %p190 = scmp.ne.s32.totalorder %s182, %s184
    %p191 = scmp.eq.s32.totalorder %s22, 1
    %p192 = por %p190, %p191
    %p193 = scmp.ne.s32.totalorder %s184, %s185
    %p194 = scmp.eq.s32.totalorder %s22, 0
    %p195 = por %p193, %p194
    %p196 = scmp.ne.s32.totalorder %s184, %s185
    %p197 = scmp.eq.s32.totalorder %s23, 1
    %p198 = por %p196, %p197
    %p200 = scmp.ne.s32.totalorder %s185, %s199
    %p201 = scmp.eq.s32.totalorder %s23, 0
    %p202 = por %p200, %p201
    %s204 = sadd.s32 %s203, 1
    %p207 = scmp.eq.s32.totalorder %s17, 1
    %p208 = scmp.ne.s32.totalorder %s203, %s205
    %p209 = scmp.eq.s32.totalorder %s17, 0
    %p210 = por %p208, %p209
    %p211 = scmp.ne.s32.totalorder %s203, %s205
    %p212 = scmp.eq.s32.totalorder %s22, 1
    %p213 = por %p211, %p212
    %p214 = scmp.ne.s32.totalorder %s205, %s206
    %p215 = scmp.eq.s32.totalorder %s22, 0
    %p216 = por %p214, %p215
    %p217 = scmp.ne.s32.totalorder %s205, %s206
    %p218 = scmp.eq.s32.totalorder %s23, 1
    %p219 = por %p217, %p218
    %p221 = scmp.ne.s32.totalorder %s206, %s220
    %p222 = scmp.eq.s32.totalorder %s23, 0
    %p223 = por %p221, %p222
    %s225 = sadd.s32 %s224, 1
    %p228 = scmp.eq.s32.totalorder %s17, 1
    %p229 = scmp.ne.s32.totalorder %s224, %s226
    %p230 = scmp.eq.s32.totalorder %s17, 0
    %p231 = por %p229, %p230
    %p232 = scmp.ne.s32.totalorder %s224, %s226
    %p233 = scmp.eq.s32.totalorder %s22, 1
    %p234 = por %p232, %p233
    %p235 = scmp.ne.s32.totalorder %s226, %s227
    %p236 = scmp.eq.s32.totalorder %s22, 0
    %p237 = por %p235, %p236
    %p238 = scmp.ne.s32.totalorder %s226, %s227
    %p239 = scmp.eq.s32.totalorder %s23, 1
    %p240 = por %p238, %p239
    %p242 = scmp.ne.s32.totalorder %s227, %s241
    %p243 = scmp.eq.s32.totalorder %s23, 0
    %p244 = por %p242, %p243
    %s245 = ssub.s32 %s17, %s24
    %p246 = scmp.eq.s32.totalorder %s245, 0
    %s248 = sadd.s32 %s247, 1
    %s249 = scalar_select %p246, %s247, %s248
    %p252 = pneg %p246
    %p253 = scmp.eq.s32.totalorder %s17, 1
    %p254 = por %p252, %p253
    %p255 = scmp.ne.s32.totalorder %s247, %s250
    %p256 = scmp.eq.s32.totalorder %s17, 0
    %p257 = por %p255, %p256
    %p258 = scmp.ne.s32.totalorder %s247, %s250
    %p259 = scmp.eq.s32.totalorder %s22, 1
    %p260 = por %p258, %p259
    %p261 = scmp.ne.s32.totalorder %s250, %s251
    %p262 = scmp.eq.s32.totalorder %s22, 0
    %p263 = por %p261, %p262
    %p264 = scmp.ne.s32.totalorder %s250, %s251
    %p265 = scmp.eq.s32.totalorder %s23, 1
    %p266 = por %p264, %p265
    %p268 = scmp.ne.s32.totalorder %s251, %s267
    %p269 = scmp.eq.s32.totalorder %s23, 0
    %p270 = por %p268, %p269
    %s271 = ssub.s32 %s17, %s24
    %p272 = scmp.eq.s32.totalorder %s271, 0
    %s274 = sadd.s32 %s273, 1
    %s275 = scalar_select %p272, %s273, %s274
    %p278 = pneg %p272
    %p279 = scmp.eq.s32.totalorder %s17, 1
    %p280 = por %p278, %p279
    %p281 = scmp.ne.s32.totalorder %s273, %s276
    %p282 = scmp.eq.s32.totalorder %s17, 0
    %p283 = por %p281, %p282
    %p284 = scmp.ne.s32.totalorder %s273, %s276
    %p285 = scmp.eq.s32.totalorder %s22, 1
    %p286 = por %p284, %p285
    %p287 = scmp.ne.s32.totalorder %s276, %s277
    %p288 = scmp.eq.s32.totalorder %s22, 0
    %p289 = por %p287, %p288
    %p290 = scmp.ne.s32.totalorder %s276, %s277
    %p291 = scmp.eq.s32.totalorder %s23, 1
    %p292 = por %p290, %p291
    %p294 = scmp.ne.s32.totalorder %s277, %s293
    %p295 = scmp.eq.s32.totalorder %s23, 0
    %p296 = por %p294, %p295
    %p297 = scmp.le.s32.totalorder 1, %s17
    %p298 = scmp.lt.s32.totalorder %s17, 3
    %p299 = pnand %p297, %p298
    %p300 = pneg %p299
    // Predicated region
    $region9: #{transformer_decoder.8} parent=5 // pred_check
      _
    $region10: #{transformer_decoder.8} parent=5 // pred_check_branch
      %302 = sbr.rel (%p299) target = $region12
    $region11: #{transformer_decoder.8} parent=5 // pred_region
      %s303 = ssub.s32 %s17, 1
      // Predicated region
      $region13: #{transformer_decoder.8} parent=11 // pred_check
        %p304 = pneg %p90
      $region14: #{transformer_decoder.8} parent=11 // pred_check_branch
        %306 = sbr.rel (%p304) target = $region16
      $region15: #{transformer_decoder.8} parent=11 // pred_region
        _
      $region16: #{transformer_decoder.8} parent=11 // pred_fallthru
        _
      // Predicated region
      $region17: #{transformer_decoder.8} parent=11 // pred_check
        %p307 = pneg %p111
      $region18: #{transformer_decoder.8} parent=11 // pred_check_branch
        %309 = sbr.rel (%p307) target = $region20
      $region19: #{transformer_decoder.8} parent=11 // pred_region
        _
      $region20: #{transformer_decoder.8} parent=11 // pred_fallthru
        _
      // Predicated region
      $region21: #{transformer_decoder.8} parent=11 // pred_check
        %p310 = pneg %p132
      $region22: #{transformer_decoder.8} parent=11 // pred_check_branch
        %312 = sbr.rel (%p310) target = $region24
      $region23: #{transformer_decoder.8} parent=11 // pred_region
        _
      $region24: #{transformer_decoder.8} parent=11 // pred_fallthru
        _
      // Predicated region
      $region25: #{transformer_decoder.8} parent=11 // pred_check
        %p313 = pneg %p153
      $region26: #{transformer_decoder.8} parent=11 // pred_check_branch
        %315 = sbr.rel (%p313) target = $region28
      $region27: #{transformer_decoder.8} parent=11 // pred_region
        _
      $region28: #{transformer_decoder.8} parent=11 // pred_fallthru
        _
      // Predicated region
      $region29: #{transformer_decoder.8} parent=11 // pred_check
        %p316 = pneg %p174
      $region30: #{transformer_decoder.8} parent=11 // pred_check_branch
        %318 = sbr.rel (%p316) target = $region32
      $region31: #{transformer_decoder.8} parent=11 // pred_region
        _
      $region32: #{transformer_decoder.8} parent=11 // pred_fallthru
        _
      // Predicated region
      $region33: #{transformer_decoder.8} parent=11 // pred_check
        %p319 = pneg %p195
      $region34: #{transformer_decoder.8} parent=11 // pred_check_branch
        %321 = sbr.rel (%p319) target = $region36
      $region35: #{transformer_decoder.8} parent=11 // pred_region
        _
      $region36: #{transformer_decoder.8} parent=11 // pred_fallthru
        _
      // Predicated region
      $region37: #{transformer_decoder.8} parent=11 // pred_check
        %p322 = pneg %p216
      $region38: #{transformer_decoder.8} parent=11 // pred_check_branch
        %324 = sbr.rel (%p322) target = $region40
      $region39: #{transformer_decoder.8} parent=11 // pred_region
        _
      $region40: #{transformer_decoder.8} parent=11 // pred_fallthru
        _
      // Predicated region
      $region41: #{transformer_decoder.8} parent=11 // pred_check
        %p325 = pneg %p237
      $region42: #{transformer_decoder.8} parent=11 // pred_check_branch
        %327 = sbr.rel (%p325) target = $region44
      $region43: #{transformer_decoder.8} parent=11 // pred_region
        _
      $region44: #{transformer_decoder.8} parent=11 // pred_fallthru
        _
    $region12: #{transformer_decoder.8} parent=5 // pred_fallthru
      _
    %p328 = scmp.lt.s32.totalorder %s17, 2
    // Predicated region
    $region45: #{transformer_decoder.8} parent=5 // pred_check
      %p329 = pneg %p328
    $region46: #{transformer_decoder.8} parent=5 // pred_check_branch
      %331 = sbr.rel (%p329) target = $region48
    $region47: #{transformer_decoder.8} parent=5 // pred_region
      // Predicated region
      $region49: #{transformer_decoder.8} parent=47 // pred_check
        %p332 = pneg %p37
      $region50: #{transformer_decoder.8} parent=47 // pred_check_branch
        %334 = sbr.rel (%p332) target = $region52
      $region51: #{transformer_decoder.8} parent=47 // pred_region
        %p335 = scmp.lt.s32.totalorder %s17, 1
        %s336 = scalar_select %p335, %s17, 1
        %s337 = smul.addr %s336, 4
        %s338 = scalar_lea.vmem %s0, %s337
      $region52: #{transformer_decoder.8} parent=47 // pred_fallthru
        _
      // Predicated region
      $region53: #{transformer_decoder.8} parent=47 // pred_check
        %p339 = pneg %p63
      $region54: #{transformer_decoder.8} parent=47 // pred_check_branch
        %341 = sbr.rel (%p339) target = $region56
      $region55: #{transformer_decoder.8} parent=47 // pred_region
        %p342 = scmp.lt.s32.totalorder %s17, 1
        %s343 = scalar_select %p342, %s17, 1
        %s344 = smul.addr %s343, 4
        %s345 = scalar_lea.vmem %s1, %s344
      $region56: #{transformer_decoder.8} parent=47 // pred_fallthru
        _
      // Predicated region
      $region57: #{transformer_decoder.8} parent=47 // pred_check
        %p346 = pneg %p257
      $region58: #{transformer_decoder.8} parent=47 // pred_check_branch
        %348 = sbr.rel (%p346) target = $region60
      $region59: #{transformer_decoder.8} parent=47 // pred_region
        %p349 = scmp.lt.s32.totalorder %s17, 1
        %s350 = scalar_select %p349, %s17, 1
        %s351 = scalar_lea.vmem %s10, %s350
      $region60: #{transformer_decoder.8} parent=47 // pred_fallthru
        _
    $region48: #{transformer_decoder.8} parent=5 // pred_fallthru
      _
    %p352 = scmp.le.s32.totalorder 1, %s17
    %p353 = scmp.lt.s32.totalorder %s17, 3
    %p354 = pnand %p352, %p353
    %p355 = pneg %p354
    // Predicated region
    $region61: #{transformer_decoder.8} parent=5 // pred_check
      _
    $region62: #{transformer_decoder.8} parent=5 // pred_check_branch
      %357 = sbr.rel (%p354) target = $region64
    $region63: #{transformer_decoder.8} parent=5 // pred_region
      %s358 = ssub.s32 %s17, 1
      %p359 = scmp.lt.s32.totalorder %s22, 1
      %s360 = scalar_select %p359, %s22, 1
      %s361 = smul.addr %s360, 4
      %s362 = scalar_lea.vmem %s0, %s361
      %p363 = pneg %p43
      %p364 = pneg %p40
      %p365 = scmp.lt.s32.totalorder %s22, 1
      %s366 = scalar_select %p365, %s22, 1
      %s367 = smul.addr %s366, 4
      %s368 = scalar_lea.vmem %s1, %s367
      %p369 = pneg %p69
      %p370 = pneg %p66
      %p371 = pneg %p90
      %p372 = pneg %p87
      %p373 = pneg %p111
      %p374 = pneg %p108
      %p375 = pneg %p132
      %p376 = pneg %p129
      %p377 = pneg %p153
      %p378 = pneg %p150
      %p379 = pneg %p174
      %p380 = pneg %p171
      %p381 = pneg %p195
      %p382 = pneg %p192
      %p383 = pneg %p216
      %p384 = pneg %p213
      %p385 = pneg %p237
      %p386 = pneg %p234
      %p387 = scmp.lt.s32.totalorder %s22, 1
      %s388 = scalar_select %p387, %s22, 1
      %s389 = scalar_lea.vmem %s10, %s388
      %p390 = pneg %p263
      %p391 = pneg %p260
      %p392 = pneg %p289
      %p393 = pneg %p286
      %p394 = scmp.lt.s32.totalorder %s22, 1
      %s395 = scalar_select %p394, %s22, 1
      %s396 = smul.addr %s395, 4
      %s397 = scalar_lea.vmem %s11, %s396
      %p398 = scmp.lt.s32.totalorder %s22, 1
      %s399 = scalar_select %p398, %s22, 1
      %s400 = smul.addr %s399, 4
      %s401 = scalar_lea.vmem %s0, %s400
      %p402 = scmp.lt.s32.totalorder %s22, 1
      %s403 = scalar_select %p402, %s22, 1
      %s404 = smul.addr %s403, 4
      %s405 = scalar_lea.vmem %s1, %s404
      %p406 = scmp.lt.s32.totalorder %s22, 1
      %s407 = scalar_select %p406, %s22, 1
      %s408 = scalar_lea.vmem %s10, %s407
      %p409 = scmp.lt.s32.totalorder %s22, 1
      %s410 = scalar_select %p409, %s22, 1
      %s411 = smul.addr %s410, 4
      %s412 = scalar_lea.vmem %s11, %s411
      %v414 = vld [vmem:[%s401] sm:$0xf]
      %v415 = vld [vmem:[%s405] sm:$0xf]
      %v416 = vld [vmem:[%s2] sm:$0xf]
      %v417 = vld [vmem:[%s2 + $0x4] sm:$0xf]
      %v418 = vld [vmem:[%s2 + $0x8] sm:$0xf]
      %v419 = vld [vmem:[%s2 + $0xc] sm:$0xf]
      %v420 = vld [vmem:[%s3] sm:$0x1]
      %v421 = vunpack.c.l.bf16 %v420
      %v422 = vlaneseq
      %v423 = vshrl.u32 %v422, 7
      %v424 = vsub.s32 0, %v423
      %v425 = vrot.slane %v421, %v424
      %v430 = vunpack.c.l.b16 %v416
      %v431 = vunpack.c.l.b16 %v417
      %v432 = vunpack.c.l.b16 %v418
      %v433 = vunpack.c.l.b16 %v419
      %v434 = vpack.c.b16 %v431, %v430
      %v435 = vpack.c.b16 %v433, %v432
      %vm438 = vcmask 261120
      %v440 = vsel %vm438, %v414, 0
      %442 = vmatprep.subr.bf16.mxu0 0
      %443 = vmatpush1.bf16.msra.mxu0 0
      %444 = vmatprep.subr.bf16.mxu0 0
      %445 = vmatpush1.bf16.msra.mxu0 0
      %446 = vmatprep.subr.bf16.mxu0 0
      %447 = vmatpush1.bf16.msra.mxu0 0
      %448 = vmatprep.subr.bf16.mxu0 0
      %449 = vmatpush1.bf16.msra.mxu0 0
      %450 = vmatprep.subr.bf16.mxu0 0
      %451 = vmatpush1.bf16.msra.mxu0 0
      %452 = vmatprep.subr.bf16.mxu0 0
      %453 = vmatpush1.bf16.msra.mxu0 0
      %454 = vmatprep.subr.bf16.mxu0 0
      %455 = vmatpush1.bf16.msra.mxu0 %v435
      %456 = vmatprep.subr.bf16.mxu0 0
      %457 = vmatpush1.bf16.msra.mxu0 %v434
      %458 = vmatprep.subr.bf16.mxu0 0
      %459 = vmatpush2.bf16.msra.mxu0 0
      %460 = vmatprep.subr.bf16.mxu0 0
      %461 = vmatpush2.bf16.msra.mxu0 0
      %462 = vmatprep.subr.bf16.mxu0 0
      %463 = vmatpush2.bf16.msra.mxu0 0
      %464 = vmatprep.subr.bf16.mxu0 0
      %465 = vmatpush2.bf16.msra.mxu0 0
      %466 = vmatprep.subr.bf16.mxu0 0
      %467 = vmatpush2.bf16.msra.mxu0 0
      %468 = vmatprep.subr.bf16.mxu0 0
      %469 = vmatpush2.bf16.msra.mxu0 0
      %470 = vmatprep.subr.bf16.mxu0 0
      %471 = vmatpush2.bf16.msra.mxu0 0
      %472 = vmatprep.subr.bf16.mxu0 0
      %473 = vmatpush2.bf16.msra.mxu0 0
      %474 = vmatprep.mubr.bf16.mxu0 0
      %475 = vmatmul.mubr.bf16.gmra.mxu0 %v440
      %v476 = vpop.f32.mrf.mxu0
      %v477 = vadd.f32 %v425, %v476
      %v478 = vpop.f32.mrf.mxu0
      %v479 = vpop.f32.mrf.mxu0
      %v480 = vpop.f32.mrf.mxu0
      %481 = vdwg.mxu0
      %v482 = vld [vmem:[%s4] sm:$0xf]
      %v483 = vld [vmem:[%s4 + $0x4] sm:$0xf]
      %v484 = vld [vmem:[%s4 + $0x8] sm:$0xf]
      %v485 = vld [vmem:[%s4 + $0xc] sm:$0xf]
      %v486 = vld [vmem:[%s5] sm:$0x1]
      %v487 = vunpack.c.l.bf16 %v486
      %v488 = vlaneseq
      %v489 = vshrl.u32 %v488, 7
      %v490 = vsub.s32 0, %v489
      %v491 = vrot.slane %v487, %v490
      %v496 = vunpack.c.l.b16 %v482
      %v497 = vunpack.c.l.b16 %v483
      %v498 = vunpack.c.l.b16 %v484
      %v499 = vunpack.c.l.b16 %v485
      %v500 = vpack.c.b16 %v497, %v496
      %v501 = vpack.c.b16 %v499, %v498
      %v505 = vsel %vm438, %v415, 0
      %507 = vmatprep.subr.bf16.mxu0 0
      %508 = vmatpush1.bf16.msra.mxu0 0
      %509 = vmatprep.subr.bf16.mxu0 0
      %510 = vmatpush1.bf16.msra.mxu0 0
      %511 = vmatprep.subr.bf16.mxu0 0
      %512 = vmatpush1.bf16.msra.mxu0 0
      %513 = vmatprep.subr.bf16.mxu0 0
      %514 = vmatpush1.bf16.msra.mxu0 0
      %515 = vmatprep.subr.bf16.mxu0 0
      %516 = vmatpush1.bf16.msra.mxu0 0
      %517 = vmatprep.subr.bf16.mxu0 0
      %518 = vmatpush1.bf16.msra.mxu0 0
      %519 = vmatprep.subr.bf16.mxu0 0
      %520 = vmatpush1.bf16.msra.mxu0 %v501
      %521 = vmatprep.subr.bf16.mxu0 0
      %522 = vmatpush1.bf16.msra.mxu0 %v500
      %523 = vmatprep.subr.bf16.mxu0 0
      %524 = vmatpush2.bf16.msra.mxu0 0
      %525 = vmatprep.subr.bf16.mxu0 0
      %526 = vmatpush2.bf16.msra.mxu0 0
      %527 = vmatprep.subr.bf16.mxu0 0
      %528 = vmatpush2.bf16.msra.mxu0 0
      %529 = vmatprep.subr.bf16.mxu0 0
      %530 = vmatpush2.bf16.msra.mxu0 0
      %531 = vmatprep.subr.bf16.mxu0 0
      %532 = vmatpush2.bf16.msra.mxu0 0
      %533 = vmatprep.subr.bf16.mxu0 0
      %534 = vmatpush2.bf16.msra.mxu0 0
      %535 = vmatprep.subr.bf16.mxu0 0
      %536 = vmatpush2.bf16.msra.mxu0 0
      %537 = vmatprep.subr.bf16.mxu0 0
      %538 = vmatpush2.bf16.msra.mxu0 0
      %539 = vmatprep.mubr.bf16.mxu0 0
      %540 = vmatmul.mubr.bf16.gmra.mxu0 %v505
      %v541 = vpop.f32.mrf.mxu0
      %v542 = vadd.f32 %v491, %v541
      %v543 = vpop.f32.mrf.mxu0
      %v544 = vpop.f32.mrf.mxu0
      %v545 = vpop.f32.mrf.mxu0
      %546 = vdwg.mxu0
      %v547 = vld [vmem:[%s408] sm:$0x1]
      %v548 = vunpack.c.l.bf16 %v414
      %v549 = vld [vmem:[%s7] sm:$0x1]
      %v550 = vunpack.c.l.bf16 %v549
      %v551 = vlaneseq
      %v552 = vshrl.u32 %v551, 7
      %v553 = vsub.s32 0, %v552
      %v554 = vrot.slane %v550, %v553
      %v555 = vadd.f32 %v548, %v554
      %v556 = vld [vmem:[%s6] sm:$0xf]
      %v557 = vld [vmem:[%s6 + $0x4] sm:$0xf]
      %v558 = vld [vmem:[%s6 + $0x8] sm:$0xf]
      %v559 = vld [vmem:[%s6 + $0xc] sm:$0xf]
      %v560 = vmul.f32 %v477, 0.35355338
      %v561 = vpack.c.bf16 %v560, %v560
      %v562 = vpack.c.bf16 %v542, %v542
      %v564 = vlaneseq
      %v565 = vshrl.u32 %v564, 7
      %v566 = vsub.s32 0, %v565
      %v567 = vrot.slane %v547, %v566
      %vm569 = vcmask 64512
      %v571 = vsel %vm569, %v561, 0
      %v574 = vsel %vm569, %v562, 0
      %576 = vmatprep.subr.bf16.mxu0 0
      %577 = vmatpush1.bf16.xpose.msra.mxu0 0
      %578 = vmatprep.subr.bf16.mxu0 0
      %579 = vmatpush1.bf16.xpose.msra.mxu0 0
      %580 = vmatprep.subr.bf16.mxu0 0
      %581 = vmatpush1.bf16.xpose.msra.mxu0 0
      %582 = vmatprep.subr.bf16.mxu0 0
      %583 = vmatpush1.bf16.xpose.msra.mxu0 0
      %584 = vmatprep.subr.bf16.mxu0 0
      %585 = vmatpush1.bf16.xpose.msra.mxu0 0
      %586 = vmatprep.subr.bf16.mxu0 0
      %587 = vmatpush1.bf16.xpose.msra.mxu0 0
      %588 = vmatprep.subr.bf16.mxu0 0
      %589 = vmatpush1.bf16.xpose.msra.mxu0 0
      %590 = vmatprep.subr.bf16.mxu0 0
      %591 = vmatpush1.bf16.xpose.msra.mxu0 %v574
      %592 = vmatprep.subr.bf16.mxu0 0
      %593 = vmatpush2.bf16.xpose.msra.mxu0 0
      %594 = vmatprep.subr.bf16.mxu0 0
      %595 = vmatpush2.bf16.xpose.msra.mxu0 0
      %596 = vmatprep.subr.bf16.mxu0 0
      %597 = vmatpush2.bf16.xpose.msra.mxu0 0
      %598 = vmatprep.subr.bf16.mxu0 0
      %599 = vmatpush2.bf16.xpose.msra.mxu0 0
      %600 = vmatprep.subr.bf16.mxu0 0
      %601 = vmatpush2.bf16.xpose.msra.mxu0 0
      %602 = vmatprep.subr.bf16.mxu0 0
      %603 = vmatpush2.bf16.xpose.msra.mxu0 0
      %604 = vmatprep.subr.bf16.mxu0 0
      %605 = vmatpush2.bf16.xpose.msra.mxu0 0
      %606 = vmatprep.subr.bf16.mxu0 0
      %607 = vmatpush2.bf16.xpose.msra.mxu0 0
      %608 = vmatprep.mubr.bf16.mxu0 0
      %609 = vmatmul.mubr.bf16.gmra.mxu0 %v571
      %v610 = vpop.f32.mrf.mxu0
      %v611 = vadd.f32 %v567, %v610
      %v612 = vpop.f32.mrf.mxu0
      %v613 = vpop.f32.mrf.mxu0
      %v614 = vpop.f32.mrf.mxu0
      %615 = vdwg.mxu0
      %v616 = vsel %vm569, %v611, -inf
      %617 = vmax.xlane.f32.xlu0 %v616
      %v618 = vpop.xlane.xlu0 %617
      %v619 = vsub.f32 %v611, %v618
      %v620 = vmul.f32 %v619, 1.442695
      %v621 = vpow.pop %v620
      %v622 = vsel %vm569, %v621, 0.0
      %623 = vadd.xlane.f32.xlu0 %v622
      %v624 = vpop.xlane.xlu0 %623
      %v625 = vrcp.pop %v624
      %v626 = vmul.f32 %v621, %v625
      %v627 = vpack.c.bf16 %v626, %v626
      %629 = vrot.lane.b32.xlu0 %v562, 96
      %v630 = vpop.permute.xlu0 %629
      %v632 = vsel %vm569, %v627, 0
      %vm634 = vcmask 1043456
      %v636 = vsel %vm634, %v630, 0
      %638 = vmatprep.subr.bf16.mxu0 0
      %639 = vmatpush1.bf16.msra.mxu0 0
      %640 = vmatprep.subr.bf16.mxu0 0
      %641 = vmatpush1.bf16.msra.mxu0 0
      %642 = vmatprep.subr.bf16.mxu0 0
      %643 = vmatpush1.bf16.msra.mxu0 0
      %644 = vmatprep.subr.bf16.mxu0 0
      %645 = vmatpush1.bf16.msra.mxu0 0
      %646 = vmatprep.subr.bf16.mxu0 0
      %647 = vmatpush1.bf16.msra.mxu0 0
      %648 = vmatprep.subr.bf16.mxu0 0
      %649 = vmatpush1.bf16.msra.mxu0 0
      %650 = vmatprep.subr.bf16.mxu0 0
      %651 = vmatpush1.bf16.msra.mxu0 0
      %652 = vmatprep.subr.bf16.mxu0 0
      %653 = vmatpush1.bf16.msra.mxu0 %v636
      %654 = vmatprep.subr.bf16.mxu0 0
      %655 = vmatpush2.bf16.msra.mxu0 0
      %656 = vmatprep.subr.bf16.mxu0 0
      %657 = vmatpush2.bf16.msra.mxu0 0
      %658 = vmatprep.subr.bf16.mxu0 0
      %659 = vmatpush2.bf16.msra.mxu0 0
      %660 = vmatprep.subr.bf16.mxu0 0
      %661 = vmatpush2.bf16.msra.mxu0 0
      %662 = vmatprep.subr.bf16.mxu0 0
      %663 = vmatpush2.bf16.msra.mxu0 0
      %664 = vmatprep.subr.bf16.mxu0 0
      %665 = vmatpush2.bf16.msra.mxu0 0
      %666 = vmatprep.subr.bf16.mxu0 0
      %667 = vmatpush2.bf16.msra.mxu0 0
      %668 = vmatprep.subr.bf16.mxu0 0
      %669 = vmatpush2.bf16.msra.mxu0 0
      %670 = vmatprep.mubr.bf16.mxu0 0
      %671 = vmatmul.mubr.bf16.gmra.mxu0 %v632
      %v672 = vpop.f32.mrf.mxu0
      %v673 = vadd.f32 0.0, %v672
      %v674 = vpop.f32.mrf.mxu0
      %v675 = vpop.f32.mrf.mxu0
      %v676 = vpop.f32.mrf.mxu0
      %677 = vdwg.mxu0
      %v678 = vpack.c.bf16 %v673, %v673
      %v680 = vsel %vm569, %v678, 0
      %v683 = vsel %vm634, %v556, 0
      %685 = vmatprep.subr.bf16.mxu0 0
      %686 = vmatpush1.bf16.msra.mxu0 0
      %687 = vmatprep.subr.bf16.mxu0 0
      %688 = vmatpush1.bf16.msra.mxu0 0
      %689 = vmatprep.subr.bf16.mxu0 0
      %690 = vmatpush1.bf16.msra.mxu0 0
      %691 = vmatprep.subr.bf16.mxu0 0
      %692 = vmatpush1.bf16.msra.mxu0 0
      %693 = vmatprep.subr.bf16.mxu0 0
      %694 = vmatpush1.bf16.msra.mxu0 0
      %695 = vmatprep.subr.bf16.mxu0 0
      %696 = vmatpush1.bf16.msra.mxu0 0
      %697 = vmatprep.subr.bf16.mxu0 0
      %698 = vmatpush1.bf16.msra.mxu0 0
      %699 = vmatprep.subr.bf16.mxu0 0
      %700 = vmatpush1.bf16.msra.mxu0 %v683
      %701 = vmatprep.subr.bf16.mxu0 0
      %702 = vmatpush2.bf16.msra.mxu0 0
      %703 = vmatprep.subr.bf16.mxu0 0
      %704 = vmatpush2.bf16.msra.mxu0 0
      %705 = vmatprep.subr.bf16.mxu0 0
      %706 = vmatpush2.bf16.msra.mxu0 0
      %707 = vmatprep.subr.bf16.mxu0 0
      %708 = vmatpush2.bf16.msra.mxu0 0
      %709 = vmatprep.subr.bf16.mxu0 0
      %710 = vmatpush2.bf16.msra.mxu0 0
      %711 = vmatprep.subr.bf16.mxu0 0
      %712 = vmatpush2.bf16.msra.mxu0 0
      %713 = vmatprep.subr.bf16.mxu0 0
      %714 = vmatpush2.bf16.msra.mxu0 0
      %715 = vmatprep.subr.bf16.mxu0 0
      %716 = vmatpush2.bf16.msra.mxu0 0
      %717 = vmatprep.mubr.bf16.mxu0 0
      %718 = vmatmul.mubr.bf16.gmra.mxu0 %v680
      %v719 = vpop.f32.mrf.mxu0
      %v720 = vadd.f32 0.0, %v719
      %v721 = vpop.f32.mrf.mxu0
      %v722 = vpop.f32.mrf.mxu0
      %v723 = vpop.f32.mrf.mxu0
      %724 = vdwg.mxu0
      %v725 = vadd.f32 %v555, %v720
      %727 = vrot.lane.b32.xlu0 %v561, 120
      %v728 = vpop.permute.xlu0 %727
      %729 = vrot.lane.b32.xlu0 %v562, 120
      %v730 = vpop.permute.xlu0 %729
      %v732 = vsel %vm569, %v728, 0
      %v735 = vsel %vm569, %v730, 0
      %737 = vmatprep.subr.bf16.mxu0 0
      %738 = vmatpush1.bf16.xpose.msra.mxu0 0
      %739 = vmatprep.subr.bf16.mxu0 0
      %740 = vmatpush1.bf16.xpose.msra.mxu0 0
      %741 = vmatprep.subr.bf16.mxu0 0
      %742 = vmatpush1.bf16.xpose.msra.mxu0 0
      %743 = vmatprep.subr.bf16.mxu0 0
      %744 = vmatpush1.bf16.xpose.msra.mxu0 0
      %745 = vmatprep.subr.bf16.mxu0 0
      %746 = vmatpush1.bf16.xpose.msra.mxu0 0
      %747 = vmatprep.subr.bf16.mxu0 0
      %748 = vmatpush1.bf16.xpose.msra.mxu0 0
      %749 = vmatprep.subr.bf16.mxu0 0
      %750 = vmatpush1.bf16.xpose.msra.mxu0 0
      %751 = vmatprep.subr.bf16.mxu0 0
      %752 = vmatpush1.bf16.xpose.msra.mxu0 %v735
      %753 = vmatprep.subr.bf16.mxu0 0
      %754 = vmatpush2.bf16.xpose.msra.mxu0 0
      %755 = vmatprep.subr.bf16.mxu0 0
      %756 = vmatpush2.bf16.xpose.msra.mxu0 0
      %757 = vmatprep.subr.bf16.mxu0 0
      %758 = vmatpush2.bf16.xpose.msra.mxu0 0
      %759 = vmatprep.subr.bf16.mxu0 0
      %760 = vmatpush2.bf16.xpose.msra.mxu0 0
      %761 = vmatprep.subr.bf16.mxu0 0
      %762 = vmatpush2.bf16.xpose.msra.mxu0 0
      %763 = vmatprep.subr.bf16.mxu0 0
      %764 = vmatpush2.bf16.xpose.msra.mxu0 0
      %765 = vmatprep.subr.bf16.mxu0 0
      %766 = vmatpush2.bf16.xpose.msra.mxu0 0
      %767 = vmatprep.subr.bf16.mxu0 0
      %768 = vmatpush2.bf16.xpose.msra.mxu0 0
      %769 = vmatprep.mubr.bf16.mxu0 0
      %770 = vmatmul.mubr.bf16.gmra.mxu0 %v732
      %v771 = vpop.f32.mrf.mxu0
      %v772 = vadd.f32 %v567, %v771
      %v773 = vpop.f32.mrf.mxu0
      %v774 = vpop.f32.mrf.mxu0
      %v775 = vpop.f32.mrf.mxu0
      %776 = vdwg.mxu0
      %v777 = vsel %vm569, %v772, -inf
      %778 = vmax.xlane.f32.xlu0 %v777
      %v779 = vpop.xlane.xlu0 %778
      %v780 = vsub.f32 %v772, %v779
      %v781 = vmul.f32 %v780, 1.442695
      %v782 = vpow.pop %v781
      %v783 = vsel %vm569, %v782, 0.0
      %784 = vadd.xlane.f32.xlu0 %v783
      %v785 = vpop.xlane.xlu0 %784
      %v786 = vrcp.pop %v785
      %v787 = vmul.f32 %v782, %v786
      %v788 = vpack.c.bf16 %v787, %v787
      %789 = vrot.lane.b32.xlu0 %v562, 88
      %v790 = vpop.permute.xlu0 %789
      %v792 = vsel %vm569, %v788, 0
      %v795 = vsel %vm634, %v790, 0
      %797 = vmatprep.subr.bf16.mxu0 0
      %798 = vmatpush1.bf16.msra.mxu0 0
      %799 = vmatprep.subr.bf16.mxu0 0
      %800 = vmatpush1.bf16.msra.mxu0 0
      %801 = vmatprep.subr.bf16.mxu0 0
      %802 = vmatpush1.bf16.msra.mxu0 0
      %803 = vmatprep.subr.bf16.mxu0 0
      %804 = vmatpush1.bf16.msra.mxu0 0
      %805 = vmatprep.subr.bf16.mxu0 0
      %806 = vmatpush1.bf16.msra.mxu0 0
      %807 = vmatprep.subr.bf16.mxu0 0
      %808 = vmatpush1.bf16.msra.mxu0 0
      %809 = vmatprep.subr.bf16.mxu0 0
      %810 = vmatpush1.bf16.msra.mxu0 0
      %811 = vmatprep.subr.bf16.mxu0 0
      %812 = vmatpush1.bf16.msra.mxu0 %v795
      %813 = vmatprep.subr.bf16.mxu0 0
      %814 = vmatpush2.bf16.msra.mxu0 0
      %815 = vmatprep.subr.bf16.mxu0 0
      %816 = vmatpush2.bf16.msra.mxu0 0
      %817 = vmatprep.subr.bf16.mxu0 0
      %818 = vmatpush2.bf16.msra.mxu0 0
      %819 = vmatprep.subr.bf16.mxu0 0
      %820 = vmatpush2.bf16.msra.mxu0 0
      %821 = vmatprep.subr.bf16.mxu0 0
      %822 = vmatpush2.bf16.msra.mxu0 0
      %823 = vmatprep.subr.bf16.mxu0 0
      %824 = vmatpush2.bf16.msra.mxu0 0
      %825 = vmatprep.subr.bf16.mxu0 0
      %826 = vmatpush2.bf16.msra.mxu0 0
      %827 = vmatprep.subr.bf16.mxu0 0
      %828 = vmatpush2.bf16.msra.mxu0 0
      %829 = vmatprep.mubr.bf16.mxu0 0
      %830 = vmatmul.mubr.bf16.gmra.mxu0 %v792
      %v831 = vpop.f32.mrf.mxu0
      %v832 = vadd.f32 0.0, %v831
      %v833 = vpop.f32.mrf.mxu0
      %v834 = vpop.f32.mrf.mxu0
      %v835 = vpop.f32.mrf.mxu0
      %836 = vdwg.mxu0
      %v837 = vpack.c.bf16 %v832, %v832
      %v839 = vsel %vm569, %v837, 0
      %v842 = vsel %vm634, %v557, 0
      %844 = vmatprep.subr.bf16.mxu0 0
      %845 = vmatpush1.bf16.msra.mxu0 0
      %846 = vmatprep.subr.bf16.mxu0 0
      %847 = vmatpush1.bf16.msra.mxu0 0
      %848 = vmatprep.subr.bf16.mxu0 0
      %849 = vmatpush1.bf16.msra.mxu0 0
      %850 = vmatprep.subr.bf16.mxu0 0
      %851 = vmatpush1.bf16.msra.mxu0 0
      %852 = vmatprep.subr.bf16.mxu0 0
      %853 = vmatpush1.bf16.msra.mxu0 0
      %854 = vmatprep.subr.bf16.mxu0 0
      %855 = vmatpush1.bf16.msra.mxu0 0
      %856 = vmatprep.subr.bf16.mxu0 0
      %857 = vmatpush1.bf16.msra.mxu0 0
      %858 = vmatprep.subr.bf16.mxu0 0
      %859 = vmatpush1.bf16.msra.mxu0 %v842
      %860 = vmatprep.subr.bf16.mxu0 0
      %861 = vmatpush2.bf16.msra.mxu0 0
      %862 = vmatprep.subr.bf16.mxu0 0
      %863 = vmatpush2.bf16.msra.mxu0 0
      %864 = vmatprep.subr.bf16.mxu0 0
      %865 = vmatpush2.bf16.msra.mxu0 0
      %866 = vmatprep.subr.bf16.mxu0 0
      %867 = vmatpush2.bf16.msra.mxu0 0
      %868 = vmatprep.subr.bf16.mxu0 0
      %869 = vmatpush2.bf16.msra.mxu0 0
      %870 = vmatprep.subr.bf16.mxu0 0
      %871 = vmatpush2.bf16.msra.mxu0 0
      %872 = vmatprep.subr.bf16.mxu0 0
      %873 = vmatpush2.bf16.msra.mxu0 0
      %874 = vmatprep.subr.bf16.mxu0 0
      %875 = vmatpush2.bf16.msra.mxu0 0
      %876 = vmatprep.mubr.bf16.mxu0 0
      %877 = vmatmul.mubr.bf16.gmra.mxu0 %v839
      %v878 = vpop.f32.mrf.mxu0
      %v879 = vadd.f32 0.0, %v878
      %v880 = vpop.f32.mrf.mxu0
      %v881 = vpop.f32.mrf.mxu0
      %v882 = vpop.f32.mrf.mxu0
      %883 = vdwg.mxu0
      %v884 = vadd.f32 %v725, %v879
      %885 = vrot.lane.b32.xlu0 %v561, 112
      %v886 = vpop.permute.xlu0 %885
      %887 = vrot.lane.b32.xlu0 %v562, 112
      %v888 = vpop.permute.xlu0 %887
      %v890 = vsel %vm569, %v886, 0
      %v893 = vsel %vm569, %v888, 0
      %895 = vmatprep.subr.bf16.mxu0 0
      %896 = vmatpush1.bf16.xpose.msra.mxu0 0
      %897 = vmatprep.subr.bf16.mxu0 0
      %898 = vmatpush1.bf16.xpose.msra.mxu0 0
      %899 = vmatprep.subr.bf16.mxu0 0
      %900 = vmatpush1.bf16.xpose.msra.mxu0 0
      %901 = vmatprep.subr.bf16.mxu0 0
      %902 = vmatpush1.bf16.xpose.msra.mxu0 0
      %903 = vmatprep.subr.bf16.mxu0 0
      %904 = vmatpush1.bf16.xpose.msra.mxu0 0
      %905 = vmatprep.subr.bf16.mxu0 0
      %906 = vmatpush1.bf16.xpose.msra.mxu0 0
      %907 = vmatprep.subr.bf16.mxu0 0
      %908 = vmatpush1.bf16.xpose.msra.mxu0 0
      %909 = vmatprep.subr.bf16.mxu0 0
      %910 = vmatpush1.bf16.xpose.msra.mxu0 %v893
      %911 = vmatprep.subr.bf16.mxu0 0
      %912 = vmatpush2.bf16.xpose.msra.mxu0 0
      %913 = vmatprep.subr.bf16.mxu0 0
      %914 = vmatpush2.bf16.xpose.msra.mxu0 0
      %915 = vmatprep.subr.bf16.mxu0 0
      %916 = vmatpush2.bf16.xpose.msra.mxu0 0
      %917 = vmatprep.subr.bf16.mxu0 0
      %918 = vmatpush2.bf16.xpose.msra.mxu0 0
      %919 = vmatprep.subr.bf16.mxu0 0
      %920 = vmatpush2.bf16.xpose.msra.mxu0 0
      %921 = vmatprep.subr.bf16.mxu0 0
      %922 = vmatpush2.bf16.xpose.msra.mxu0 0
      %923 = vmatprep.subr.bf16.mxu0 0
      %924 = vmatpush2.bf16.xpose.msra.mxu0 0
      %925 = vmatprep.subr.bf16.mxu0 0
      %926 = vmatpush2.bf16.xpose.msra.mxu0 0
      %927 = vmatprep.mubr.bf16.mxu0 0
      %928 = vmatmul.mubr.bf16.gmra.mxu0 %v890
      %v929 = vpop.f32.mrf.mxu0
      %v930 = vadd.f32 %v567, %v929
      %v931 = vpop.f32.mrf.mxu0
      %v932 = vpop.f32.mrf.mxu0
      %v933 = vpop.f32.mrf.mxu0
      %934 = vdwg.mxu0
      %v935 = vsel %vm569, %v930, -inf
      %936 = vmax.xlane.f32.xlu0 %v935
      %v937 = vpop.xlane.xlu0 %936
      %v938 = vsub.f32 %v930, %v937
      %v939 = vmul.f32 %v938, 1.442695
      %v940 = vpow.pop %v939
      %v941 = vsel %vm569, %v940, 0.0
      %942 = vadd.xlane.f32.xlu0 %v941
      %v943 = vpop.xlane.xlu0 %942
      %v944 = vrcp.pop %v943
      %v945 = vmul.f32 %v940, %v944
      %v946 = vpack.c.bf16 %v945, %v945
      %947 = vrot.lane.b32.xlu0 %v562, 80
      %v948 = vpop.permute.xlu0 %947
      %v950 = vsel %vm569, %v946, 0
      %v953 = vsel %vm634, %v948, 0
      %955 = vmatprep.subr.bf16.mxu0 0
      %956 = vmatpush1.bf16.msra.mxu0 0
      %957 = vmatprep.subr.bf16.mxu0 0
      %958 = vmatpush1.bf16.msra.mxu0 0
      %959 = vmatprep.subr.bf16.mxu0 0
      %960 = vmatpush1.bf16.msra.mxu0 0
      %961 = vmatprep.subr.bf16.mxu0 0
      %962 = vmatpush1.bf16.msra.mxu0 0
      %963 = vmatprep.subr.bf16.mxu0 0
      %964 = vmatpush1.bf16.msra.mxu0 0
      %965 = vmatprep.subr.bf16.mxu0 0
      %966 = vmatpush1.bf16.msra.mxu0 0
      %967 = vmatprep.subr.bf16.mxu0 0
      %968 = vmatpush1.bf16.msra.mxu0 0
      %969 = vmatprep.subr.bf16.mxu0 0
      %970 = vmatpush1.bf16.msra.mxu0 %v953
      %971 = vmatprep.subr.bf16.mxu0 0
      %972 = vmatpush2.bf16.msra.mxu0 0
      %973 = vmatprep.subr.bf16.mxu0 0
      %974 = vmatpush2.bf16.msra.mxu0 0
      %975 = vmatprep.subr.bf16.mxu0 0
      %976 = vmatpush2.bf16.msra.mxu0 0
      %977 = vmatprep.subr.bf16.mxu0 0
      %978 = vmatpush2.bf16.msra.mxu0 0
      %979 = vmatprep.subr.bf16.mxu0 0
      %980 = vmatpush2.bf16.msra.mxu0 0
      %981 = vmatprep.subr.bf16.mxu0 0
      %982 = vmatpush2.bf16.msra.mxu0 0
      %983 = vmatprep.subr.bf16.mxu0 0
      %984 = vmatpush2.bf16.msra.mxu0 0
      %985 = vmatprep.subr.bf16.mxu0 0
      %986 = vmatpush2.bf16.msra.mxu0 0
      %987 = vmatprep.mubr.bf16.mxu0 0
      %988 = vmatmul.mubr.bf16.gmra.mxu0 %v950
      %v989 = vpop.f32.mrf.mxu0
      %v990 = vadd.f32 0.0, %v989
      %v991 = vpop.f32.mrf.mxu0
      %v992 = vpop.f32.mrf.mxu0
      %v993 = vpop.f32.mrf.mxu0
      %994 = vdwg.mxu0
      %v995 = vpack.c.bf16 %v990, %v990
      %v997 = vsel %vm569, %v995, 0
      %v1000 = vsel %vm634, %v558, 0
      %1002 = vmatprep.subr.bf16.mxu0 0
      %1003 = vmatpush1.bf16.msra.mxu0 0
      %1004 = vmatprep.subr.bf16.mxu0 0
      %1005 = vmatpush1.bf16.msra.mxu0 0
      %1006 = vmatprep.subr.bf16.mxu0 0
      %1007 = vmatpush1.bf16.msra.mxu0 0
      %1008 = vmatprep.subr.bf16.mxu0 0
      %1009 = vmatpush1.bf16.msra.mxu0 0
      %1010 = vmatprep.subr.bf16.mxu0 0
      %1011 = vmatpush1.bf16.msra.mxu0 0
      %1012 = vmatprep.subr.bf16.mxu0 0
      %1013 = vmatpush1.bf16.msra.mxu0 0
      %1014 = vmatprep.subr.bf16.mxu0 0
      %1015 = vmatpush1.bf16.msra.mxu0 0
      %1016 = vmatprep.subr.bf16.mxu0 0
      %1017 = vmatpush1.bf16.msra.mxu0 %v1000
      %1018 = vmatprep.subr.bf16.mxu0 0
      %1019 = vmatpush2.bf16.msra.mxu0 0
      %1020 = vmatprep.subr.bf16.mxu0 0
      %1021 = vmatpush2.bf16.msra.mxu0 0
      %1022 = vmatprep.subr.bf16.mxu0 0
      %1023 = vmatpush2.bf16.msra.mxu0 0
      %1024 = vmatprep.subr.bf16.mxu0 0
      %1025 = vmatpush2.bf16.msra.mxu0 0
      %1026 = vmatprep.subr.bf16.mxu0 0
      %1027 = vmatpush2.bf16.msra.mxu0 0
      %1028 = vmatprep.subr.bf16.mxu0 0
      %1029 = vmatpush2.bf16.msra.mxu0 0
      %1030 = vmatprep.subr.bf16.mxu0 0
      %1031 = vmatpush2.bf16.msra.mxu0 0
      %1032 = vmatprep.subr.bf16.mxu0 0
      %1033 = vmatpush2.bf16.msra.mxu0 0
      %1034 = vmatprep.mubr.bf16.mxu0 0
      %1035 = vmatmul.mubr.bf16.gmra.mxu0 %v997
      %v1036 = vpop.f32.mrf.mxu0
      %v1037 = vadd.f32 0.0, %v1036
      %v1038 = vpop.f32.mrf.mxu0
      %v1039 = vpop.f32.mrf.mxu0
      %v1040 = vpop.f32.mrf.mxu0
      %1041 = vdwg.mxu0
      %v1042 = vadd.f32 %v884, %v1037
      %1043 = vrot.lane.b32.xlu0 %v561, 104
      %v1044 = vpop.permute.xlu0 %1043
      %1045 = vrot.lane.b32.xlu0 %v562, 104
      %v1046 = vpop.permute.xlu0 %1045
      %v1048 = vsel %vm569, %v1044, 0
      %v1051 = vsel %vm569, %v1046, 0
      %1053 = vmatprep.subr.bf16.mxu0 0
      %1054 = vmatpush1.bf16.xpose.msra.mxu0 0
      %1055 = vmatprep.subr.bf16.mxu0 0
      %1056 = vmatpush1.bf16.xpose.msra.mxu0 0
      %1057 = vmatprep.subr.bf16.mxu0 0
      %1058 = vmatpush1.bf16.xpose.msra.mxu0 0
      %1059 = vmatprep.subr.bf16.mxu0 0
      %1060 = vmatpush1.bf16.xpose.msra.mxu0 0
      %1061 = vmatprep.subr.bf16.mxu0 0
      %1062 = vmatpush1.bf16.xpose.msra.mxu0 0
      %1063 = vmatprep.subr.bf16.mxu0 0
      %1064 = vmatpush1.bf16.xpose.msra.mxu0 0
      %1065 = vmatprep.subr.bf16.mxu0 0
      %1066 = vmatpush1.bf16.xpose.msra.mxu0 0
      %1067 = vmatprep.subr.bf16.mxu0 0
      %1068 = vmatpush1.bf16.xpose.msra.mxu0 %v1051
      %1069 = vmatprep.subr.bf16.mxu0 0
      %1070 = vmatpush2.bf16.xpose.msra.mxu0 0
      %1071 = vmatprep.subr.bf16.mxu0 0
      %1072 = vmatpush2.bf16.xpose.msra.mxu0 0
      %1073 = vmatprep.subr.bf16.mxu0 0
      %1074 = vmatpush2.bf16.xpose.msra.mxu0 0
      %1075 = vmatprep.subr.bf16.mxu0 0
      %1076 = vmatpush2.bf16.xpose.msra.mxu0 0
      %1077 = vmatprep.subr.bf16.mxu0 0
      %1078 = vmatpush2.bf16.xpose.msra.mxu0 0
      %1079 = vmatprep.subr.bf16.mxu0 0
      %1080 = vmatpush2.bf16.xpose.msra.mxu0 0
      %1081 = vmatprep.subr.bf16.mxu0 0
      %1082 = vmatpush2.bf16.xpose.msra.mxu0 0
      %1083 = vmatprep.subr.bf16.mxu0 0
      %1084 = vmatpush2.bf16.xpose.msra.mxu0 0
      %1085 = vmatprep.mubr.bf16.mxu0 0
      %1086 = vmatmul.mubr.bf16.gmra.mxu0 %v1048
      %v1087 = vpop.f32.mrf.mxu0
      %v1088 = vadd.f32 %v567, %v1087
      %v1089 = vpop.f32.mrf.mxu0
      %v1090 = vpop.f32.mrf.mxu0
      %v1091 = vpop.f32.mrf.mxu0
      %1092 = vdwg.mxu0
      %v1093 = vsel %vm569, %v1088, -inf
      %1094 = vmax.xlane.f32.xlu0 %v1093
      %v1095 = vpop.xlane.xlu0 %1094
      %v1096 = vsub.f32 %v1088, %v1095
      %v1097 = vmul.f32 %v1096, 1.442695
      %v1098 = vpow.pop %v1097
      %v1099 = vsel %vm569, %v1098, 0.0
      %1100 = vadd.xlane.f32.xlu0 %v1099
      %v1101 = vpop.xlane.xlu0 %1100
      %v1102 = vrcp.pop %v1101
      %v1103 = vmul.f32 %v1098, %v1102
      %v1104 = vpack.c.bf16 %v1103, %v1103
      %1105 = vrot.lane.b32.xlu0 %v562, 72
      %v1106 = vpop.permute.xlu0 %1105
      %v1108 = vsel %vm569, %v1104, 0
      %v1111 = vsel %vm634, %v1106, 0
      %1113 = vmatprep.subr.bf16.mxu0 0
      %1114 = vmatpush1.bf16.msra.mxu0 0
      %1115 = vmatprep.subr.bf16.mxu0 0
      %1116 = vmatpush1.bf16.msra.mxu0 0
      %1117 = vmatprep.subr.bf16.mxu0 0
      %1118 = vmatpush1.bf16.msra.mxu0 0
      %1119 = vmatprep.subr.bf16.mxu0 0
      %1120 = vmatpush1.bf16.msra.mxu0 0
      %1121 = vmatprep.subr.bf16.mxu0 0
      %1122 = vmatpush1.bf16.msra.mxu0 0
      %1123 = vmatprep.subr.bf16.mxu0 0
      %1124 = vmatpush1.bf16.msra.mxu0 0
      %1125 = vmatprep.subr.bf16.mxu0 0
      %1126 = vmatpush1.bf16.msra.mxu0 0
      %1127 = vmatprep.subr.bf16.mxu0 0
      %1128 = vmatpush1.bf16.msra.mxu0 %v1111
      %1129 = vmatprep.subr.bf16.mxu0 0
      %1130 = vmatpush2.bf16.msra.mxu0 0
      %1131 = vmatprep.subr.bf16.mxu0 0
      %1132 = vmatpush2.bf16.msra.mxu0 0
      %1133 = vmatprep.subr.bf16.mxu0 0
      %1134 = vmatpush2.bf16.msra.mxu0 0
      %1135 = vmatprep.subr.bf16.mxu0 0
      %1136 = vmatpush2.bf16.msra.mxu0 0
      %1137 = vmatprep.subr.bf16.mxu0 0
      %1138 = vmatpush2.bf16.msra.mxu0 0
      %1139 = vmatprep.subr.bf16.mxu0 0
      %1140 = vmatpush2.bf16.msra.mxu0 0
      %1141 = vmatprep.subr.bf16.mxu0 0
      %1142 = vmatpush2.bf16.msra.mxu0 0
      %1143 = vmatprep.subr.bf16.mxu0 0
      %1144 = vmatpush2.bf16.msra.mxu0 0
      %1145 = vmatprep.mubr.bf16.mxu0 0
      %1146 = vmatmul.mubr.bf16.gmra.mxu0 %v1108
      %v1147 = vpop.f32.mrf.mxu0
      %v1148 = vadd.f32 0.0, %v1147
      %v1149 = vpop.f32.mrf.mxu0
      %v1150 = vpop.f32.mrf.mxu0
      %v1151 = vpop.f32.mrf.mxu0
      %1152 = vdwg.mxu0
      %v1153 = vpack.c.bf16 %v1148, %v1148
      %v1155 = vsel %vm569, %v1153, 0
      %v1158 = vsel %vm634, %v559, 0
      %1160 = vmatprep.subr.bf16.mxu0 0
      %1161 = vmatpush1.bf16.msra.mxu0 0
      %1162 = vmatprep.subr.bf16.mxu0 0
      %1163 = vmatpush1.bf16.msra.mxu0 0
      %1164 = vmatprep.subr.bf16.mxu0 0
      %1165 = vmatpush1.bf16.msra.mxu0 0
      %1166 = vmatprep.subr.bf16.mxu0 0
      %1167 = vmatpush1.bf16.msra.mxu0 0
      %1168 = vmatprep.subr.bf16.mxu0 0
      %1169 = vmatpush1.bf16.msra.mxu0 0
      %1170 = vmatprep.subr.bf16.mxu0 0
      %1171 = vmatpush1.bf16.msra.mxu0 0
      %1172 = vmatprep.subr.bf16.mxu0 0
      %1173 = vmatpush1.bf16.msra.mxu0 0
      %1174 = vmatprep.subr.bf16.mxu0 0
      %1175 = vmatpush1.bf16.msra.mxu0 %v1158
      %1176 = vmatprep.subr.bf16.mxu0 0
      %1177 = vmatpush2.bf16.msra.mxu0 0
      %1178 = vmatprep.subr.bf16.mxu0 0
      %1179 = vmatpush2.bf16.msra.mxu0 0
      %1180 = vmatprep.subr.bf16.mxu0 0
      %1181 = vmatpush2.bf16.msra.mxu0 0
      %1182 = vmatprep.subr.bf16.mxu0 0
      %1183 = vmatpush2.bf16.msra.mxu0 0
      %1184 = vmatprep.subr.bf16.mxu0 0
      %1185 = vmatpush2.bf16.msra.mxu0 0
      %1186 = vmatprep.subr.bf16.mxu0 0
      %1187 = vmatpush2.bf16.msra.mxu0 0
      %1188 = vmatprep.subr.bf16.mxu0 0
      %1189 = vmatpush2.bf16.msra.mxu0 0
      %1190 = vmatprep.subr.bf16.mxu0 0
      %1191 = vmatpush2.bf16.msra.mxu0 0
      %1192 = vmatprep.mubr.bf16.mxu0 0
      %1193 = vmatmul.mubr.bf16.gmra.mxu0 %v1155
      %v1194 = vpop.f32.mrf.mxu0
      %v1195 = vadd.f32 0.0, %v1194
      %v1196 = vpop.f32.mrf.mxu0
      %v1197 = vpop.f32.mrf.mxu0
      %v1198 = vpop.f32.mrf.mxu0
      %1199 = vdwg.mxu0
      %v1200 = vadd.f32 %v1042, %v1195
      %v1201 = vld [vmem:[%s8] sm:$0x1]
      %v1202 = vld [vmem:[%s9] sm:$0x1]
      %v1203 = vsel %vm438, %v1200, 0.0
      %1204 = vadd.xlane.f32.xlu0 %v1203
      %v1205 = vpop.xlane.xlu0 %1204
      %v1206 = vrcp.pop 32.0
      %v1207 = vmul.f32 %v1205, %v1206
      %v1208 = vsub.f32 %v1200, %v1207
      %v1209 = vmul.f32 %v1208, %v1208
      %v1210 = vsel %vm438, %v1209, 0.0
      %1211 = vadd.xlane.f32.xlu0 %v1210
      %v1212 = vpop.xlane.xlu0 %1211
      %v1213 = vmul.f32 %v1212, %v1206
      %v1214 = vadd.f32 %v1213, 1e-05
      %v1215 = vrsqrt.pop %v1214
      %v1216 = vmul.f32 %v1208, %v1215
      %v1217 = vunpack.c.l.bf16 %v1201
      %v1218 = vlaneseq
      %v1219 = vshrl.u32 %v1218, 7
      %v1220 = vsub.s32 0, %v1219
      %v1221 = vrot.slane %v1217, %v1220
      %v1222 = vmul.f32 %v1216, %v1221
      %v1223 = vunpack.c.l.bf16 %v1202
      %v1224 = vlaneseq
      %v1225 = vshrl.u32 %v1224, 7
      %v1226 = vsub.s32 0, %v1225
      %v1227 = vrot.slane %v1223, %v1226
      %v1228 = vadd.f32 %v1222, %v1227
      %v1229 = vpack.c.bf16 %v1228, %v1228
      %vm1230 = vcmask 257024
      %1231 = vst.msk [vmem:[%s412] sm:$0xf] %vm1230, %v1229
      %p1232 = scmp.lt.s32.totalorder %s22, 1
      %s1233 = scalar_select %p1232, %s22, 1
      %s1234 = smul.addr %s1233, 4
      %s1235 = scalar_lea.vmem %s11, %s1234
      // Predicated region
      $region65: #{transformer_decoder.8} parent=63 // pred_check
        %p1236 = pneg %p286
      $region66: #{transformer_decoder.8} parent=63 // pred_check_branch
        %1238 = sbr.rel (%p1236) target = $region68
      $region67: #{transformer_decoder.8} parent=63 // pred_region
        _
      $region68: #{transformer_decoder.8} parent=63 // pred_fallthru
        _
    $region64: #{transformer_decoder.8} parent=5 // pred_fallthru
      _
    %p1239 = scmp.le.s32.totalorder 2, %s17
    // Predicated region
    $region69: #{transformer_decoder.8} parent=5 // pred_check
      %p1240 = pneg %p1239
    $region70: #{transformer_decoder.8} parent=5 // pred_check_branch
      %1242 = sbr.rel (%p1240) target = $region72
    $region71: #{transformer_decoder.8} parent=5 // pred_region
      %s1243 = ssub.s32 %s17, 2
      // Predicated region
      $region73: #{transformer_decoder.8} parent=71 // pred_check
        %p1244 = pneg %p292
      $region74: #{transformer_decoder.8} parent=71 // pred_check_branch
        %1246 = sbr.rel (%p1244) target = $region76
      $region75: #{transformer_decoder.8} parent=71 // pred_region
        %p1247 = scmp.lt.s32.totalorder %s23, 1
        %s1248 = scalar_select %p1247, %s23, 1
        %s1249 = smul.addr %s1248, 4
        %s1250 = scalar_lea.vmem %s11, %s1249
      $region76: #{transformer_decoder.8} parent=71 // pred_fallthru
        _
    $region72: #{transformer_decoder.8} parent=5 // pred_fallthru
      _
  $region6: #{transformer_decoder.8} parent=0 // loop_footer
    %s21 = sadd.s32 1, %s17
  $region7: #{transformer_decoder.8} parent=0 // loop_footer_branch
    %16 = sbr.rel target = $region3
  $region8: #{transformer_decoder.8} parent=0 // loop_exit
    _

</llo_original>
